<compile_context>
chip_gen: v7x
topology: tpu7x:2x2x1
jax: 0.10.0
libtpu: 0.0.40
codegen_flags: <defaults>
</compile_context>

<pallas_src>
import math
from functools import partial

import jax
import jax.numpy as jnp
from jax.experimental import pallas as pl
from jax.experimental.pallas import tpu as pltpu


def _efficient_attention_kernel(x_ref, wqkv_ref, wp_ref, bp_ref,
                                out_ref, attn_ref, ctx_ref, *,
                                num_heads, matmul_dtype, approx_softmax):
    """One grid step == one batch block of Bb sequences.

    x_ref    : (Bb, N, C)   input tokens
    wqkv_ref : (C, 3C)      fused q|k|v weight, (in, out); qk scale folded into Q cols
    wp_ref   : (C, C)       proj weight, (in, out)
    bp_ref   : (1, C)       proj bias (f32)
    out_ref  : (Bb, N, C)   output tokens
    attn_ref : (Bb, N, N)   head-averaged attention map
    ctx_ref  : (Bb, N, C)   f32 VMEM scratch accumulating per-head context
    """
    Bb, N, C = x_ref.shape
    hd = C // num_heads

    def mm_cast(a):
        return a if matmul_dtype is None else a.astype(matmul_dtype)

    # Single fused QKV projection over the flattened (Bb*N, C) token block.
    x2 = mm_cast(x_ref[...].reshape(Bb * N, C))
    qkv = jnp.dot(x2, wqkv_ref[...], preferred_element_type=jnp.float32)
    # Hoisted bulk cast to the matmul dtype (q/k/v are only consumed by MXU ops).
    qkv = mm_cast(qkv).reshape(Bb, N, 3 * C)
    q = qkv[:, :, 0 * C:1 * C]            # scale already folded into the weight
    k = qkv[:, :, 1 * C:2 * C]
    v = qkv[:, :, 2 * C:3 * C]

    attn_sum = jnp.zeros((Bb, N, N), jnp.float32)
    # num_heads is small & static -> unrolled loop; each contraction is batched
    # over the Bb batch block via dot_general batch dims.  A full head transpose
    # at hd=4 is a risky Mosaic relayout, so it is intentionally avoided.
    for h in range(num_heads):
        sl = slice(h * hd, (h + 1) * hd)
        q_h = q[:, :, sl]                 # (Bb, N, hd)
        k_h = k[:, :, sl]                 # (Bb, N, hd)
        v_h = v[:, :, sl]                 # (Bb, N, hd)

        # s[b, i, j] = sum_d q_h[b, i, d] * k_h[b, j, d]   (no explicit k.T)
        s = jax.lax.dot_general(q_h, k_h, (((2,), (2,)), ((0,), (0,))),
                                preferred_element_type=jnp.float32)  # (Bb, N, N)
        s = s - jnp.max(s, axis=-1, keepdims=True)
        p = jnp.exp(s)
        denom = jnp.sum(p, axis=-1, keepdims=True)
        if approx_softmax:
            # EUP reciprocal: moves the divide off the VPU (the VALU is the
            # bottleneck here since hd=4 barely loads the MXU); ~1e-3 rel err.
            p = p * pl.reciprocal(denom, approx=True)
        else:
            p = p / denom
        attn_sum = attn_sum + p

        # Slice-write each head's context into its channel slice of the VMEM
        # scratch (replaces the previous list + lane-axis concatenate).
        ctx_ref[:, :, sl] = jax.lax.dot_general(
            mm_cast(p), v_h, (((2,), (1,)), ((0,), (0,))),
            preferred_element_type=jnp.float32)          # (Bb, N, hd)

    # Heads back on the channel axis == transpose(1,2).reshape(B, N, C).
    ctx = mm_cast(ctx_ref[...].reshape(Bb * N, C))
    out = jnp.dot(ctx, wp_ref[...], preferred_element_type=jnp.float32) + bp_ref[0]
    out_ref[...] = out.reshape(Bb, N, C).astype(out_ref.dtype)

    attn_ref[...] = (attn_sum * (1.0 / num_heads)).astype(attn_ref.dtype)


def _tpu_budget():
    """(vmem_capacity_bytes, num_tensorcores) with conservative fallbacks."""
    vmem_bytes = 64 << 20          # v7x physical size: safe floor everywhere
    num_cores = 1
    try:
        info = pltpu.get_tpu_info()
        vmem_bytes = int(getattr(info, "vmem_capacity_bytes", vmem_bytes))
        for attr in ("num_cores", "tensorcore_count", "num_tensorcores", "core_count"):
            val = getattr(info, attr, None)
            if val:
                num_cores = int(val)
                break
    except Exception:
        pass
    return vmem_bytes, num_cores


def _pick_block_b(B, per_batch_bytes, vmem_budget, num_cores):
    """Largest batch block that fits the VMEM budget, with a balanced grid on
    multi-TensorCore chips and no pointless split on single-core chips."""
    bb = max(1, min(B, vmem_budget // max(per_batch_bytes, 1)))
    div_target = B
    if num_cores > 1 and B >= num_cores and B % num_cores == 0:
        div_target = B // num_cores       # grid count becomes a multiple of num_cores
    bb = min(bb, div_target)
    while div_target % bb:
        bb -= 1
    return bb


def efficient_attention(x, wq, wkv, wproj, bproj, *, num_heads=8, qk_scale=None,
                        matmul_dtype=jnp.bfloat16, approx_softmax=True,
                        attn_dtype=jnp.float32, block_b=None):
    """Pallas TPU forward of EfficientAttention.

    x      : (B, N, C)
    wq     : (C, C)   torch-layout (out, in) q weight (qkv_bias=False)
    wkv    : (2C, C)  torch-layout kv weight (k rows then v rows)
    wproj  : (C, C)   torch-layout proj weight
    bproj  : (C,)     proj bias
    returns (out (B, N, C), attn (B, N, N)) like the torch module.
    matmul_dtype=None + approx_softmax=False gives the exact f32 path.
    """
    B, N, C = x.shape
    assert C % num_heads == 0
    hd = C // num_heads
    scale = float(qk_scale) if qk_scale is not None else hd ** (-0.5)

    mm_bytes = 4 if matmul_dtype is None else jnp.dtype(matmul_dtype).itemsize
    x_bytes = jnp.dtype(x.dtype).itemsize
    attn_bytes = jnp.dtype(attn_dtype).itemsize

    # Fused (in, out) QKV weight with the qk scale folded into the Q columns.
    wqkv = jnp.concatenate([wq.T * scale, wkv[:C].T, wkv[C:].T], axis=1)  # (C, 3C)
    wp_t = wproj.T                                                        # (C, C)
    if matmul_dtype is not None:
        wqkv = wqkv.astype(matmul_dtype)
        wp_t = wp_t.astype(matmul_dtype)
    bp2 = bproj.reshape(1, C).astype(jnp.float32)

    # ---- VMEM budgeting (generation-aware) ----------------------------------
    vmem_cap, num_cores = _tpu_budget()
    vmem_limit = max(32 << 20, min(int(vmem_cap) * 3 // 4, 96 << 20))
    weight_bytes = 2 * (C * 3 * C + C * C) * mm_bytes + 2 * C * 4  # double-buffered consts
    # Per-batch-element footprint: double-buffered I/O blocks + f32 activations.
    per_batch = (2 * N * C * (x_bytes + x_bytes)        # x block + out block (x2 bufs)
                 + 2 * N * N * attn_bytes               # attn out block (x2 bufs)
                 + 4 * N * 3 * C + mm_bytes * N * 3 * C  # qkv f32 + hoisted cast copy
                 + 4 * N * C                            # ctx VMEM scratch
                 + 3 * 4 * N * N)                       # attn_sum + s/p live
    budget = max(vmem_limit * 4 // 5 - weight_bytes, per_batch)

    bb = _pick_block_b(B, per_batch, budget, num_cores) if block_b is None else block_b
    assert B % bb == 0, f"block_b={bb} must divide batch {B}"

    kernel = partial(_efficient_attention_kernel, num_heads=num_heads,
                     matmul_dtype=matmul_dtype, approx_softmax=approx_softmax)
    out, attn = pl.pallas_call(
        kernel,
        out_shape=(jax.ShapeDtypeStruct((B, N, C), x.dtype),
                   jax.ShapeDtypeStruct((B, N, N), attn_dtype)),
        grid=(B // bb,),
        in_specs=[
            pl.BlockSpec((bb, N, C), lambda b: (b, 0, 0)),   # x: per-batch-block
            pl.BlockSpec((C, 3 * C), lambda b: (0, 0)),      # fused Wqkv (constant)
            pl.BlockSpec((C, C), lambda b: (0, 0)),          # Wproj (constant)
            pl.BlockSpec((1, C), lambda b: (0, 0)),          # bproj
        ],
        out_specs=(
            pl.BlockSpec((bb, N, C), lambda b: (b, 0, 0)),
            pl.BlockSpec((bb, N, N), lambda b: (b, 0, 0)),
        ),
        scratch_shapes=[pltpu.VMEM((bb, N, C), jnp.float32)],
        compiler_params=pltpu.CompilerParams(
            dimension_semantics=("parallel",),
            vmem_limit_bytes=int(vmem_limit)),
    )(x, wqkv, wp_t, bp2)
    return out, attn


def reference_efficient_attention(x, wq, wkv, wproj, bproj, *, num_heads):
    """Pure-JAX mirror of the PyTorch forward (weights in torch (out, in) layout)."""
    B, N, C = x.shape
    hd = C // num_heads
    scale = hd ** (-0.5)
    q = (x @ wq.T).reshape(B, N, num_heads, hd).transpose(0, 2, 1, 3)
    kv = (x @ wkv.T).reshape(B, N, 2, num_heads, hd).transpose(2, 0, 3, 1, 4)
    k, v = kv[0], kv[1]
    attn = jnp.einsum('bhqd,bhkd->bhqk', q, k) * scale
    attn = jax.nn.softmax(attn, axis=-1)
    out = jnp.einsum('bhqk,bhkd->bhqd', attn, v)
    out = out.transpose(0, 2, 1, 3).reshape(B, N, C)
    out = out @ wproj.T + bproj
    return out, attn.mean(axis=1)


if __name__ == "__main__":
    B, N, C = 2, 8, 32
    num_heads = 8

    key = jax.random.PRNGKey(0)
    kx, kq, kkv, kp, kb = jax.random.split(key, 5)

    x = jax.random.normal(kx, (B, N, C), dtype=jnp.float32)

    # Deterministic "torch-like" (out, in) weights; qkv_bias=False, proj has bias.
    bound = 1.0 / math.sqrt(C)
    wq = jax.random.uniform(kq, (C, C), jnp.float32, -bound, bound)
    wkv = jax.random.uniform(kkv, (2 * C, C), jnp.float32, -bound, bound)
    wproj = jax.random.uniform(kp, (C, C), jnp.float32, -bound, bound)
    bproj = jax.random.uniform(kb, (C,), jnp.float32, -bound, bound)

    ref_out, ref_attn = reference_efficient_attention(x, wq, wkv, wproj, bproj,
                                                      num_heads=num_heads)

    # --- exact path (f32 matmuls, exact softmax): strict parity check.
    out, attn = efficient_attention(x, wq, wkv, wproj, bproj, num_heads=num_heads,
                                    matmul_dtype=None, approx_softmax=False)
    out = jax.block_until_ready(out)
    attn = jax.block_until_ready(attn)
    assert out.shape == (B, N, C) and attn.shape == (B, N, N)
    assert jnp.allclose(out, ref_out, atol=1e-4, rtol=1e-4)
    assert jnp.allclose(attn, ref_attn, atol=1e-5, rtol=1e-5)

    # --- default fast path: bf16 matmuls + EUP-approx softmax reciprocal.
    out_d, attn_d = efficient_attention(x, wq, wkv, wproj, bproj, num_heads=num_heads)
    out_d = jax.block_until_ready(out_d)
    attn_d = jax.block_until_ready(attn_d)
    assert jnp.allclose(out_d, ref_out, atol=5e-2, rtol=5e-2)
    assert jnp.allclose(attn_d, ref_attn, atol=5e-2, rtol=5e-2)

    print("KERNEL_OK")
</pallas_src>

<mosaic_0001>
module attributes {stable_mosaic.version = 11 : i64} {
  func.func @_efficient_attention_kernel(%arg0: i32, %arg1: memref<2x8x32xf32, #tpu.memory_space<vmem>>, %arg2: memref<32x96xf32, #tpu.memory_space<vmem>>, %arg3: memref<32x32xf32, #tpu.memory_space<vmem>>, %arg4: memref<1x32xf32, #tpu.memory_space<vmem>>, %arg5: memref<2x8x32xf32, #tpu.memory_space<vmem>>, %arg6: memref<2x8x8xf32, #tpu.memory_space<vmem>>, %arg7: memref<2x8x32xf32, #tpu.memory_space<vmem>>) attributes {dimension_semantics = [#tpu.dimension_semantics<parallel>], iteration_bounds = array<i64: 1>, scalar_prefetch = 0 : i64, scratch_operands = 1 : i64, tpu.core_type = #tpu.core_type<tc>, window_params = [{transform_indices = @transform_0, window_bounds = array<i64: 2, 8, 32>}, {pipeline_mode = #tpu.pipeline_mode<synchronous>, transform_indices = @transform_1, window_bounds = array<i64: 32, 96>}, {pipeline_mode = #tpu.pipeline_mode<synchronous>, transform_indices = @transform_2, window_bounds = array<i64: 32, 32>}, {pipeline_mode = #tpu.pipeline_mode<synchronous>, transform_indices = @transform_3, window_bounds = array<i64: 1, 32>}, {transform_indices = @transform_4, window_bounds = array<i64: 2, 8, 32>}, {transform_indices = @transform_5, window_bounds = array<i64: 2, 8, 8>}]} {
    %c0 = arith.constant 0 : index
    %c0_0 = arith.constant 0 : index
    %c0_1 = arith.constant 0 : index
    %0 = vector.load %arg1[%c0, %c0_0, %c0_1] : memref<2x8x32xf32, #tpu.memory_space<vmem>>, vector<2x8x32xf32>
    %1 = vector.shape_cast %0 : vector<2x8x32xf32> to vector<16x32xf32>
    %c0_2 = arith.constant 0 : index
    %c0_3 = arith.constant 0 : index
    %2 = vector.load %arg2[%c0_2, %c0_3] : memref<32x96xf32, #tpu.memory_space<vmem>>, vector<32x96xf32>
    %cst = arith.constant dense<0.000000e+00> : vector<16x96xf32>
    %3 = tpu.matmul %1, %2, %cst {dimension_numbers = #tpu.dot_dimension_numbers<[1], [0], [0], [1], [0, 0, 1, 1], [], []>} : vector<16x32xf32>, vector<32x96xf32>, vector<16x96xf32> -> vector<16x96xf32>
    %4 = vector.shape_cast %3 : vector<16x96xf32> to vector<2x8x96xf32>
    %5 = vector.extract_strided_slice %4 {offsets = [0, 0, 0], sizes = [2, 8, 32], strides = [1, 1, 1]} : vector<2x8x96xf32> to vector<2x8x32xf32>
    %6 = vector.extract_strided_slice %4 {offsets = [0, 0, 32], sizes = [2, 8, 32], strides = [1, 1, 1]} : vector<2x8x96xf32> to vector<2x8x32xf32>
    %7 = vector.extract_strided_slice %4 {offsets = [0, 0, 64], sizes = [2, 8, 32], strides = [1, 1, 1]} : vector<2x8x96xf32> to vector<2x8x32xf32>
    %cst_4 = arith.constant 0.000000e+00 : f32
    %8 = vector.broadcast %cst_4 : f32 to vector<2x8x8xf32>
    %9 = vector.extract_strided_slice %5 {offsets = [0, 0, 0], sizes = [2, 8, 4], strides = [1, 1, 1]} : vector<2x8x32xf32> to vector<2x8x4xf32>
    %10 = vector.extract_strided_slice %6 {offsets = [0, 0, 0], sizes = [2, 8, 4], strides = [1, 1, 1]} : vector<2x8x32xf32> to vector<2x8x4xf32>
    %11 = vector.extract_strided_slice %7 {offsets = [0, 0, 0], sizes = [2, 8, 4], strides = [1, 1, 1]} : vector<2x8x32xf32> to vector<2x8x4xf32>
    %cst_5 = arith.constant dense<0.000000e+00> : vector<2x8x8xf32>
    %12 = tpu.matmul %9, %10, %cst_5 {dimension_numbers = #tpu.dot_dimension_numbers<[2], [2], [1], [1], [0, 0, 0, 1, 1, 1], [0], [0]>} : vector<2x8x4xf32>, vector<2x8x4xf32>, vector<2x8x8xf32> -> vector<2x8x8xf32>
    %cst_6 = arith.constant dense<0xFF800000> : vector<2x8xf32>
    %13 = vector.multi_reduction <maximumf>, %12, %cst_6 [2] : vector<2x8x8xf32> to vector<2x8xf32>
    %14 = vector.shape_cast %13 : vector<2x8xf32> to vector<2x8x1xf32>
    %15 = vector.broadcast %14 : vector<2x8x1xf32> to vector<2x8x8xf32>
    %16 = arith.subf %12, %15 : vector<2x8x8xf32>
    %17 = math.exp %16 : vector<2x8x8xf32>
    %cst_7 = arith.constant dense<0.000000e+00> : vector<2x8xf32>
    %18 = vector.multi_reduction <add>, %17, %cst_7 [2] : vector<2x8x8xf32> to vector<2x8xf32>
    %19 = vector.shape_cast %18 : vector<2x8xf32> to vector<2x8x1xf32>
    %20 = vector.broadcast %19 : vector<2x8x1xf32> to vector<2x8x8xf32>
    %21 = arith.divf %17, %20 : vector<2x8x8xf32>
    %22 = arith.addf %8, %21 : vector<2x8x8xf32>
    %cst_8 = arith.constant dense<0.000000e+00> : vector<2x8x4xf32>
    %23 = tpu.matmul %21, %11, %cst_8 {dimension_numbers = #tpu.dot_dimension_numbers<[2], [1], [1], [2], [0, 0, 0, 1, 1, 2], [0], [0]>} : vector<2x8x8xf32>, vector<2x8x4xf32>, vector<2x8x4xf32> -> vector<2x8x4xf32>
    %c0_9 = arith.constant 0 : index
    %c0_10 = arith.constant 0 : index
    %c0_11 = arith.constant 0 : index
    %24 = vector.load %arg7[%c0_9, %c0_10, %c0_11] : memref<2x8x32xf32, #tpu.memory_space<vmem>>, vector<2x8x4xf32>
    tpu.vector_store %arg7[%c0_9, %c0_10, %c0_11], %23 {strides = array<i32>} : memref<2x8x32xf32, #tpu.memory_space<vmem>>, vector<2x8x4xf32>,
    %25 = vector.extract_strided_slice %5 {offsets = [0, 0, 4], sizes = [2, 8, 4], strides = [1, 1, 1]} : vector<2x8x32xf32> to vector<2x8x4xf32>
    %26 = vector.extract_strided_slice %6 {offsets = [0, 0, 4], sizes = [2, 8, 4], strides = [1, 1, 1]} : vector<2x8x32xf32> to vector<2x8x4xf32>
    %27 = vector.extract_strided_slice %7 {offsets = [0, 0, 4], sizes = [2, 8, 4], strides = [1, 1, 1]} : vector<2x8x32xf32> to vector<2x8x4xf32>
    %cst_12 = arith.constant dense<0.000000e+00> : vector<2x8x8xf32>
    %28 = tpu.matmul %25, %26, %cst_12 {dimension_numbers = #tpu.dot_dimension_numbers<[2], [2], [1], [1], [0, 0, 0, 1, 1, 1], [0], [0]>} : vector<2x8x4xf32>, vector<2x8x4xf32>, vector<2x8x8xf32> -> vector<2x8x8xf32>
    %cst_13 = arith.constant dense<0xFF800000> : vector<2x8xf32>
    %29 = vector.multi_reduction <maximumf>, %28, %cst_13 [2] : vector<2x8x8xf32> to vector<2x8xf32>
    %30 = vector.shape_cast %29 : vector<2x8xf32> to vector<2x8x1xf32>
    %31 = vector.broadcast %30 : vector<2x8x1xf32> to vector<2x8x8xf32>
    %32 = arith.subf %28, %31 : vector<2x8x8xf32>
    %33 = math.exp %32 : vector<2x8x8xf32>
    %cst_14 = arith.constant dense<0.000000e+00> : vector<2x8xf32>
    %34 = vector.multi_reduction <add>, %33, %cst_14 [2] : vector<2x8x8xf32> to vector<2x8xf32>
    %35 = vector.shape_cast %34 : vector<2x8xf32> to vector<2x8x1xf32>
    %36 = vector.broadcast %35 : vector<2x8x1xf32> to vector<2x8x8xf32>
    %37 = arith.divf %33, %36 : vector<2x8x8xf32>
    %38 = arith.addf %22, %37 : vector<2x8x8xf32>
    %cst_15 = arith.constant dense<0.000000e+00> : vector<2x8x4xf32>
    %39 = tpu.matmul %37, %27, %cst_15 {dimension_numbers = #tpu.dot_dimension_numbers<[2], [1], [1], [2], [0, 0, 0, 1, 1, 2], [0], [0]>} : vector<2x8x8xf32>, vector<2x8x4xf32>, vector<2x8x4xf32> -> vector<2x8x4xf32>
    %c0_16 = arith.constant 0 : index
    %c0_17 = arith.constant 0 : index
    %c4 = arith.constant 4 : index
    %40 = vector.load %arg7[%c0_16, %c0_17, %c4] : memref<2x8x32xf32, #tpu.memory_space<vmem>>, vector<2x8x4xf32>
    tpu.vector_store %arg7[%c0_16, %c0_17, %c4], %39 {strides = array<i32>} : memref<2x8x32xf32, #tpu.memory_space<vmem>>, vector<2x8x4xf32>,
    %41 = vector.extract_strided_slice %5 {offsets = [0, 0, 8], sizes = [2, 8, 4], strides = [1, 1, 1]} : vector<2x8x32xf32> to vector<2x8x4xf32>
    %42 = vector.extract_strided_slice %6 {offsets = [0, 0, 8], sizes = [2, 8, 4], strides = [1, 1, 1]} : vector<2x8x32xf32> to vector<2x8x4xf32>
    %43 = vector.extract_strided_slice %7 {offsets = [0, 0, 8], sizes = [2, 8, 4], strides = [1, 1, 1]} : vector<2x8x32xf32> to vector<2x8x4xf32>
    %cst_18 = arith.constant dense<0.000000e+00> : vector<2x8x8xf32>
    %44 = tpu.matmul %41, %42, %cst_18 {dimension_numbers = #tpu.dot_dimension_numbers<[2], [2], [1], [1], [0, 0, 0, 1, 1, 1], [0], [0]>} : vector<2x8x4xf32>, vector<2x8x4xf32>, vector<2x8x8xf32> -> vector<2x8x8xf32>
    %cst_19 = arith.constant dense<0xFF800000> : vector<2x8xf32>
    %45 = vector.multi_reduction <maximumf>, %44, %cst_19 [2] : vector<2x8x8xf32> to vector<2x8xf32>
    %46 = vector.shape_cast %45 : vector<2x8xf32> to vector<2x8x1xf32>
    %47 = vector.broadcast %46 : vector<2x8x1xf32> to vector<2x8x8xf32>
    %48 = arith.subf %44, %47 : vector<2x8x8xf32>
    %49 = math.exp %48 : vector<2x8x8xf32>
    %cst_20 = arith.constant dense<0.000000e+00> : vector<2x8xf32>
    %50 = vector.multi_reduction <add>, %49, %cst_20 [2] : vector<2x8x8xf32> to vector<2x8xf32>
    %51 = vector.shape_cast %50 : vector<2x8xf32> to vector<2x8x1xf32>
    %52 = vector.broadcast %51 : vector<2x8x1xf32> to vector<2x8x8xf32>
    %53 = arith.divf %49, %52 : vector<2x8x8xf32>
    %54 = arith.addf %38, %53 : vector<2x8x8xf32>
    %cst_21 = arith.constant dense<0.000000e+00> : vector<2x8x4xf32>
    %55 = tpu.matmul %53, %43, %cst_21 {dimension_numbers = #tpu.dot_dimension_numbers<[2], [1], [1], [2], [0, 0, 0, 1, 1, 2], [0], [0]>} : vector<2x8x8xf32>, vector<2x8x4xf32>, vector<2x8x4xf32> -> vector<2x8x4xf32>
    %c0_22 = arith.constant 0 : index
    %c0_23 = arith.constant 0 : index
    %c8 = arith.constant 8 : index
    %56 = vector.load %arg7[%c0_22, %c0_23, %c8] : memref<2x8x32xf32, #tpu.memory_space<vmem>>, vector<2x8x4xf32>
    tpu.vector_store %arg7[%c0_22, %c0_23, %c8], %55 {strides = array<i32>} : memref<2x8x32xf32, #tpu.memory_space<vmem>>, vector<2x8x4xf32>,
    %57 = vector.extract_strided_slice %5 {offsets = [0, 0, 12], sizes = [2, 8, 4], strides = [1, 1, 1]} : vector<2x8x32xf32> to vector<2x8x4xf32>
    %58 = vector.extract_strided_slice %6 {offsets = [0, 0, 12], sizes = [2, 8, 4], strides = [1, 1, 1]} : vector<2x8x32xf32> to vector<2x8x4xf32>
    %59 = vector.extract_strided_slice %7 {offsets = [0, 0, 12], sizes = [2, 8, 4], strides = [1, 1, 1]} : vector<2x8x32xf32> to vector<2x8x4xf32>
    %cst_24 = arith.constant dense<0.000000e+00> : vector<2x8x8xf32>
    %60 = tpu.matmul %57, %58, %cst_24 {dimension_numbers = #tpu.dot_dimension_numbers<[2], [2], [1], [1], [0, 0, 0, 1, 1, 1], [0], [0]>} : vector<2x8x4xf32>, vector<2x8x4xf32>, vector<2x8x8xf32> -> vector<2x8x8xf32>
    %cst_25 = arith.constant dense<0xFF800000> : vector<2x8xf32>
    %61 = vector.multi_reduction <maximumf>, %60, %cst_25 [2] : vector<2x8x8xf32> to vector<2x8xf32>
    %62 = vector.shape_cast %61 : vector<2x8xf32> to vector<2x8x1xf32>
    %63 = vector.broadcast %62 : vector<2x8x1xf32> to vector<2x8x8xf32>
    %64 = arith.subf %60, %63 : vector<2x8x8xf32>
    %65 = math.exp %64 : vector<2x8x8xf32>
    %cst_26 = arith.constant dense<0.000000e+00> : vector<2x8xf32>
    %66 = vector.multi_reduction <add>, %65, %cst_26 [2] : vector<2x8x8xf32> to vector<2x8xf32>
    %67 = vector.shape_cast %66 : vector<2x8xf32> to vector<2x8x1xf32>
    %68 = vector.broadcast %67 : vector<2x8x1xf32> to vector<2x8x8xf32>
    %69 = arith.divf %65, %68 : vector<2x8x8xf32>
    %70 = arith.addf %54, %69 : vector<2x8x8xf32>
    %cst_27 = arith.constant dense<0.000000e+00> : vector<2x8x4xf32>
    %71 = tpu.matmul %69, %59, %cst_27 {dimension_numbers = #tpu.dot_dimension_numbers<[2], [1], [1], [2], [0, 0, 0, 1, 1, 2], [0], [0]>} : vector<2x8x8xf32>, vector<2x8x4xf32>, vector<2x8x4xf32> -> vector<2x8x4xf32>
    %c0_28 = arith.constant 0 : index
    %c0_29 = arith.constant 0 : index
    %c12 = arith.constant 12 : index
    %72 = vector.load %arg7[%c0_28, %c0_29, %c12] : memref<2x8x32xf32, #tpu.memory_space<vmem>>, vector<2x8x4xf32>
    tpu.vector_store %arg7[%c0_28, %c0_29, %c12], %71 {strides = array<i32>} : memref<2x8x32xf32, #tpu.memory_space<vmem>>, vector<2x8x4xf32>,
    %73 = vector.extract_strided_slice %5 {offsets = [0, 0, 16], sizes = [2, 8, 4], strides = [1, 1, 1]} : vector<2x8x32xf32> to vector<2x8x4xf32>
    %74 = vector.extract_strided_slice %6 {offsets = [0, 0, 16], sizes = [2, 8, 4], strides = [1, 1, 1]} : vector<2x8x32xf32> to vector<2x8x4xf32>
    %75 = vector.extract_strided_slice %7 {offsets = [0, 0, 16], sizes = [2, 8, 4], strides = [1, 1, 1]} : vector<2x8x32xf32> to vector<2x8x4xf32>
    %cst_30 = arith.constant dense<0.000000e+00> : vector<2x8x8xf32>
    %76 = tpu.matmul %73, %74, %cst_30 {dimension_numbers = #tpu.dot_dimension_numbers<[2], [2], [1], [1], [0, 0, 0, 1, 1, 1], [0], [0]>} : vector<2x8x4xf32>, vector<2x8x4xf32>, vector<2x8x8xf32> -> vector<2x8x8xf32>
    %cst_31 = arith.constant dense<0xFF800000> : vector<2x8xf32>
    %77 = vector.multi_reduction <maximumf>, %76, %cst_31 [2] : vector<2x8x8xf32> to vector<2x8xf32>
    %78 = vector.shape_cast %77 : vector<2x8xf32> to vector<2x8x1xf32>
    %79 = vector.broadcast %78 : vector<2x8x1xf32> to vector<2x8x8xf32>
    %80 = arith.subf %76, %79 : vector<2x8x8xf32>
    %81 = math.exp %80 : vector<2x8x8xf32>
    %cst_32 = arith.constant dense<0.000000e+00> : vector<2x8xf32>
    %82 = vector.multi_reduction <add>, %81, %cst_32 [2] : vector<2x8x8xf32> to vector<2x8xf32>
    %83 = vector.shape_cast %82 : vector<2x8xf32> to vector<2x8x1xf32>
    %84 = vector.broadcast %83 : vector<2x8x1xf32> to vector<2x8x8xf32>
    %85 = arith.divf %81, %84 : vector<2x8x8xf32>
    %86 = arith.addf %70, %85 : vector<2x8x8xf32>
    %cst_33 = arith.constant dense<0.000000e+00> : vector<2x8x4xf32>
    %87 = tpu.matmul %85, %75, %cst_33 {dimension_numbers = #tpu.dot_dimension_numbers<[2], [1], [1], [2], [0, 0, 0, 1, 1, 2], [0], [0]>} : vector<2x8x8xf32>, vector<2x8x4xf32>, vector<2x8x4xf32> -> vector<2x8x4xf32>
    %c0_34 = arith.constant 0 : index
    %c0_35 = arith.constant 0 : index
    %c16 = arith.constant 16 : index
    %88 = vector.load %arg7[%c0_34, %c0_35, %c16] : memref<2x8x32xf32, #tpu.memory_space<vmem>>, vector<2x8x4xf32>
    tpu.vector_store %arg7[%c0_34, %c0_35, %c16], %87 {strides = array<i32>} : memref<2x8x32xf32, #tpu.memory_space<vmem>>, vector<2x8x4xf32>,
    %89 = vector.extract_strided_slice %5 {offsets = [0, 0, 20], sizes = [2, 8, 4], strides = [1, 1, 1]} : vector<2x8x32xf32> to vector<2x8x4xf32>
    %90 = vector.extract_strided_slice %6 {offsets = [0, 0, 20], sizes = [2, 8, 4], strides = [1, 1, 1]} : vector<2x8x32xf32> to vector<2x8x4xf32>
    %91 = vector.extract_strided_slice %7 {offsets = [0, 0, 20], sizes = [2, 8, 4], strides = [1, 1, 1]} : vector<2x8x32xf32> to vector<2x8x4xf32>
    %cst_36 = arith.constant dense<0.000000e+00> : vector<2x8x8xf32>
    %92 = tpu.matmul %89, %90, %cst_36 {dimension_numbers = #tpu.dot_dimension_numbers<[2], [2], [1], [1], [0, 0, 0, 1, 1, 1], [0], [0]>} : vector<2x8x4xf32>, vector<2x8x4xf32>, vector<2x8x8xf32> -> vector<2x8x8xf32>
    %cst_37 = arith.constant dense<0xFF800000> : vector<2x8xf32>
    %93 = vector.multi_reduction <maximumf>, %92, %cst_37 [2] : vector<2x8x8xf32> to vector<2x8xf32>
    %94 = vector.shape_cast %93 : vector<2x8xf32> to vector<2x8x1xf32>
    %95 = vector.broadcast %94 : vector<2x8x1xf32> to vector<2x8x8xf32>
    %96 = arith.subf %92, %95 : vector<2x8x8xf32>
    %97 = math.exp %96 : vector<2x8x8xf32>
    %cst_38 = arith.constant dense<0.000000e+00> : vector<2x8xf32>
    %98 = vector.multi_reduction <add>, %97, %cst_38 [2] : vector<2x8x8xf32> to vector<2x8xf32>
    %99 = vector.shape_cast %98 : vector<2x8xf32> to vector<2x8x1xf32>
    %100 = vector.broadcast %99 : vector<2x8x1xf32> to vector<2x8x8xf32>
    %101 = arith.divf %97, %100 : vector<2x8x8xf32>
    %102 = arith.addf %86, %101 : vector<2x8x8xf32>
    %cst_39 = arith.constant dense<0.000000e+00> : vector<2x8x4xf32>
    %103 = tpu.matmul %101, %91, %cst_39 {dimension_numbers = #tpu.dot_dimension_numbers<[2], [1], [1], [2], [0, 0, 0, 1, 1, 2], [0], [0]>} : vector<2x8x8xf32>, vector<2x8x4xf32>, vector<2x8x4xf32> -> vector<2x8x4xf32>
    %c0_40 = arith.constant 0 : index
    %c0_41 = arith.constant 0 : index
    %c20 = arith.constant 20 : index
    %104 = vector.load %arg7[%c0_40, %c0_41, %c20] : memref<2x8x32xf32, #tpu.memory_space<vmem>>, vector<2x8x4xf32>
    tpu.vector_store %arg7[%c0_40, %c0_41, %c20], %103 {strides = array<i32>} : memref<2x8x32xf32, #tpu.memory_space<vmem>>, vector<2x8x4xf32>,
    %105 = vector.extract_strided_slice %5 {offsets = [0, 0, 24], sizes = [2, 8, 4], strides = [1, 1, 1]} : vector<2x8x32xf32> to vector<2x8x4xf32>
    %106 = vector.extract_strided_slice %6 {offsets = [0, 0, 24], sizes = [2, 8, 4], strides = [1, 1, 1]} : vector<2x8x32xf32> to vector<2x8x4xf32>
    %107 = vector.extract_strided_slice %7 {offsets = [0, 0, 24], sizes = [2, 8, 4], strides = [1, 1, 1]} : vector<2x8x32xf32> to vector<2x8x4xf32>
    %cst_42 = arith.constant dense<0.000000e+00> : vector<2x8x8xf32>
    %108 = tpu.matmul %105, %106, %cst_42 {dimension_numbers = #tpu.dot_dimension_numbers<[2], [2], [1], [1], [0, 0, 0, 1, 1, 1], [0], [0]>} : vector<2x8x4xf32>, vector<2x8x4xf32>, vector<2x8x8xf32> -> vector<2x8x8xf32>
    %cst_43 = arith.constant dense<0xFF800000> : vector<2x8xf32>
    %109 = vector.multi_reduction <maximumf>, %108, %cst_43 [2] : vector<2x8x8xf32> to vector<2x8xf32>
    %110 = vector.shape_cast %109 : vector<2x8xf32> to vector<2x8x1xf32>
    %111 = vector.broadcast %110 : vector<2x8x1xf32> to vector<2x8x8xf32>
    %112 = arith.subf %108, %111 : vector<2x8x8xf32>
    %113 = math.exp %112 : vector<2x8x8xf32>
    %cst_44 = arith.constant dense<0.000000e+00> : vector<2x8xf32>
    %114 = vector.multi_reduction <add>, %113, %cst_44 [2] : vector<2x8x8xf32> to vector<2x8xf32>
    %115 = vector.shape_cast %114 : vector<2x8xf32> to vector<2x8x1xf32>
    %116 = vector.broadcast %115 : vector<2x8x1xf32> to vector<2x8x8xf32>
    %117 = arith.divf %113, %116 : vector<2x8x8xf32>
    %118 = arith.addf %102, %117 : vector<2x8x8xf32>
    %cst_45 = arith.constant dense<0.000000e+00> : vector<2x8x4xf32>
    %119 = tpu.matmul %117, %107, %cst_45 {dimension_numbers = #tpu.dot_dimension_numbers<[2], [1], [1], [2], [0, 0, 0, 1, 1, 2], [0], [0]>} : vector<2x8x8xf32>, vector<2x8x4xf32>, vector<2x8x4xf32> -> vector<2x8x4xf32>
    %c0_46 = arith.constant 0 : index
    %c0_47 = arith.constant 0 : index
    %c24 = arith.constant 24 : index
    %120 = vector.load %arg7[%c0_46, %c0_47, %c24] : memref<2x8x32xf32, #tpu.memory_space<vmem>>, vector<2x8x4xf32>
    tpu.vector_store %arg7[%c0_46, %c0_47, %c24], %119 {strides = array<i32>} : memref<2x8x32xf32, #tpu.memory_space<vmem>>, vector<2x8x4xf32>,
    %121 = vector.extract_strided_slice %5 {offsets = [0, 0, 28], sizes = [2, 8, 4], strides = [1, 1, 1]} : vector<2x8x32xf32> to vector<2x8x4xf32>
    %122 = vector.extract_strided_slice %6 {offsets = [0, 0, 28], sizes = [2, 8, 4], strides = [1, 1, 1]} : vector<2x8x32xf32> to vector<2x8x4xf32>
    %123 = vector.extract_strided_slice %7 {offsets = [0, 0, 28], sizes = [2, 8, 4], strides = [1, 1, 1]} : vector<2x8x32xf32> to vector<2x8x4xf32>
    %cst_48 = arith.constant dense<0.000000e+00> : vector<2x8x8xf32>
    %124 = tpu.matmul %121, %122, %cst_48 {dimension_numbers = #tpu.dot_dimension_numbers<[2], [2], [1], [1], [0, 0, 0, 1, 1, 1], [0], [0]>} : vector<2x8x4xf32>, vector<2x8x4xf32>, vector<2x8x8xf32> -> vector<2x8x8xf32>
    %cst_49 = arith.constant dense<0xFF800000> : vector<2x8xf32>
    %125 = vector.multi_reduction <maximumf>, %124, %cst_49 [2] : vector<2x8x8xf32> to vector<2x8xf32>
    %126 = vector.shape_cast %125 : vector<2x8xf32> to vector<2x8x1xf32>
    %127 = vector.broadcast %126 : vector<2x8x1xf32> to vector<2x8x8xf32>
    %128 = arith.subf %124, %127 : vector<2x8x8xf32>
    %129 = math.exp %128 : vector<2x8x8xf32>
    %cst_50 = arith.constant dense<0.000000e+00> : vector<2x8xf32>
    %130 = vector.multi_reduction <add>, %129, %cst_50 [2] : vector<2x8x8xf32> to vector<2x8xf32>
    %131 = vector.shape_cast %130 : vector<2x8xf32> to vector<2x8x1xf32>
    %132 = vector.broadcast %131 : vector<2x8x1xf32> to vector<2x8x8xf32>
    %133 = arith.divf %129, %132 : vector<2x8x8xf32>
    %134 = arith.addf %118, %133 : vector<2x8x8xf32>
    %cst_51 = arith.constant dense<0.000000e+00> : vector<2x8x4xf32>
    %135 = tpu.matmul %133, %123, %cst_51 {dimension_numbers = #tpu.dot_dimension_numbers<[2], [1], [1], [2], [0, 0, 0, 1, 1, 2], [0], [0]>} : vector<2x8x8xf32>, vector<2x8x4xf32>, vector<2x8x4xf32> -> vector<2x8x4xf32>
    %c0_52 = arith.constant 0 : index
    %c0_53 = arith.constant 0 : index
    %c28 = arith.constant 28 : index
    %136 = vector.load %arg7[%c0_52, %c0_53, %c28] : memref<2x8x32xf32, #tpu.memory_space<vmem>>, vector<2x8x4xf32>
    tpu.vector_store %arg7[%c0_52, %c0_53, %c28], %135 {strides = array<i32>} : memref<2x8x32xf32, #tpu.memory_space<vmem>>, vector<2x8x4xf32>,
    %c0_54 = arith.constant 0 : index
    %c0_55 = arith.constant 0 : index
    %c0_56 = arith.constant 0 : index
    %137 = vector.load %arg7[%c0_54, %c0_55, %c0_56] : memref<2x8x32xf32, #tpu.memory_space<vmem>>, vector<2x8x32xf32>
    %138 = vector.shape_cast %137 : vector<2x8x32xf32> to vector<16x32xf32>
    %c0_57 = arith.constant 0 : index
    %c0_58 = arith.constant 0 : index
    %139 = vector.load %arg3[%c0_57, %c0_58] : memref<32x32xf32, #tpu.memory_space<vmem>>, vector<32x32xf32>
    %cst_59 = arith.constant dense<0.000000e+00> : vector<16x32xf32>
    %140 = tpu.matmul %138, %139, %cst_59 {dimension_numbers = #tpu.dot_dimension_numbers<[1], [0], [0], [1], [0, 0, 1, 1], [], []>} : vector<16x32xf32>, vector<32x32xf32>, vector<16x32xf32> -> vector<16x32xf32>
    %c0_60 = arith.constant 0 : index
    %c0_61 = arith.constant 0 : index
    %141 = vector.load %arg4[%c0_60, %c0_61] : memref<1x32xf32, #tpu.memory_space<vmem>>, vector<1x32xf32>
    %142 = vector.shape_cast %141 : vector<1x32xf32> to vector<32xf32>
    %143 = vector.shape_cast %142 : vector<32xf32> to vector<1x32xf32>
    %144 = vector.broadcast %143 : vector<1x32xf32> to vector<16x32xf32>
    %145 = arith.addf %140, %144 : vector<16x32xf32>
    %146 = vector.shape_cast %145 : vector<16x32xf32> to vector<2x8x32xf32>
    %c0_62 = arith.constant 0 : index
    %c0_63 = arith.constant 0 : index
    %c0_64 = arith.constant 0 : index
    %147 = vector.load %arg5[%c0_62, %c0_63, %c0_64] : memref<2x8x32xf32, #tpu.memory_space<vmem>>, vector<2x8x32xf32>
    tpu.vector_store %arg5[%c0_62, %c0_63, %c0_64], %146 {strides = array<i32>} : memref<2x8x32xf32, #tpu.memory_space<vmem>>, vector<2x8x32xf32>,
    %cst_65 = arith.constant 1.250000e-01 : f32
    %148 = vector.broadcast %cst_65 : f32 to vector<2x8x8xf32>
    %149 = arith.mulf %134, %148 : vector<2x8x8xf32>
    %c0_66 = arith.constant 0 : index
    %c0_67 = arith.constant 0 : index
    %c0_68 = arith.constant 0 : index
    %150 = vector.load %arg6[%c0_66, %c0_67, %c0_68] : memref<2x8x8xf32, #tpu.memory_space<vmem>>, vector<2x8x8xf32>
    tpu.vector_store %arg6[%c0_66, %c0_67, %c0_68], %149 {strides = array<i32>} : memref<2x8x8xf32, #tpu.memory_space<vmem>>, vector<2x8x8xf32>,
    return
  }
  func.func @transform_0(%arg0: i32) -> (i32, i32, i32) {
    %c0_i32 = arith.constant 0 : i32
    %c0_i32_0 = arith.constant 0 : i32
    %c0_i32_1 = arith.constant 0 : i32
    return %arg0, %c0_i32, %c0_i32_0 : i32, i32, i32
  }
  func.func @transform_1(%arg0: i32) -> (i32, i32) {
    %c0_i32 = arith.constant 0 : i32
    %c0_i32_0 = arith.constant 0 : i32
    %c0_i32_1 = arith.constant 0 : i32
    return %c0_i32, %c0_i32_0 : i32, i32
  }
  func.func @transform_2(%arg0: i32) -> (i32, i32) {
    %c0_i32 = arith.constant 0 : i32
    %c0_i32_0 = arith.constant 0 : i32
    %c0_i32_1 = arith.constant 0 : i32
    return %c0_i32, %c0_i32_0 : i32, i32
  }
  func.func @transform_3(%arg0: i32) -> (i32, i32) {
    %c0_i32 = arith.constant 0 : i32
    %c0_i32_0 = arith.constant 0 : i32
    %c0_i32_1 = arith.constant 0 : i32
    return %c0_i32, %c0_i32_0 : i32, i32
  }
  func.func @transform_4(%arg0: i32) -> (i32, i32, i32) {
    %c0_i32 = arith.constant 0 : i32
    %c0_i32_0 = arith.constant 0 : i32
    %c0_i32_1 = arith.constant 0 : i32
    return %arg0, %c0_i32, %c0_i32_0 : i32, i32, i32
  }
  func.func @transform_5(%arg0: i32) -> (i32, i32, i32) {
    %c0_i32 = arith.constant 0 : i32
    %c0_i32_0 = arith.constant 0 : i32
    %c0_i32_1 = arith.constant 0 : i32
    return %arg0, %c0_i32, %c0_i32_0 : i32, i32, i32
  }
}

</mosaic_0001>

<llo_original>
// kernel: tpu_custom_call.1
$region0: #{tpu_custom_call.1}
  #allocation0 [shape = 'u32[]', space=smem, size = 0x4, offset = 0x4, fixed_abs, tag = 'smem constant byte address 0x4 - core index']
  #allocation1 [shape = 'u32[144,128]{1,0:T(1,128)}', space=vmem, size = 0x12000, scoped, tag = 'internal scratch']
  #allocation2 [shape = 'f32[2,8,32]{2,1,0:T(8,128)}', space=vmem, size = 0x2000, scoped, tag = 'scratch operand']
  %s0 = inlined_call_operand.hbm [shape: f32[2,8,32], index: 0, kind: input, shape index: {}]
  %s1 = inlined_call_operand.hbm [shape: f32[32,96], index: 1, kind: input, shape index: {}]
  %s2 = inlined_call_operand.hbm [shape: f32[32,32], index: 2, kind: input, shape index: {}]
  %s3 = inlined_call_operand.vmem [shape: f32[1,32], index: 3, kind: input, shape index: {}]
  %s4 = inlined_call_operand.hbm [shape: f32[2,8,32], index: 4, kind: output, shape index: {0}]
  %s5 = inlined_call_operand.hbm [shape: f32[2,8,8], index: 5, kind: output, shape index: {1}]
  %6 = xla_tuple %s4, %s5
  %s7 = sld [smem:[#allocation0]]
  $region46: #{tpu_custom_call.1} parent=0
    _
  %s9 = ssub.s32 1, %s7
  %s10 = scalar_select 0, %s9, %s7
  $region1: #{tpu_custom_call.1} parent=0
    #allocation3 [shape = 'u8[8192]{0}', space=vmem, size = 0x2000, scoped, tag = 'input window, operand 0, single buffered']
    #allocation4 [shape = 's32[1]{0}', space=sflag, size = 0x4, scoped, tag = 'scoped memory for tpu_custom_call.1']
    #allocation5 [shape = 's32[1]{0}', space=sflag, size = 0x4, scoped, tag = 'scoped memory for tpu_custom_call.1']
    #allocation6 [shape = 'u8[16384]{0}', space=vmem, size = 0x4000, scoped, tag = 'input window, operand 1, single buffered']
    #allocation7 [shape = 's32[1]{0}', space=sflag, size = 0x4, scoped, tag = 'scoped memory for tpu_custom_call.1']
    #allocation8 [shape = 'u8[16384]{0}', space=vmem, size = 0x4000, scoped, tag = 'input window, operand 2, single buffered']
    #allocation9 [shape = 'u8[8192]{0}', space=vmem, size = 0x2000, scoped, tag = 'output window, operand 0, single buffered']
    #allocation10 [shape = 'u8[8192]{0}', space=vmem, size = 0x2000, scoped, tag = 'output window, operand 1, single buffered']
    #allocation11 [shape = 's32[1]{0}', space=sflag, size = 0x4, scoped, tag = 'scoped memory for tpu_custom_call.1']
    %11 = vsyncpa [#allocation4], 0
    %12 = vsyncpa [#allocation7], 0
    %13 = vsyncpa [#allocation5], 0
    %14 = vsyncpa [#allocation11], 0
    // Predicated region
    $region2: #{tpu_custom_call.1} parent=1 // pred_check
      _
    $region3: #{tpu_custom_call.1} parent=1 // pred_check_branch
      %16 = sbr.rel (0) target = $region5
    $region4: #{tpu_custom_call.1} parent=1 // pred_region
      %s18 = ssub.s32 256, 256
      %19 = vsyncadd [#allocation4], %s18
      %s20 = sshll.u32 [#allocation3], 4
      %s21 = int_to_ptr.vmem [resolvable:$true] %s20
      %26 = dma.hbm_to_vmem [thread:$0]  %s0, 256, %s21, [#allocation4], 128, 128, 8
    $region5: #{tpu_custom_call.1} parent=1 // pred_fallthru
      _
    // Predicated region
    $region6: #{tpu_custom_call.1} parent=1 // pred_check
      _
    $region7: #{tpu_custom_call.1} parent=1 // pred_check_branch
      %28 = sbr.rel (0) target = $region9
    $region8: #{tpu_custom_call.1} parent=1 // pred_region
      %s30 = ssub.s32 512, 512
      %31 = vsyncadd [#allocation7], %s30
      %s32 = sshll.u32 [#allocation6], 4
      %s33 = int_to_ptr.vmem [resolvable:$true] %s32
      %38 = dma.hbm_to_vmem [thread:$0]  %s1, 512, %s33, [#allocation7], 128, 128, 8
    $region9: #{tpu_custom_call.1} parent=1 // pred_fallthru
      _
    // Predicated region
    $region10: #{tpu_custom_call.1} parent=1 // pred_check
      _
    $region11: #{tpu_custom_call.1} parent=1 // pred_check_branch
      %40 = sbr.rel (0) target = $region13
    $region12: #{tpu_custom_call.1} parent=1 // pred_region
      %s42 = ssub.s32 512, 512
      %43 = vsyncadd [#allocation7], %s42
      %s44 = sshll.u32 [#allocation8], 4
      %s45 = int_to_ptr.vmem [resolvable:$true] %s44
      %50 = dma.hbm_to_vmem [thread:$0]  %s2, 512, %s45, [#allocation7], 128, 128, 8
    $region13: #{tpu_custom_call.1} parent=1 // pred_fallthru
      _
    // Predicated region
    $region14: #{tpu_custom_call.1} parent=1 // pred_check
      _
    $region15: #{tpu_custom_call.1} parent=1 // pred_check_branch
      %52 = sbr.rel (0) target = $region17
    $region16: #{tpu_custom_call.1} parent=1 // pred_region
      _
    $region17: #{tpu_custom_call.1} parent=1 // pred_fallthru
      _
    // Predicated region
    $region18: #{tpu_custom_call.1} parent=1 // pred_check
      _
    $region19: #{tpu_custom_call.1} parent=1 // pred_check_branch
      %54 = sbr.rel (0) target = $region21
    $region20: #{tpu_custom_call.1} parent=1 // pred_region
      %55 = dma.done [#allocation4], 256
    $region21: #{tpu_custom_call.1} parent=1 // pred_fallthru
      _
    // Predicated region
    $region22: #{tpu_custom_call.1} parent=1 // pred_check
      _
    $region23: #{tpu_custom_call.1} parent=1 // pred_check_branch
      %57 = sbr.rel (0) target = $region25
    $region24: #{tpu_custom_call.1} parent=1 // pred_region
      %58 = dma.done [#allocation7], 512
    $region25: #{tpu_custom_call.1} parent=1 // pred_fallthru
      _
    // Predicated region
    $region26: #{tpu_custom_call.1} parent=1 // pred_check
      _
    $region27: #{tpu_custom_call.1} parent=1 // pred_check_branch
      %60 = sbr.rel (0) target = $region29
    $region28: #{tpu_custom_call.1} parent=1 // pred_region
      %61 = dma.done [#allocation7], 512
    $region29: #{tpu_custom_call.1} parent=1 // pred_fallthru
      _
    %v62 = vld [vmem:[#allocation3] sm:$0xff]
    %v63 = vld [vmem:[#allocation3 + $0x8] sm:$0xff]
    %v64 = vld [vmem:[#allocation6] sm:$0xff]
    %v65 = vld [vmem:[#allocation6 + $0x8] sm:$0xff]
    %v66 = vld [vmem:[#allocation6 + $0x10] sm:$0xff]
    %v67 = vld [vmem:[#allocation6 + $0x18] sm:$0xff]
    %vm68 = vcmask 261120
    %v70 = vsel %vm68, %v62, 0
    %v73 = vsel %vm68, %v63, 0
    %75 = vmatprep.subr.mxu0 0.0
    %76 = vmatpush1.msra.mxu0 %v64
    %77 = vmatprep.subr.mxu0 0.0
    %78 = vmatpush1.msra.mxu0 %v65
    %79 = vmatprep.subr.mxu0 0.0
    %80 = vmatpush1.msra.mxu0 %v66
    %81 = vmatprep.subr.mxu0 0.0
    %82 = vmatpush1.msra.mxu0 %v67
    %83 = vmatprep.subr.mxu0 0.0
    %84 = vmatpush1.msra.mxu0 0.0
    %85 = vmatprep.subr.mxu0 0.0
    %86 = vmatpush1.msra.mxu0 0.0
    %87 = vmatprep.subr.mxu0 0.0
    %88 = vmatpush1.msra.mxu0 0.0
    %89 = vmatprep.subr.mxu0 0.0
    %90 = vmatpush1.msra.mxu0 0.0
    %91 = vmatprep.subr.mxu0 0.0
    %92 = vmatpush1.msra.mxu0 0.0
    %93 = vmatprep.subr.mxu0 0.0
    %94 = vmatpush1.msra.mxu0 0.0
    %95 = vmatprep.subr.mxu0 0.0
    %96 = vmatpush1.msra.mxu0 0.0
    %97 = vmatprep.subr.mxu0 0.0
    %98 = vmatpush1.msra.mxu0 0.0
    %99 = vmatprep.subr.mxu0 0.0
    %100 = vmatpush1.msra.mxu0 0.0
    %101 = vmatprep.subr.mxu0 0.0
    %102 = vmatpush1.msra.mxu0 0.0
    %103 = vmatprep.subr.mxu0 0.0
    %104 = vmatpush1.msra.mxu0 0.0
    %105 = vmatprep.subr.mxu0 0.0
    %106 = vmatpush1.msra.mxu0 0.0
    %107 = vmatprep.subr.mxu0 0.0
    %108 = vmatpush1.msra.mxu0 0.0
    %109 = vmatprep.subr.mxu0 0.0
    %110 = vmatpush1.msra.mxu0 0.0
    %111 = vmatprep.subr.mxu0 0.0
    %112 = vmatpush1.msra.mxu0 0.0
    %113 = vmatprep.subr.mxu0 0.0
    %114 = vmatpush1.msra.mxu0 0.0
    %115 = vmatprep.subr.mxu0 0.0
    %116 = vmatpush1.msra.mxu0 0.0
    %117 = vmatprep.subr.mxu0 0.0
    %118 = vmatpush1.msra.mxu0 0.0
    %119 = vmatprep.subr.mxu0 0.0
    %120 = vmatpush1.msra.mxu0 0.0
    %121 = vmatprep.subr.mxu0 0.0
    %122 = vmatpush1.msra.mxu0 0.0
    %123 = vmatprep.subr.mxu0 0.0
    %124 = vmatpush1.msra.mxu0 0.0
    %125 = vmatprep.subr.mxu0 0.0
    %126 = vmatpush1.msra.mxu0 0.0
    %127 = vmatprep.subr.mxu0 0.0
    %128 = vmatpush1.msra.mxu0 0.0
    %129 = vmatprep.subr.mxu0 0.0
    %130 = vmatpush1.msra.mxu0 0.0
    %131 = vmatprep.subr.mxu0 0.0
    %132 = vmatpush1.msra.mxu0 0.0
    %133 = vmatprep.subr.mxu0 0.0
    %134 = vmatpush1.msra.mxu0 0.0
    %135 = vmatprep.subr.mxu0 0.0
    %136 = vmatpush1.msra.mxu0 0.0
    %137 = vmatprep.subr.mxu0 0.0
    %138 = vmatpush1.msra.mxu0 0.0
    %139 = vmatprep.mubr.f32.mxu0 0.0
    %140 = vmatmul.mubr.f32.gmra.mrb[0].mxu0 %v70
    %v141 = vpop.f32.mrb[0].mxu0
    %v142 = vadd.f32 0.0, %v141
    %v143 = vpop.f32.mrb[0].mxu0
    %144 = vmatprep.mubr.f32.mxu0 0.0
    %145 = vmatmul.mubr.f32.gmra.mrb[0].mxu0 %v73
    %v146 = vpop.f32.mrb[0].mxu0
    %v147 = vadd.f32 0.0, %v146
    %v148 = vpop.f32.mrb[0].mxu0
    %149 = vdwg.mxu0
    %151 = vrot.lane.b32.xlu0 %v142, 96
    %v152 = vpop.permute.xlu0 %151
    %vm153 = vcmask 31744
    %v154 = vsel %vm153, %v142, 0
    %v156 = vsel %vm153, %v152, 0
    %158 = vmatprep.subr.mxu0 0.0
    %159 = vmatpush1.xpose.msra.mxu0 %v156
    %160 = vmatprep.subr.mxu0 0.0
    %161 = vmatpush1.xpose.msra.mxu0 0.0
    %162 = vmatprep.subr.mxu0 0.0
    %163 = vmatpush1.xpose.msra.mxu0 0.0
    %164 = vmatprep.subr.mxu0 0.0
    %165 = vmatpush1.xpose.msra.mxu0 0.0
    %166 = vmatprep.subr.mxu0 0.0
    %167 = vmatpush1.xpose.msra.mxu0 0.0
    %168 = vmatprep.subr.mxu0 0.0
    %169 = vmatpush1.xpose.msra.mxu0 0.0
    %170 = vmatprep.subr.mxu0 0.0
    %171 = vmatpush1.xpose.msra.mxu0 0.0
    %172 = vmatprep.subr.mxu0 0.0
    %173 = vmatpush1.xpose.msra.mxu0 0.0
    %174 = vmatprep.subr.mxu0 0.0
    %175 = vmatpush1.xpose.msra.mxu0 0.0
    %176 = vmatprep.subr.mxu0 0.0
    %177 = vmatpush1.xpose.msra.mxu0 0.0
    %178 = vmatprep.subr.mxu0 0.0
    %179 = vmatpush1.xpose.msra.mxu0 0.0
    %180 = vmatprep.subr.mxu0 0.0
    %181 = vmatpush1.xpose.msra.mxu0 0.0
    %182 = vmatprep.subr.mxu0 0.0
    %183 = vmatpush1.xpose.msra.mxu0 0.0
    %184 = vmatprep.subr.mxu0 0.0
    %185 = vmatpush1.xpose.msra.mxu0 0.0
    %186 = vmatprep.subr.mxu0 0.0
    %187 = vmatpush1.xpose.msra.mxu0 0.0
    %188 = vmatprep.subr.mxu0 0.0
    %189 = vmatpush1.xpose.msra.mxu0 0.0
    %190 = vmatprep.subr.mxu0 0.0
    %191 = vmatpush1.xpose.msra.mxu0 0.0
    %192 = vmatprep.subr.mxu0 0.0
    %193 = vmatpush1.xpose.msra.mxu0 0.0
    %194 = vmatprep.subr.mxu0 0.0
    %195 = vmatpush1.xpose.msra.mxu0 0.0
    %196 = vmatprep.subr.mxu0 0.0
    %197 = vmatpush1.xpose.msra.mxu0 0.0
    %198 = vmatprep.subr.mxu0 0.0
    %199 = vmatpush1.xpose.msra.mxu0 0.0
    %200 = vmatprep.subr.mxu0 0.0
    %201 = vmatpush1.xpose.msra.mxu0 0.0
    %202 = vmatprep.subr.mxu0 0.0
    %203 = vmatpush1.xpose.msra.mxu0 0.0
    %204 = vmatprep.subr.mxu0 0.0
    %205 = vmatpush1.xpose.msra.mxu0 0.0
    %206 = vmatprep.subr.mxu0 0.0
    %207 = vmatpush1.xpose.msra.mxu0 0.0
    %208 = vmatprep.subr.mxu0 0.0
    %209 = vmatpush1.xpose.msra.mxu0 0.0
    %210 = vmatprep.subr.mxu0 0.0
    %211 = vmatpush1.xpose.msra.mxu0 0.0
    %212 = vmatprep.subr.mxu0 0.0
    %213 = vmatpush1.xpose.msra.mxu0 0.0
    %214 = vmatprep.subr.mxu0 0.0
    %215 = vmatpush1.xpose.msra.mxu0 0.0
    %216 = vmatprep.subr.mxu0 0.0
    %217 = vmatpush1.xpose.msra.mxu0 0.0
    %218 = vmatprep.subr.mxu0 0.0
    %219 = vmatpush1.xpose.msra.mxu0 0.0
    %220 = vmatprep.subr.mxu0 0.0
    %221 = vmatpush1.xpose.msra.mxu0 0.0
    %222 = vmatprep.mubr.f32.mxu0 0.0
    %223 = vmatmul.mubr.f32.gmra.mrb[0].mxu0 %v154
    %v224 = vpop.f32.mrb[0].mxu0
    %v225 = vadd.f32 0.0, %v224
    %v226 = vpop.f32.mrb[0].mxu0
    %227 = vdwg.mxu0
    %229 = vrot.lane.b32.xlu0 %v147, 96
    %v230 = vpop.permute.xlu0 %229
    %v231 = vsel %vm153, %v147, 0
    %v233 = vsel %vm153, %v230, 0
    %235 = vmatprep.subr.mxu0 0.0
    %236 = vmatpush1.xpose.msra.mxu0 %v233
    %237 = vmatprep.subr.mxu0 0.0
    %238 = vmatpush1.xpose.msra.mxu0 0.0
    %239 = vmatprep.subr.mxu0 0.0
    %240 = vmatpush1.xpose.msra.mxu0 0.0
    %241 = vmatprep.subr.mxu0 0.0
    %242 = vmatpush1.xpose.msra.mxu0 0.0
    %243 = vmatprep.subr.mxu0 0.0
    %244 = vmatpush1.xpose.msra.mxu0 0.0
    %245 = vmatprep.subr.mxu0 0.0
    %246 = vmatpush1.xpose.msra.mxu0 0.0
    %247 = vmatprep.subr.mxu0 0.0
    %248 = vmatpush1.xpose.msra.mxu0 0.0
    %249 = vmatprep.subr.mxu0 0.0
    %250 = vmatpush1.xpose.msra.mxu0 0.0
    %251 = vmatprep.subr.mxu0 0.0
    %252 = vmatpush1.xpose.msra.mxu0 0.0
    %253 = vmatprep.subr.mxu0 0.0
    %254 = vmatpush1.xpose.msra.mxu0 0.0
    %255 = vmatprep.subr.mxu0 0.0
    %256 = vmatpush1.xpose.msra.mxu0 0.0
    %257 = vmatprep.subr.mxu0 0.0
    %258 = vmatpush1.xpose.msra.mxu0 0.0
    %259 = vmatprep.subr.mxu0 0.0
    %260 = vmatpush1.xpose.msra.mxu0 0.0
    %261 = vmatprep.subr.mxu0 0.0
    %262 = vmatpush1.xpose.msra.mxu0 0.0
    %263 = vmatprep.subr.mxu0 0.0
    %264 = vmatpush1.xpose.msra.mxu0 0.0
    %265 = vmatprep.subr.mxu0 0.0
    %266 = vmatpush1.xpose.msra.mxu0 0.0
    %267 = vmatprep.subr.mxu0 0.0
    %268 = vmatpush1.xpose.msra.mxu0 0.0
    %269 = vmatprep.subr.mxu0 0.0
    %270 = vmatpush1.xpose.msra.mxu0 0.0
    %271 = vmatprep.subr.mxu0 0.0
    %272 = vmatpush1.xpose.msra.mxu0 0.0
    %273 = vmatprep.subr.mxu0 0.0
    %274 = vmatpush1.xpose.msra.mxu0 0.0
    %275 = vmatprep.subr.mxu0 0.0
    %276 = vmatpush1.xpose.msra.mxu0 0.0
    %277 = vmatprep.subr.mxu0 0.0
    %278 = vmatpush1.xpose.msra.mxu0 0.0
    %279 = vmatprep.subr.mxu0 0.0
    %280 = vmatpush1.xpose.msra.mxu0 0.0
    %281 = vmatprep.subr.mxu0 0.0
    %282 = vmatpush1.xpose.msra.mxu0 0.0
    %283 = vmatprep.subr.mxu0 0.0
    %284 = vmatpush1.xpose.msra.mxu0 0.0
    %285 = vmatprep.subr.mxu0 0.0
    %286 = vmatpush1.xpose.msra.mxu0 0.0
    %287 = vmatprep.subr.mxu0 0.0
    %288 = vmatpush1.xpose.msra.mxu0 0.0
    %289 = vmatprep.subr.mxu0 0.0
    %290 = vmatpush1.xpose.msra.mxu0 0.0
    %291 = vmatprep.subr.mxu0 0.0
    %292 = vmatpush1.xpose.msra.mxu0 0.0
    %293 = vmatprep.subr.mxu0 0.0
    %294 = vmatpush1.xpose.msra.mxu0 0.0
    %295 = vmatprep.subr.mxu0 0.0
    %296 = vmatpush1.xpose.msra.mxu0 0.0
    %297 = vmatprep.subr.mxu0 0.0
    %298 = vmatpush1.xpose.msra.mxu0 0.0
    %299 = vmatprep.mubr.f32.mxu0 0.0
    %300 = vmatmul.mubr.f32.gmra.mrb[0].mxu0 %v231
    %v301 = vpop.f32.mrb[0].mxu0
    %v302 = vadd.f32 0.0, %v301
    %v303 = vpop.f32.mrb[0].mxu0
    %304 = vdwg.mxu0
    %vm305 = vcmask 64512
    %v306 = vsel %vm305, %v225, -inf
    %307 = vmax.xlane.f32.xlu0 %v306
    %v308 = vpop.xlane.xlu0 %307
    %v309 = vsel %vm305, %v302, -inf
    %310 = vmax.xlane.f32.xlu0 %v309
    %v311 = vpop.xlane.xlu0 %310
    %v312 = vsub.f32 %v225, %v308
    %v313 = vsub.f32 %v302, %v311
    %v314 = vmul.f32 %v312, 1.442695
    %v315 = vpow.pop %v314
    %v316 = vmul.f32 %v313, 1.442695
    %v317 = vpow.pop %v316
    %v318 = vsel %vm305, %v315, 0.0
    %319 = vadd.xlane.f32.xlu0 %v318
    %v320 = vpop.xlane.xlu0 %319
    %v321 = vsel %vm305, %v317, 0.0
    %322 = vadd.xlane.f32.xlu0 %v321
    %v323 = vpop.xlane.xlu0 %322
    %v324 = vrcp.pop %v320
    %v325 = vmul.f32 %v315, %v324
    %v326 = vrcp.pop %v323
    %v327 = vmul.f32 %v317, %v326
    %v328 = vadd.f32 %v325, 0.0
    %v329 = vadd.f32 %v327, 0.0
    %330 = vrot.lane.b32.xlu0 %v142, 64
    %v331 = vpop.permute.xlu0 %330
    %v334 = vsel %vm305, %v325, 0
    %336 = vmatprep.subr.mxu0 0.0
    %337 = vmatpush1.msra.mxu0 %v331
    %338 = vmatprep.subr.mxu0 0.0
    %339 = vmatpush1.msra.mxu0 0.0
    %340 = vmatprep.subr.mxu0 0.0
    %341 = vmatpush1.msra.mxu0 0.0
    %342 = vmatprep.subr.mxu0 0.0
    %343 = vmatpush1.msra.mxu0 0.0
    %344 = vmatprep.subr.mxu0 0.0
    %345 = vmatpush1.msra.mxu0 0.0
    %346 = vmatprep.subr.mxu0 0.0
    %347 = vmatpush1.msra.mxu0 0.0
    %348 = vmatprep.subr.mxu0 0.0
    %349 = vmatpush1.msra.mxu0 0.0
    %350 = vmatprep.subr.mxu0 0.0
    %351 = vmatpush1.msra.mxu0 0.0
    %352 = vmatprep.subr.mxu0 0.0
    %353 = vmatpush1.msra.mxu0 0.0
    %354 = vmatprep.subr.mxu0 0.0
    %355 = vmatpush1.msra.mxu0 0.0
    %356 = vmatprep.subr.mxu0 0.0
    %357 = vmatpush1.msra.mxu0 0.0
    %358 = vmatprep.subr.mxu0 0.0
    %359 = vmatpush1.msra.mxu0 0.0
    %360 = vmatprep.subr.mxu0 0.0
    %361 = vmatpush1.msra.mxu0 0.0
    %362 = vmatprep.subr.mxu0 0.0
    %363 = vmatpush1.msra.mxu0 0.0
    %364 = vmatprep.subr.mxu0 0.0
    %365 = vmatpush1.msra.mxu0 0.0
    %366 = vmatprep.subr.mxu0 0.0
    %367 = vmatpush1.msra.mxu0 0.0
    %368 = vmatprep.subr.mxu0 0.0
    %369 = vmatpush1.msra.mxu0 0.0
    %370 = vmatprep.subr.mxu0 0.0
    %371 = vmatpush1.msra.mxu0 0.0
    %372 = vmatprep.subr.mxu0 0.0
    %373 = vmatpush1.msra.mxu0 0.0
    %374 = vmatprep.subr.mxu0 0.0
    %375 = vmatpush1.msra.mxu0 0.0
    %376 = vmatprep.subr.mxu0 0.0
    %377 = vmatpush1.msra.mxu0 0.0
    %378 = vmatprep.subr.mxu0 0.0
    %379 = vmatpush1.msra.mxu0 0.0
    %380 = vmatprep.subr.mxu0 0.0
    %381 = vmatpush1.msra.mxu0 0.0
    %382 = vmatprep.subr.mxu0 0.0
    %383 = vmatpush1.msra.mxu0 0.0
    %384 = vmatprep.subr.mxu0 0.0
    %385 = vmatpush1.msra.mxu0 0.0
    %386 = vmatprep.subr.mxu0 0.0
    %387 = vmatpush1.msra.mxu0 0.0
    %388 = vmatprep.subr.mxu0 0.0
    %389 = vmatpush1.msra.mxu0 0.0
    %390 = vmatprep.subr.mxu0 0.0
    %391 = vmatpush1.msra.mxu0 0.0
    %392 = vmatprep.subr.mxu0 0.0
    %393 = vmatpush1.msra.mxu0 0.0
    %394 = vmatprep.subr.mxu0 0.0
    %395 = vmatpush1.msra.mxu0 0.0
    %396 = vmatprep.subr.mxu0 0.0
    %397 = vmatpush1.msra.mxu0 0.0
    %398 = vmatprep.subr.mxu0 0.0
    %399 = vmatpush1.msra.mxu0 0.0
    %400 = vmatprep.mubr.f32.mxu0 0.0
    %401 = vmatmul.mubr.f32.gmra.mrb[0].mxu0 %v334
    %v402 = vpop.f32.mrb[0].mxu0
    %v403 = vadd.f32 0.0, %v402
    %v404 = vpop.f32.mrb[0].mxu0
    %405 = vdwg.mxu0
    %406 = vrot.lane.b32.xlu0 %v147, 64
    %v407 = vpop.permute.xlu0 %406
    %v410 = vsel %vm305, %v327, 0
    %412 = vmatprep.subr.mxu0 0.0
    %413 = vmatpush1.msra.mxu0 %v407
    %414 = vmatprep.subr.mxu0 0.0
    %415 = vmatpush1.msra.mxu0 0.0
    %416 = vmatprep.subr.mxu0 0.0
    %417 = vmatpush1.msra.mxu0 0.0
    %418 = vmatprep.subr.mxu0 0.0
    %419 = vmatpush1.msra.mxu0 0.0
    %420 = vmatprep.subr.mxu0 0.0
    %421 = vmatpush1.msra.mxu0 0.0
    %422 = vmatprep.subr.mxu0 0.0
    %423 = vmatpush1.msra.mxu0 0.0
    %424 = vmatprep.subr.mxu0 0.0
    %425 = vmatpush1.msra.mxu0 0.0
    %426 = vmatprep.subr.mxu0 0.0
    %427 = vmatpush1.msra.mxu0 0.0
    %428 = vmatprep.subr.mxu0 0.0
    %429 = vmatpush1.msra.mxu0 0.0
    %430 = vmatprep.subr.mxu0 0.0
    %431 = vmatpush1.msra.mxu0 0.0
    %432 = vmatprep.subr.mxu0 0.0
    %433 = vmatpush1.msra.mxu0 0.0
    %434 = vmatprep.subr.mxu0 0.0
    %435 = vmatpush1.msra.mxu0 0.0
    %436 = vmatprep.subr.mxu0 0.0
    %437 = vmatpush1.msra.mxu0 0.0
    %438 = vmatprep.subr.mxu0 0.0
    %439 = vmatpush1.msra.mxu0 0.0
    %440 = vmatprep.subr.mxu0 0.0
    %441 = vmatpush1.msra.mxu0 0.0
    %442 = vmatprep.subr.mxu0 0.0
    %443 = vmatpush1.msra.mxu0 0.0
    %444 = vmatprep.subr.mxu0 0.0
    %445 = vmatpush1.msra.mxu0 0.0
    %446 = vmatprep.subr.mxu0 0.0
    %447 = vmatpush1.msra.mxu0 0.0
    %448 = vmatprep.subr.mxu0 0.0
    %449 = vmatpush1.msra.mxu0 0.0
    %450 = vmatprep.subr.mxu0 0.0
    %451 = vmatpush1.msra.mxu0 0.0
    %452 = vmatprep.subr.mxu0 0.0
    %453 = vmatpush1.msra.mxu0 0.0
    %454 = vmatprep.subr.mxu0 0.0
    %455 = vmatpush1.msra.mxu0 0.0
    %456 = vmatprep.subr.mxu0 0.0
    %457 = vmatpush1.msra.mxu0 0.0
    %458 = vmatprep.subr.mxu0 0.0
    %459 = vmatpush1.msra.mxu0 0.0
    %460 = vmatprep.subr.mxu0 0.0
    %461 = vmatpush1.msra.mxu0 0.0
    %462 = vmatprep.subr.mxu0 0.0
    %463 = vmatpush1.msra.mxu0 0.0
    %464 = vmatprep.subr.mxu0 0.0
    %465 = vmatpush1.msra.mxu0 0.0
    %466 = vmatprep.subr.mxu0 0.0
    %467 = vmatpush1.msra.mxu0 0.0
    %468 = vmatprep.subr.mxu0 0.0
    %469 = vmatpush1.msra.mxu0 0.0
    %470 = vmatprep.subr.mxu0 0.0
    %471 = vmatpush1.msra.mxu0 0.0
    %472 = vmatprep.subr.mxu0 0.0
    %473 = vmatpush1.msra.mxu0 0.0
    %474 = vmatprep.subr.mxu0 0.0
    %475 = vmatpush1.msra.mxu0 0.0
    %476 = vmatprep.mubr.f32.mxu0 0.0
    %477 = vmatmul.mubr.f32.gmra.mrb[0].mxu0 %v410
    %v478 = vpop.f32.mrb[0].mxu0
    %v479 = vadd.f32 0.0, %v478
    %v480 = vpop.f32.mrb[0].mxu0
    %481 = vdwg.mxu0
    %482 = vst.msk [vmem:[#allocation2] sm:$0xff] %vm153, %v403
    %483 = vst.msk [vmem:[#allocation2 + $0x8] sm:$0xff] %vm153, %v479
    %484 = vrot.lane.b32.xlu0 %v142, 124
    %v485 = vpop.permute.xlu0 %484
    %486 = vrot.lane.b32.xlu0 %v142, 92
    %v487 = vpop.permute.xlu0 %486
    %v488 = vsel %vm153, %v485, 0
    %v490 = vsel %vm153, %v487, 0
    %492 = vmatprep.subr.mxu0 0.0
    %493 = vmatpush1.xpose.msra.mxu0 %v490
    %494 = vmatprep.subr.mxu0 0.0
    %495 = vmatpush1.xpose.msra.mxu0 0.0
    %496 = vmatprep.subr.mxu0 0.0
    %497 = vmatpush1.xpose.msra.mxu0 0.0
    %498 = vmatprep.subr.mxu0 0.0
    %499 = vmatpush1.xpose.msra.mxu0 0.0
    %500 = vmatprep.subr.mxu0 0.0
    %501 = vmatpush1.xpose.msra.mxu0 0.0
    %502 = vmatprep.subr.mxu0 0.0
    %503 = vmatpush1.xpose.msra.mxu0 0.0
    %504 = vmatprep.subr.mxu0 0.0
    %505 = vmatpush1.xpose.msra.mxu0 0.0
    %506 = vmatprep.subr.mxu0 0.0
    %507 = vmatpush1.xpose.msra.mxu0 0.0
    %508 = vmatprep.subr.mxu0 0.0
    %509 = vmatpush1.xpose.msra.mxu0 0.0
    %510 = vmatprep.subr.mxu0 0.0
    %511 = vmatpush1.xpose.msra.mxu0 0.0
    %512 = vmatprep.subr.mxu0 0.0
    %513 = vmatpush1.xpose.msra.mxu0 0.0
    %514 = vmatprep.subr.mxu0 0.0
    %515 = vmatpush1.xpose.msra.mxu0 0.0
    %516 = vmatprep.subr.mxu0 0.0
    %517 = vmatpush1.xpose.msra.mxu0 0.0
    %518 = vmatprep.subr.mxu0 0.0
    %519 = vmatpush1.xpose.msra.mxu0 0.0
    %520 = vmatprep.subr.mxu0 0.0
    %521 = vmatpush1.xpose.msra.mxu0 0.0
    %522 = vmatprep.subr.mxu0 0.0
    %523 = vmatpush1.xpose.msra.mxu0 0.0
    %524 = vmatprep.subr.mxu0 0.0
    %525 = vmatpush1.xpose.msra.mxu0 0.0
    %526 = vmatprep.subr.mxu0 0.0
    %527 = vmatpush1.xpose.msra.mxu0 0.0
    %528 = vmatprep.subr.mxu0 0.0
    %529 = vmatpush1.xpose.msra.mxu0 0.0
    %530 = vmatprep.subr.mxu0 0.0
    %531 = vmatpush1.xpose.msra.mxu0 0.0
    %532 = vmatprep.subr.mxu0 0.0
    %533 = vmatpush1.xpose.msra.mxu0 0.0
    %534 = vmatprep.subr.mxu0 0.0
    %535 = vmatpush1.xpose.msra.mxu0 0.0
    %536 = vmatprep.subr.mxu0 0.0
    %537 = vmatpush1.xpose.msra.mxu0 0.0
    %538 = vmatprep.subr.mxu0 0.0
    %539 = vmatpush1.xpose.msra.mxu0 0.0
    %540 = vmatprep.subr.mxu0 0.0
    %541 = vmatpush1.xpose.msra.mxu0 0.0
    %542 = vmatprep.subr.mxu0 0.0
    %543 = vmatpush1.xpose.msra.mxu0 0.0
    %544 = vmatprep.subr.mxu0 0.0
    %545 = vmatpush1.xpose.msra.mxu0 0.0
    %546 = vmatprep.subr.mxu0 0.0
    %547 = vmatpush1.xpose.msra.mxu0 0.0
    %548 = vmatprep.subr.mxu0 0.0
    %549 = vmatpush1.xpose.msra.mxu0 0.0
    %550 = vmatprep.subr.mxu0 0.0
    %551 = vmatpush1.xpose.msra.mxu0 0.0
    %552 = vmatprep.subr.mxu0 0.0
    %553 = vmatpush1.xpose.msra.mxu0 0.0
    %554 = vmatprep.subr.mxu0 0.0
    %555 = vmatpush1.xpose.msra.mxu0 0.0
    %556 = vmatprep.mubr.f32.mxu0 0.0
    %557 = vmatmul.mubr.f32.gmra.mrb[0].mxu0 %v488
    %v558 = vpop.f32.mrb[0].mxu0
    %v559 = vadd.f32 0.0, %v558
    %v560 = vpop.f32.mrb[0].mxu0
    %561 = vdwg.mxu0
    %562 = vrot.lane.b32.xlu0 %v147, 124
    %v563 = vpop.permute.xlu0 %562
    %564 = vrot.lane.b32.xlu0 %v147, 92
    %v565 = vpop.permute.xlu0 %564
    %v566 = vsel %vm153, %v563, 0
    %v568 = vsel %vm153, %v565, 0
    %570 = vmatprep.subr.mxu0 0.0
    %571 = vmatpush1.xpose.msra.mxu0 %v568
    %572 = vmatprep.subr.mxu0 0.0
    %573 = vmatpush1.xpose.msra.mxu0 0.0
    %574 = vmatprep.subr.mxu0 0.0
    %575 = vmatpush1.xpose.msra.mxu0 0.0
    %576 = vmatprep.subr.mxu0 0.0
    %577 = vmatpush1.xpose.msra.mxu0 0.0
    %578 = vmatprep.subr.mxu0 0.0
    %579 = vmatpush1.xpose.msra.mxu0 0.0
    %580 = vmatprep.subr.mxu0 0.0
    %581 = vmatpush1.xpose.msra.mxu0 0.0
    %582 = vmatprep.subr.mxu0 0.0
    %583 = vmatpush1.xpose.msra.mxu0 0.0
    %584 = vmatprep.subr.mxu0 0.0
    %585 = vmatpush1.xpose.msra.mxu0 0.0
    %586 = vmatprep.subr.mxu0 0.0
    %587 = vmatpush1.xpose.msra.mxu0 0.0
    %588 = vmatprep.subr.mxu0 0.0
    %589 = vmatpush1.xpose.msra.mxu0 0.0
    %590 = vmatprep.subr.mxu0 0.0
    %591 = vmatpush1.xpose.msra.mxu0 0.0
    %592 = vmatprep.subr.mxu0 0.0
    %593 = vmatpush1.xpose.msra.mxu0 0.0
    %594 = vmatprep.subr.mxu0 0.0
    %595 = vmatpush1.xpose.msra.mxu0 0.0
    %596 = vmatprep.subr.mxu0 0.0
    %597 = vmatpush1.xpose.msra.mxu0 0.0
    %598 = vmatprep.subr.mxu0 0.0
    %599 = vmatpush1.xpose.msra.mxu0 0.0
    %600 = vmatprep.subr.mxu0 0.0
    %601 = vmatpush1.xpose.msra.mxu0 0.0
    %602 = vmatprep.subr.mxu0 0.0
    %603 = vmatpush1.xpose.msra.mxu0 0.0
    %604 = vmatprep.subr.mxu0 0.0
    %605 = vmatpush1.xpose.msra.mxu0 0.0
    %606 = vmatprep.subr.mxu0 0.0
    %607 = vmatpush1.xpose.msra.mxu0 0.0
    %608 = vmatprep.subr.mxu0 0.0
    %609 = vmatpush1.xpose.msra.mxu0 0.0
    %610 = vmatprep.subr.mxu0 0.0
    %611 = vmatpush1.xpose.msra.mxu0 0.0
    %612 = vmatprep.subr.mxu0 0.0
    %613 = vmatpush1.xpose.msra.mxu0 0.0
    %614 = vmatprep.subr.mxu0 0.0
    %615 = vmatpush1.xpose.msra.mxu0 0.0
    %616 = vmatprep.subr.mxu0 0.0
    %617 = vmatpush1.xpose.msra.mxu0 0.0
    %618 = vmatprep.subr.mxu0 0.0
    %619 = vmatpush1.xpose.msra.mxu0 0.0
    %620 = vmatprep.subr.mxu0 0.0
    %621 = vmatpush1.xpose.msra.mxu0 0.0
    %622 = vmatprep.subr.mxu0 0.0
    %623 = vmatpush1.xpose.msra.mxu0 0.0
    %624 = vmatprep.subr.mxu0 0.0
    %625 = vmatpush1.xpose.msra.mxu0 0.0
    %626 = vmatprep.subr.mxu0 0.0
    %627 = vmatpush1.xpose.msra.mxu0 0.0
    %628 = vmatprep.subr.mxu0 0.0
    %629 = vmatpush1.xpose.msra.mxu0 0.0
    %630 = vmatprep.subr.mxu0 0.0
    %631 = vmatpush1.xpose.msra.mxu0 0.0
    %632 = vmatprep.subr.mxu0 0.0
    %633 = vmatpush1.xpose.msra.mxu0 0.0
    %634 = vmatprep.mubr.f32.mxu0 0.0
    %635 = vmatmul.mubr.f32.gmra.mrb[0].mxu0 %v566
    %v636 = vpop.f32.mrb[0].mxu0
    %v637 = vadd.f32 0.0, %v636
    %v638 = vpop.f32.mrb[0].mxu0
    %639 = vdwg.mxu0
    %v640 = vsel %vm305, %v559, -inf
    %641 = vmax.xlane.f32.xlu0 %v640
    %v642 = vpop.xlane.xlu0 %641
    %v643 = vsel %vm305, %v637, -inf
    %644 = vmax.xlane.f32.xlu0 %v643
    %v645 = vpop.xlane.xlu0 %644
    %v646 = vsub.f32 %v559, %v642
    %v647 = vsub.f32 %v637, %v645
    %v648 = vmul.f32 %v646, 1.442695
    %v649 = vpow.pop %v648
    %v650 = vmul.f32 %v647, 1.442695
    %v651 = vpow.pop %v650
    %v652 = vsel %vm305, %v649, 0.0
    %653 = vadd.xlane.f32.xlu0 %v652
    %v654 = vpop.xlane.xlu0 %653
    %v655 = vsel %vm305, %v651, 0.0
    %656 = vadd.xlane.f32.xlu0 %v655
    %v657 = vpop.xlane.xlu0 %656
    %v658 = vrcp.pop %v654
    %v659 = vmul.f32 %v649, %v658
    %v660 = vrcp.pop %v657
    %v661 = vmul.f32 %v651, %v660
    %v662 = vadd.f32 %v328, %v659
    %v663 = vadd.f32 %v329, %v661
    %664 = vrot.lane.b32.xlu0 %v142, 60
    %v665 = vpop.permute.xlu0 %664
    %v668 = vsel %vm305, %v659, 0
    %670 = vmatprep.subr.mxu0 0.0
    %671 = vmatpush1.msra.mxu0 %v665
    %672 = vmatprep.subr.mxu0 0.0
    %673 = vmatpush1.msra.mxu0 0.0
    %674 = vmatprep.subr.mxu0 0.0
    %675 = vmatpush1.msra.mxu0 0.0
    %676 = vmatprep.subr.mxu0 0.0
    %677 = vmatpush1.msra.mxu0 0.0
    %678 = vmatprep.subr.mxu0 0.0
    %679 = vmatpush1.msra.mxu0 0.0
    %680 = vmatprep.subr.mxu0 0.0
    %681 = vmatpush1.msra.mxu0 0.0
    %682 = vmatprep.subr.mxu0 0.0
    %683 = vmatpush1.msra.mxu0 0.0
    %684 = vmatprep.subr.mxu0 0.0
    %685 = vmatpush1.msra.mxu0 0.0
    %686 = vmatprep.subr.mxu0 0.0
    %687 = vmatpush1.msra.mxu0 0.0
    %688 = vmatprep.subr.mxu0 0.0
    %689 = vmatpush1.msra.mxu0 0.0
    %690 = vmatprep.subr.mxu0 0.0
    %691 = vmatpush1.msra.mxu0 0.0
    %692 = vmatprep.subr.mxu0 0.0
    %693 = vmatpush1.msra.mxu0 0.0
    %694 = vmatprep.subr.mxu0 0.0
    %695 = vmatpush1.msra.mxu0 0.0
    %696 = vmatprep.subr.mxu0 0.0
    %697 = vmatpush1.msra.mxu0 0.0
    %698 = vmatprep.subr.mxu0 0.0
    %699 = vmatpush1.msra.mxu0 0.0
    %700 = vmatprep.subr.mxu0 0.0
    %701 = vmatpush1.msra.mxu0 0.0
    %702 = vmatprep.subr.mxu0 0.0
    %703 = vmatpush1.msra.mxu0 0.0
    %704 = vmatprep.subr.mxu0 0.0
    %705 = vmatpush1.msra.mxu0 0.0
    %706 = vmatprep.subr.mxu0 0.0
    %707 = vmatpush1.msra.mxu0 0.0
    %708 = vmatprep.subr.mxu0 0.0
    %709 = vmatpush1.msra.mxu0 0.0
    %710 = vmatprep.subr.mxu0 0.0
    %711 = vmatpush1.msra.mxu0 0.0
    %712 = vmatprep.subr.mxu0 0.0
    %713 = vmatpush1.msra.mxu0 0.0
    %714 = vmatprep.subr.mxu0 0.0
    %715 = vmatpush1.msra.mxu0 0.0
    %716 = vmatprep.subr.mxu0 0.0
    %717 = vmatpush1.msra.mxu0 0.0
    %718 = vmatprep.subr.mxu0 0.0
    %719 = vmatpush1.msra.mxu0 0.0
    %720 = vmatprep.subr.mxu0 0.0
    %721 = vmatpush1.msra.mxu0 0.0
    %722 = vmatprep.subr.mxu0 0.0
    %723 = vmatpush1.msra.mxu0 0.0
    %724 = vmatprep.subr.mxu0 0.0
    %725 = vmatpush1.msra.mxu0 0.0
    %726 = vmatprep.subr.mxu0 0.0
    %727 = vmatpush1.msra.mxu0 0.0
    %728 = vmatprep.subr.mxu0 0.0
    %729 = vmatpush1.msra.mxu0 0.0
    %730 = vmatprep.subr.mxu0 0.0
    %731 = vmatpush1.msra.mxu0 0.0
    %732 = vmatprep.subr.mxu0 0.0
    %733 = vmatpush1.msra.mxu0 0.0
    %734 = vmatprep.mubr.f32.mxu0 0.0
    %735 = vmatmul.mubr.f32.gmra.mrb[0].mxu0 %v668
    %v736 = vpop.f32.mrb[0].mxu0
    %v737 = vadd.f32 0.0, %v736
    %v738 = vpop.f32.mrb[0].mxu0
    %739 = vdwg.mxu0
    %740 = vrot.lane.b32.xlu0 %v147, 60
    %v741 = vpop.permute.xlu0 %740
    %v744 = vsel %vm305, %v661, 0
    %746 = vmatprep.subr.mxu0 0.0
    %747 = vmatpush1.msra.mxu0 %v741
    %748 = vmatprep.subr.mxu0 0.0
    %749 = vmatpush1.msra.mxu0 0.0
    %750 = vmatprep.subr.mxu0 0.0
    %751 = vmatpush1.msra.mxu0 0.0
    %752 = vmatprep.subr.mxu0 0.0
    %753 = vmatpush1.msra.mxu0 0.0
    %754 = vmatprep.subr.mxu0 0.0
    %755 = vmatpush1.msra.mxu0 0.0
    %756 = vmatprep.subr.mxu0 0.0
    %757 = vmatpush1.msra.mxu0 0.0
    %758 = vmatprep.subr.mxu0 0.0
    %759 = vmatpush1.msra.mxu0 0.0
    %760 = vmatprep.subr.mxu0 0.0
    %761 = vmatpush1.msra.mxu0 0.0
    %762 = vmatprep.subr.mxu0 0.0
    %763 = vmatpush1.msra.mxu0 0.0
    %764 = vmatprep.subr.mxu0 0.0
    %765 = vmatpush1.msra.mxu0 0.0
    %766 = vmatprep.subr.mxu0 0.0
    %767 = vmatpush1.msra.mxu0 0.0
    %768 = vmatprep.subr.mxu0 0.0
    %769 = vmatpush1.msra.mxu0 0.0
    %770 = vmatprep.subr.mxu0 0.0
    %771 = vmatpush1.msra.mxu0 0.0
    %772 = vmatprep.subr.mxu0 0.0
    %773 = vmatpush1.msra.mxu0 0.0
    %774 = vmatprep.subr.mxu0 0.0
    %775 = vmatpush1.msra.mxu0 0.0
    %776 = vmatprep.subr.mxu0 0.0
    %777 = vmatpush1.msra.mxu0 0.0
    %778 = vmatprep.subr.mxu0 0.0
    %779 = vmatpush1.msra.mxu0 0.0
    %780 = vmatprep.subr.mxu0 0.0
    %781 = vmatpush1.msra.mxu0 0.0
    %782 = vmatprep.subr.mxu0 0.0
    %783 = vmatpush1.msra.mxu0 0.0
    %784 = vmatprep.subr.mxu0 0.0
    %785 = vmatpush1.msra.mxu0 0.0
    %786 = vmatprep.subr.mxu0 0.0
    %787 = vmatpush1.msra.mxu0 0.0
    %788 = vmatprep.subr.mxu0 0.0
    %789 = vmatpush1.msra.mxu0 0.0
    %790 = vmatprep.subr.mxu0 0.0
    %791 = vmatpush1.msra.mxu0 0.0
    %792 = vmatprep.subr.mxu0 0.0
    %793 = vmatpush1.msra.mxu0 0.0
    %794 = vmatprep.subr.mxu0 0.0
    %795 = vmatpush1.msra.mxu0 0.0
    %796 = vmatprep.subr.mxu0 0.0
    %797 = vmatpush1.msra.mxu0 0.0
    %798 = vmatprep.subr.mxu0 0.0
    %799 = vmatpush1.msra.mxu0 0.0
    %800 = vmatprep.subr.mxu0 0.0
    %801 = vmatpush1.msra.mxu0 0.0
    %802 = vmatprep.subr.mxu0 0.0
    %803 = vmatpush1.msra.mxu0 0.0
    %804 = vmatprep.subr.mxu0 0.0
    %805 = vmatpush1.msra.mxu0 0.0
    %806 = vmatprep.subr.mxu0 0.0
    %807 = vmatpush1.msra.mxu0 0.0
    %808 = vmatprep.subr.mxu0 0.0
    %809 = vmatpush1.msra.mxu0 0.0
    %810 = vmatprep.mubr.f32.mxu0 0.0
    %811 = vmatmul.mubr.f32.gmra.mrb[0].mxu0 %v744
    %v812 = vpop.f32.mrb[0].mxu0
    %v813 = vadd.f32 0.0, %v812
    %v814 = vpop.f32.mrb[0].mxu0
    %815 = vdwg.mxu0
    %818 = vrot.lane.b32.xlu0 %v737, 4
    %v819 = vpop.permute.xlu0 %818
    %820 = vrot.lane.b32.xlu0 %v813, 4
    %v821 = vpop.permute.xlu0 %820
    %vm824 = vcmask 64544
    %825 = vst.msk [vmem:[#allocation2] sm:$0xff] %vm824, %v819
    %826 = vst.msk [vmem:[#allocation2 + $0x8] sm:$0xff] %vm824, %v821
    %827 = vrot.lane.b32.xlu0 %v142, 120
    %v828 = vpop.permute.xlu0 %827
    %829 = vrot.lane.b32.xlu0 %v142, 88
    %v830 = vpop.permute.xlu0 %829
    %v831 = vsel %vm153, %v828, 0
    %v833 = vsel %vm153, %v830, 0
    %835 = vmatprep.subr.mxu0 0.0
    %836 = vmatpush1.xpose.msra.mxu0 %v833
    %837 = vmatprep.subr.mxu0 0.0
    %838 = vmatpush1.xpose.msra.mxu0 0.0
    %839 = vmatprep.subr.mxu0 0.0
    %840 = vmatpush1.xpose.msra.mxu0 0.0
    %841 = vmatprep.subr.mxu0 0.0
    %842 = vmatpush1.xpose.msra.mxu0 0.0
    %843 = vmatprep.subr.mxu0 0.0
    %844 = vmatpush1.xpose.msra.mxu0 0.0
    %845 = vmatprep.subr.mxu0 0.0
    %846 = vmatpush1.xpose.msra.mxu0 0.0
    %847 = vmatprep.subr.mxu0 0.0
    %848 = vmatpush1.xpose.msra.mxu0 0.0
    %849 = vmatprep.subr.mxu0 0.0
    %850 = vmatpush1.xpose.msra.mxu0 0.0
    %851 = vmatprep.subr.mxu0 0.0
    %852 = vmatpush1.xpose.msra.mxu0 0.0
    %853 = vmatprep.subr.mxu0 0.0
    %854 = vmatpush1.xpose.msra.mxu0 0.0
    %855 = vmatprep.subr.mxu0 0.0
    %856 = vmatpush1.xpose.msra.mxu0 0.0
    %857 = vmatprep.subr.mxu0 0.0
    %858 = vmatpush1.xpose.msra.mxu0 0.0
    %859 = vmatprep.subr.mxu0 0.0
    %860 = vmatpush1.xpose.msra.mxu0 0.0
    %861 = vmatprep.subr.mxu0 0.0
    %862 = vmatpush1.xpose.msra.mxu0 0.0
    %863 = vmatprep.subr.mxu0 0.0
    %864 = vmatpush1.xpose.msra.mxu0 0.0
    %865 = vmatprep.subr.mxu0 0.0
    %866 = vmatpush1.xpose.msra.mxu0 0.0
    %867 = vmatprep.subr.mxu0 0.0
    %868 = vmatpush1.xpose.msra.mxu0 0.0
    %869 = vmatprep.subr.mxu0 0.0
    %870 = vmatpush1.xpose.msra.mxu0 0.0
    %871 = vmatprep.subr.mxu0 0.0
    %872 = vmatpush1.xpose.msra.mxu0 0.0
    %873 = vmatprep.subr.mxu0 0.0
    %874 = vmatpush1.xpose.msra.mxu0 0.0
    %875 = vmatprep.subr.mxu0 0.0
    %876 = vmatpush1.xpose.msra.mxu0 0.0
    %877 = vmatprep.subr.mxu0 0.0
    %878 = vmatpush1.xpose.msra.mxu0 0.0
    %879 = vmatprep.subr.mxu0 0.0
    %880 = vmatpush1.xpose.msra.mxu0 0.0
    %881 = vmatprep.subr.mxu0 0.0
    %882 = vmatpush1.xpose.msra.mxu0 0.0
    %883 = vmatprep.subr.mxu0 0.0
    %884 = vmatpush1.xpose.msra.mxu0 0.0
    %885 = vmatprep.subr.mxu0 0.0
    %886 = vmatpush1.xpose.msra.mxu0 0.0
    %887 = vmatprep.subr.mxu0 0.0
    %888 = vmatpush1.xpose.msra.mxu0 0.0
    %889 = vmatprep.subr.mxu0 0.0
    %890 = vmatpush1.xpose.msra.mxu0 0.0
    %891 = vmatprep.subr.mxu0 0.0
    %892 = vmatpush1.xpose.msra.mxu0 0.0
    %893 = vmatprep.subr.mxu0 0.0
    %894 = vmatpush1.xpose.msra.mxu0 0.0
    %895 = vmatprep.subr.mxu0 0.0
    %896 = vmatpush1.xpose.msra.mxu0 0.0
    %897 = vmatprep.subr.mxu0 0.0
    %898 = vmatpush1.xpose.msra.mxu0 0.0
    %899 = vmatprep.mubr.f32.mxu0 0.0
    %900 = vmatmul.mubr.f32.gmra.mrb[0].mxu0 %v831
    %v901 = vpop.f32.mrb[0].mxu0
    %v902 = vadd.f32 0.0, %v901
    %v903 = vpop.f32.mrb[0].mxu0
    %904 = vdwg.mxu0
    %905 = vrot.lane.b32.xlu0 %v147, 120
    %v906 = vpop.permute.xlu0 %905
    %907 = vrot.lane.b32.xlu0 %v147, 88
    %v908 = vpop.permute.xlu0 %907
    %v909 = vsel %vm153, %v906, 0
    %v911 = vsel %vm153, %v908, 0
    %913 = vmatprep.subr.mxu0 0.0
    %914 = vmatpush1.xpose.msra.mxu0 %v911
    %915 = vmatprep.subr.mxu0 0.0
    %916 = vmatpush1.xpose.msra.mxu0 0.0
    %917 = vmatprep.subr.mxu0 0.0
    %918 = vmatpush1.xpose.msra.mxu0 0.0
    %919 = vmatprep.subr.mxu0 0.0
    %920 = vmatpush1.xpose.msra.mxu0 0.0
    %921 = vmatprep.subr.mxu0 0.0
    %922 = vmatpush1.xpose.msra.mxu0 0.0
    %923 = vmatprep.subr.mxu0 0.0
    %924 = vmatpush1.xpose.msra.mxu0 0.0
    %925 = vmatprep.subr.mxu0 0.0
    %926 = vmatpush1.xpose.msra.mxu0 0.0
    %927 = vmatprep.subr.mxu0 0.0
    %928 = vmatpush1.xpose.msra.mxu0 0.0
    %929 = vmatprep.subr.mxu0 0.0
    %930 = vmatpush1.xpose.msra.mxu0 0.0
    %931 = vmatprep.subr.mxu0 0.0
    %932 = vmatpush1.xpose.msra.mxu0 0.0
    %933 = vmatprep.subr.mxu0 0.0
    %934 = vmatpush1.xpose.msra.mxu0 0.0
    %935 = vmatprep.subr.mxu0 0.0
    %936 = vmatpush1.xpose.msra.mxu0 0.0
    %937 = vmatprep.subr.mxu0 0.0
    %938 = vmatpush1.xpose.msra.mxu0 0.0
    %939 = vmatprep.subr.mxu0 0.0
    %940 = vmatpush1.xpose.msra.mxu0 0.0
    %941 = vmatprep.subr.mxu0 0.0
    %942 = vmatpush1.xpose.msra.mxu0 0.0
    %943 = vmatprep.subr.mxu0 0.0
    %944 = vmatpush1.xpose.msra.mxu0 0.0
    %945 = vmatprep.subr.mxu0 0.0
    %946 = vmatpush1.xpose.msra.mxu0 0.0
    %947 = vmatprep.subr.mxu0 0.0
    %948 = vmatpush1.xpose.msra.mxu0 0.0
    %949 = vmatprep.subr.mxu0 0.0
    %950 = vmatpush1.xpose.msra.mxu0 0.0
    %951 = vmatprep.subr.mxu0 0.0
    %952 = vmatpush1.xpose.msra.mxu0 0.0
    %953 = vmatprep.subr.mxu0 0.0
    %954 = vmatpush1.xpose.msra.mxu0 0.0
    %955 = vmatprep.subr.mxu0 0.0
    %956 = vmatpush1.xpose.msra.mxu0 0.0
    %957 = vmatprep.subr.mxu0 0.0
    %958 = vmatpush1.xpose.msra.mxu0 0.0
    %959 = vmatprep.subr.mxu0 0.0
    %960 = vmatpush1.xpose.msra.mxu0 0.0
    %961 = vmatprep.subr.mxu0 0.0
    %962 = vmatpush1.xpose.msra.mxu0 0.0
    %963 = vmatprep.subr.mxu0 0.0
    %964 = vmatpush1.xpose.msra.mxu0 0.0
    %965 = vmatprep.subr.mxu0 0.0
    %966 = vmatpush1.xpose.msra.mxu0 0.0
    %967 = vmatprep.subr.mxu0 0.0
    %968 = vmatpush1.xpose.msra.mxu0 0.0
    %969 = vmatprep.subr.mxu0 0.0
    %970 = vmatpush1.xpose.msra.mxu0 0.0
    %971 = vmatprep.subr.mxu0 0.0
    %972 = vmatpush1.xpose.msra.mxu0 0.0
    %973 = vmatprep.subr.mxu0 0.0
    %974 = vmatpush1.xpose.msra.mxu0 0.0
    %975 = vmatprep.subr.mxu0 0.0
    %976 = vmatpush1.xpose.msra.mxu0 0.0
    %977 = vmatprep.mubr.f32.mxu0 0.0
    %978 = vmatmul.mubr.f32.gmra.mrb[0].mxu0 %v909
    %v979 = vpop.f32.mrb[0].mxu0
    %v980 = vadd.f32 0.0, %v979
    %v981 = vpop.f32.mrb[0].mxu0
    %982 = vdwg.mxu0
    %v983 = vsel %vm305, %v902, -inf
    %984 = vmax.xlane.f32.xlu0 %v983
    %v985 = vpop.xlane.xlu0 %984
    %v986 = vsel %vm305, %v980, -inf
    %987 = vmax.xlane.f32.xlu0 %v986
    %v988 = vpop.xlane.xlu0 %987
    %v989 = vsub.f32 %v902, %v985
    %v990 = vsub.f32 %v980, %v988
    %v991 = vmul.f32 %v989, 1.442695
    %v992 = vpow.pop %v991
    %v993 = vmul.f32 %v990, 1.442695
    %v994 = vpow.pop %v993
    %v995 = vsel %vm305, %v992, 0.0
    %996 = vadd.xlane.f32.xlu0 %v995
    %v997 = vpop.xlane.xlu0 %996
    %v998 = vsel %vm305, %v994, 0.0
    %999 = vadd.xlane.f32.xlu0 %v998
    %v1000 = vpop.xlane.xlu0 %999
    %v1001 = vrcp.pop %v997
    %v1002 = vmul.f32 %v992, %v1001
    %v1003 = vrcp.pop %v1000
    %v1004 = vmul.f32 %v994, %v1003
    %v1005 = vadd.f32 %v662, %v1002
    %v1006 = vadd.f32 %v663, %v1004
    %1007 = vrot.lane.b32.xlu0 %v142, 56
    %v1008 = vpop.permute.xlu0 %1007
    %v1011 = vsel %vm305, %v1002, 0
    %1013 = vmatprep.subr.mxu0 0.0
    %1014 = vmatpush1.msra.mxu0 %v1008
    %1015 = vmatprep.subr.mxu0 0.0
    %1016 = vmatpush1.msra.mxu0 0.0
    %1017 = vmatprep.subr.mxu0 0.0
    %1018 = vmatpush1.msra.mxu0 0.0
    %1019 = vmatprep.subr.mxu0 0.0
    %1020 = vmatpush1.msra.mxu0 0.0
    %1021 = vmatprep.subr.mxu0 0.0
    %1022 = vmatpush1.msra.mxu0 0.0
    %1023 = vmatprep.subr.mxu0 0.0
    %1024 = vmatpush1.msra.mxu0 0.0
    %1025 = vmatprep.subr.mxu0 0.0
    %1026 = vmatpush1.msra.mxu0 0.0
    %1027 = vmatprep.subr.mxu0 0.0
    %1028 = vmatpush1.msra.mxu0 0.0
    %1029 = vmatprep.subr.mxu0 0.0
    %1030 = vmatpush1.msra.mxu0 0.0
    %1031 = vmatprep.subr.mxu0 0.0
    %1032 = vmatpush1.msra.mxu0 0.0
    %1033 = vmatprep.subr.mxu0 0.0
    %1034 = vmatpush1.msra.mxu0 0.0
    %1035 = vmatprep.subr.mxu0 0.0
    %1036 = vmatpush1.msra.mxu0 0.0
    %1037 = vmatprep.subr.mxu0 0.0
    %1038 = vmatpush1.msra.mxu0 0.0
    %1039 = vmatprep.subr.mxu0 0.0
    %1040 = vmatpush1.msra.mxu0 0.0
    %1041 = vmatprep.subr.mxu0 0.0
    %1042 = vmatpush1.msra.mxu0 0.0
    %1043 = vmatprep.subr.mxu0 0.0
    %1044 = vmatpush1.msra.mxu0 0.0
    %1045 = vmatprep.subr.mxu0 0.0
    %1046 = vmatpush1.msra.mxu0 0.0
    %1047 = vmatprep.subr.mxu0 0.0
    %1048 = vmatpush1.msra.mxu0 0.0
    %1049 = vmatprep.subr.mxu0 0.0
    %1050 = vmatpush1.msra.mxu0 0.0
    %1051 = vmatprep.subr.mxu0 0.0
    %1052 = vmatpush1.msra.mxu0 0.0
    %1053 = vmatprep.subr.mxu0 0.0
    %1054 = vmatpush1.msra.mxu0 0.0
    %1055 = vmatprep.subr.mxu0 0.0
    %1056 = vmatpush1.msra.mxu0 0.0
    %1057 = vmatprep.subr.mxu0 0.0
    %1058 = vmatpush1.msra.mxu0 0.0
    %1059 = vmatprep.subr.mxu0 0.0
    %1060 = vmatpush1.msra.mxu0 0.0
    %1061 = vmatprep.subr.mxu0 0.0
    %1062 = vmatpush1.msra.mxu0 0.0
    %1063 = vmatprep.subr.mxu0 0.0
    %1064 = vmatpush1.msra.mxu0 0.0
    %1065 = vmatprep.subr.mxu0 0.0
    %1066 = vmatpush1.msra.mxu0 0.0
    %1067 = vmatprep.subr.mxu0 0.0
    %1068 = vmatpush1.msra.mxu0 0.0
    %1069 = vmatprep.subr.mxu0 0.0
    %1070 = vmatpush1.msra.mxu0 0.0
    %1071 = vmatprep.subr.mxu0 0.0
    %1072 = vmatpush1.msra.mxu0 0.0
    %1073 = vmatprep.subr.mxu0 0.0
    %1074 = vmatpush1.msra.mxu0 0.0
    %1075 = vmatprep.subr.mxu0 0.0
    %1076 = vmatpush1.msra.mxu0 0.0
    %1077 = vmatprep.mubr.f32.mxu0 0.0
    %1078 = vmatmul.mubr.f32.gmra.mrb[0].mxu0 %v1011
    %v1079 = vpop.f32.mrb[0].mxu0
    %v1080 = vadd.f32 0.0, %v1079
    %v1081 = vpop.f32.mrb[0].mxu0
    %1082 = vdwg.mxu0
    %1083 = vrot.lane.b32.xlu0 %v147, 56
    %v1084 = vpop.permute.xlu0 %1083
    %v1087 = vsel %vm305, %v1004, 0
    %1089 = vmatprep.subr.mxu0 0.0
    %1090 = vmatpush1.msra.mxu0 %v1084
    %1091 = vmatprep.subr.mxu0 0.0
    %1092 = vmatpush1.msra.mxu0 0.0
    %1093 = vmatprep.subr.mxu0 0.0
    %1094 = vmatpush1.msra.mxu0 0.0
    %1095 = vmatprep.subr.mxu0 0.0
    %1096 = vmatpush1.msra.mxu0 0.0
    %1097 = vmatprep.subr.mxu0 0.0
    %1098 = vmatpush1.msra.mxu0 0.0
    %1099 = vmatprep.subr.mxu0 0.0
    %1100 = vmatpush1.msra.mxu0 0.0
    %1101 = vmatprep.subr.mxu0 0.0
    %1102 = vmatpush1.msra.mxu0 0.0
    %1103 = vmatprep.subr.mxu0 0.0
    %1104 = vmatpush1.msra.mxu0 0.0
    %1105 = vmatprep.subr.mxu0 0.0
    %1106 = vmatpush1.msra.mxu0 0.0
    %1107 = vmatprep.subr.mxu0 0.0
    %1108 = vmatpush1.msra.mxu0 0.0
    %1109 = vmatprep.subr.mxu0 0.0
    %1110 = vmatpush1.msra.mxu0 0.0
    %1111 = vmatprep.subr.mxu0 0.0
    %1112 = vmatpush1.msra.mxu0 0.0
    %1113 = vmatprep.subr.mxu0 0.0
    %1114 = vmatpush1.msra.mxu0 0.0
    %1115 = vmatprep.subr.mxu0 0.0
    %1116 = vmatpush1.msra.mxu0 0.0
    %1117 = vmatprep.subr.mxu0 0.0
    %1118 = vmatpush1.msra.mxu0 0.0
    %1119 = vmatprep.subr.mxu0 0.0
    %1120 = vmatpush1.msra.mxu0 0.0
    %1121 = vmatprep.subr.mxu0 0.0
    %1122 = vmatpush1.msra.mxu0 0.0
    %1123 = vmatprep.subr.mxu0 0.0
    %1124 = vmatpush1.msra.mxu0 0.0
    %1125 = vmatprep.subr.mxu0 0.0
    %1126 = vmatpush1.msra.mxu0 0.0
    %1127 = vmatprep.subr.mxu0 0.0
    %1128 = vmatpush1.msra.mxu0 0.0
    %1129 = vmatprep.subr.mxu0 0.0
    %1130 = vmatpush1.msra.mxu0 0.0
    %1131 = vmatprep.subr.mxu0 0.0
    %1132 = vmatpush1.msra.mxu0 0.0
    %1133 = vmatprep.subr.mxu0 0.0
    %1134 = vmatpush1.msra.mxu0 0.0
    %1135 = vmatprep.subr.mxu0 0.0
    %1136 = vmatpush1.msra.mxu0 0.0
    %1137 = vmatprep.subr.mxu0 0.0
    %1138 = vmatpush1.msra.mxu0 0.0
    %1139 = vmatprep.subr.mxu0 0.0
    %1140 = vmatpush1.msra.mxu0 0.0
    %1141 = vmatprep.subr.mxu0 0.0
    %1142 = vmatpush1.msra.mxu0 0.0
    %1143 = vmatprep.subr.mxu0 0.0
    %1144 = vmatpush1.msra.mxu0 0.0
    %1145 = vmatprep.subr.mxu0 0.0
    %1146 = vmatpush1.msra.mxu0 0.0
    %1147 = vmatprep.subr.mxu0 0.0
    %1148 = vmatpush1.msra.mxu0 0.0
    %1149 = vmatprep.subr.mxu0 0.0
    %1150 = vmatpush1.msra.mxu0 0.0
    %1151 = vmatprep.subr.mxu0 0.0
    %1152 = vmatpush1.msra.mxu0 0.0
    %1153 = vmatprep.mubr.f32.mxu0 0.0
    %1154 = vmatmul.mubr.f32.gmra.mrb[0].mxu0 %v1087
    %v1155 = vpop.f32.mrb[0].mxu0
    %v1156 = vadd.f32 0.0, %v1155
    %v1157 = vpop.f32.mrb[0].mxu0
    %1158 = vdwg.mxu0
    %1161 = vrot.lane.b32.xlu0 %v1080, 8
    %v1162 = vpop.permute.xlu0 %1161
    %1163 = vrot.lane.b32.xlu0 %v1156, 8
    %v1164 = vpop.permute.xlu0 %1163
    %vm1167 = vcmask 97344
    %1168 = vst.msk [vmem:[#allocation2] sm:$0xff] %vm1167, %v1162
    %1169 = vst.msk [vmem:[#allocation2 + $0x8] sm:$0xff] %vm1167, %v1164
    %1170 = vrot.lane.b32.xlu0 %v142, 116
    %v1171 = vpop.permute.xlu0 %1170
    %1172 = vrot.lane.b32.xlu0 %v142, 84
    %v1173 = vpop.permute.xlu0 %1172
    %v1174 = vsel %vm153, %v1171, 0
    %v1176 = vsel %vm153, %v1173, 0
    %1178 = vmatprep.subr.mxu0 0.0
    %1179 = vmatpush1.xpose.msra.mxu0 %v1176
    %1180 = vmatprep.subr.mxu0 0.0
    %1181 = vmatpush1.xpose.msra.mxu0 0.0
    %1182 = vmatprep.subr.mxu0 0.0
    %1183 = vmatpush1.xpose.msra.mxu0 0.0
    %1184 = vmatprep.subr.mxu0 0.0
    %1185 = vmatpush1.xpose.msra.mxu0 0.0
    %1186 = vmatprep.subr.mxu0 0.0
    %1187 = vmatpush1.xpose.msra.mxu0 0.0
    %1188 = vmatprep.subr.mxu0 0.0
    %1189 = vmatpush1.xpose.msra.mxu0 0.0
    %1190 = vmatprep.subr.mxu0 0.0
    %1191 = vmatpush1.xpose.msra.mxu0 0.0
    %1192 = vmatprep.subr.mxu0 0.0
    %1193 = vmatpush1.xpose.msra.mxu0 0.0
    %1194 = vmatprep.subr.mxu0 0.0
    %1195 = vmatpush1.xpose.msra.mxu0 0.0
    %1196 = vmatprep.subr.mxu0 0.0
    %1197 = vmatpush1.xpose.msra.mxu0 0.0
    %1198 = vmatprep.subr.mxu0 0.0
    %1199 = vmatpush1.xpose.msra.mxu0 0.0
    %1200 = vmatprep.subr.mxu0 0.0
    %1201 = vmatpush1.xpose.msra.mxu0 0.0
    %1202 = vmatprep.subr.mxu0 0.0
    %1203 = vmatpush1.xpose.msra.mxu0 0.0
    %1204 = vmatprep.subr.mxu0 0.0
    %1205 = vmatpush1.xpose.msra.mxu0 0.0
    %1206 = vmatprep.subr.mxu0 0.0
    %1207 = vmatpush1.xpose.msra.mxu0 0.0
    %1208 = vmatprep.subr.mxu0 0.0
    %1209 = vmatpush1.xpose.msra.mxu0 0.0
    %1210 = vmatprep.subr.mxu0 0.0
    %1211 = vmatpush1.xpose.msra.mxu0 0.0
    %1212 = vmatprep.subr.mxu0 0.0
    %1213 = vmatpush1.xpose.msra.mxu0 0.0
    %1214 = vmatprep.subr.mxu0 0.0
    %1215 = vmatpush1.xpose.msra.mxu0 0.0
    %1216 = vmatprep.subr.mxu0 0.0
    %1217 = vmatpush1.xpose.msra.mxu0 0.0
    %1218 = vmatprep.subr.mxu0 0.0
    %1219 = vmatpush1.xpose.msra.mxu0 0.0
    %1220 = vmatprep.subr.mxu0 0.0
    %1221 = vmatpush1.xpose.msra.mxu0 0.0
    %1222 = vmatprep.subr.mxu0 0.0
    %1223 = vmatpush1.xpose.msra.mxu0 0.0
    %1224 = vmatprep.subr.mxu0 0.0
    %1225 = vmatpush1.xpose.msra.mxu0 0.0
    %1226 = vmatprep.subr.mxu0 0.0
    %1227 = vmatpush1.xpose.msra.mxu0 0.0
    %1228 = vmatprep.subr.mxu0 0.0
    %1229 = vmatpush1.xpose.msra.mxu0 0.0
    %1230 = vmatprep.subr.mxu0 0.0
    %1231 = vmatpush1.xpose.msra.mxu0 0.0
    %1232 = vmatprep.subr.mxu0 0.0
    %1233 = vmatpush1.xpose.msra.mxu0 0.0
    %1234 = vmatprep.subr.mxu0 0.0
    %1235 = vmatpush1.xpose.msra.mxu0 0.0
    %1236 = vmatprep.subr.mxu0 0.0
    %1237 = vmatpush1.xpose.msra.mxu0 0.0
    %1238 = vmatprep.subr.mxu0 0.0
    %1239 = vmatpush1.xpose.msra.mxu0 0.0
    %1240 = vmatprep.subr.mxu0 0.0
    %1241 = vmatpush1.xpose.msra.mxu0 0.0
    %1242 = vmatprep.mubr.f32.mxu0 0.0
    %1243 = vmatmul.mubr.f32.gmra.mrb[0].mxu0 %v1174
    %v1244 = vpop.f32.mrb[0].mxu0
    %v1245 = vadd.f32 0.0, %v1244
    %v1246 = vpop.f32.mrb[0].mxu0
    %1247 = vdwg.mxu0
    %1248 = vrot.lane.b32.xlu0 %v147, 116
    %v1249 = vpop.permute.xlu0 %1248
    %1250 = vrot.lane.b32.xlu0 %v147, 84
    %v1251 = vpop.permute.xlu0 %1250
    %v1252 = vsel %vm153, %v1249, 0
    %v1254 = vsel %vm153, %v1251, 0
    %1256 = vmatprep.subr.mxu0 0.0
    %1257 = vmatpush1.xpose.msra.mxu0 %v1254
    %1258 = vmatprep.subr.mxu0 0.0
    %1259 = vmatpush1.xpose.msra.mxu0 0.0
    %1260 = vmatprep.subr.mxu0 0.0
    %1261 = vmatpush1.xpose.msra.mxu0 0.0
    %1262 = vmatprep.subr.mxu0 0.0
    %1263 = vmatpush1.xpose.msra.mxu0 0.0
    %1264 = vmatprep.subr.mxu0 0.0
    %1265 = vmatpush1.xpose.msra.mxu0 0.0
    %1266 = vmatprep.subr.mxu0 0.0
    %1267 = vmatpush1.xpose.msra.mxu0 0.0
    %1268 = vmatprep.subr.mxu0 0.0
    %1269 = vmatpush1.xpose.msra.mxu0 0.0
    %1270 = vmatprep.subr.mxu0 0.0
    %1271 = vmatpush1.xpose.msra.mxu0 0.0
    %1272 = vmatprep.subr.mxu0 0.0
    %1273 = vmatpush1.xpose.msra.mxu0 0.0
    %1274 = vmatprep.subr.mxu0 0.0
    %1275 = vmatpush1.xpose.msra.mxu0 0.0
    %1276 = vmatprep.subr.mxu0 0.0
    %1277 = vmatpush1.xpose.msra.mxu0 0.0
    %1278 = vmatprep.subr.mxu0 0.0
    %1279 = vmatpush1.xpose.msra.mxu0 0.0
    %1280 = vmatprep.subr.mxu0 0.0
    %1281 = vmatpush1.xpose.msra.mxu0 0.0
    %1282 = vmatprep.subr.mxu0 0.0
    %1283 = vmatpush1.xpose.msra.mxu0 0.0
    %1284 = vmatprep.subr.mxu0 0.0
    %1285 = vmatpush1.xpose.msra.mxu0 0.0
    %1286 = vmatprep.subr.mxu0 0.0
    %1287 = vmatpush1.xpose.msra.mxu0 0.0
    %1288 = vmatprep.subr.mxu0 0.0
    %1289 = vmatpush1.xpose.msra.mxu0 0.0
    %1290 = vmatprep.subr.mxu0 0.0
    %1291 = vmatpush1.xpose.msra.mxu0 0.0
    %1292 = vmatprep.subr.mxu0 0.0
    %1293 = vmatpush1.xpose.msra.mxu0 0.0
    %1294 = vmatprep.subr.mxu0 0.0
    %1295 = vmatpush1.xpose.msra.mxu0 0.0
    %1296 = vmatprep.subr.mxu0 0.0
    %1297 = vmatpush1.xpose.msra.mxu0 0.0
    %1298 = vmatprep.subr.mxu0 0.0
    %1299 = vmatpush1.xpose.msra.mxu0 0.0
    %1300 = vmatprep.subr.mxu0 0.0
    %1301 = vmatpush1.xpose.msra.mxu0 0.0
    %1302 = vmatprep.subr.mxu0 0.0
    %1303 = vmatpush1.xpose.msra.mxu0 0.0
    %1304 = vmatprep.subr.mxu0 0.0
    %1305 = vmatpush1.xpose.msra.mxu0 0.0
    %1306 = vmatprep.subr.mxu0 0.0
    %1307 = vmatpush1.xpose.msra.mxu0 0.0
    %1308 = vmatprep.subr.mxu0 0.0
    %1309 = vmatpush1.xpose.msra.mxu0 0.0
    %1310 = vmatprep.subr.mxu0 0.0
    %1311 = vmatpush1.xpose.msra.mxu0 0.0
    %1312 = vmatprep.subr.mxu0 0.0
    %1313 = vmatpush1.xpose.msra.mxu0 0.0
    %1314 = vmatprep.subr.mxu0 0.0
    %1315 = vmatpush1.xpose.msra.mxu0 0.0
    %1316 = vmatprep.subr.mxu0 0.0
    %1317 = vmatpush1.xpose.msra.mxu0 0.0
    %1318 = vmatprep.subr.mxu0 0.0
    %1319 = vmatpush1.xpose.msra.mxu0 0.0
    %1320 = vmatprep.mubr.f32.mxu0 0.0
    %1321 = vmatmul.mubr.f32.gmra.mrb[0].mxu0 %v1252
    %v1322 = vpop.f32.mrb[0].mxu0
    %v1323 = vadd.f32 0.0, %v1322
    %v1324 = vpop.f32.mrb[0].mxu0
    %1325 = vdwg.mxu0
    %v1326 = vsel %vm305, %v1245, -inf
    %1327 = vmax.xlane.f32.xlu0 %v1326
    %v1328 = vpop.xlane.xlu0 %1327
    %v1329 = vsel %vm305, %v1323, -inf
    %1330 = vmax.xlane.f32.xlu0 %v1329
    %v1331 = vpop.xlane.xlu0 %1330
    %v1332 = vsub.f32 %v1245, %v1328
    %v1333 = vsub.f32 %v1323, %v1331
    %v1334 = vmul.f32 %v1332, 1.442695
    %v1335 = vpow.pop %v1334
    %v1336 = vmul.f32 %v1333, 1.442695
    %v1337 = vpow.pop %v1336
    %v1338 = vsel %vm305, %v1335, 0.0
    %1339 = vadd.xlane.f32.xlu0 %v1338
    %v1340 = vpop.xlane.xlu0 %1339
    %v1341 = vsel %vm305, %v1337, 0.0
    %1342 = vadd.xlane.f32.xlu0 %v1341
    %v1343 = vpop.xlane.xlu0 %1342
    %v1344 = vrcp.pop %v1340
    %v1345 = vmul.f32 %v1335, %v1344
    %v1346 = vrcp.pop %v1343
    %v1347 = vmul.f32 %v1337, %v1346
    %v1348 = vadd.f32 %v1005, %v1345
    %v1349 = vadd.f32 %v1006, %v1347
    %1350 = vrot.lane.b32.xlu0 %v142, 52
    %v1351 = vpop.permute.xlu0 %1350
    %v1354 = vsel %vm305, %v1345, 0
    %1356 = vmatprep.subr.mxu0 0.0
    %1357 = vmatpush1.msra.mxu0 %v1351
    %1358 = vmatprep.subr.mxu0 0.0
    %1359 = vmatpush1.msra.mxu0 0.0
    %1360 = vmatprep.subr.mxu0 0.0
    %1361 = vmatpush1.msra.mxu0 0.0
    %1362 = vmatprep.subr.mxu0 0.0
    %1363 = vmatpush1.msra.mxu0 0.0
    %1364 = vmatprep.subr.mxu0 0.0
    %1365 = vmatpush1.msra.mxu0 0.0
    %1366 = vmatprep.subr.mxu0 0.0
    %1367 = vmatpush1.msra.mxu0 0.0
    %1368 = vmatprep.subr.mxu0 0.0
    %1369 = vmatpush1.msra.mxu0 0.0
    %1370 = vmatprep.subr.mxu0 0.0
    %1371 = vmatpush1.msra.mxu0 0.0
    %1372 = vmatprep.subr.mxu0 0.0
    %1373 = vmatpush1.msra.mxu0 0.0
    %1374 = vmatprep.subr.mxu0 0.0
    %1375 = vmatpush1.msra.mxu0 0.0
    %1376 = vmatprep.subr.mxu0 0.0
    %1377 = vmatpush1.msra.mxu0 0.0
    %1378 = vmatprep.subr.mxu0 0.0
    %1379 = vmatpush1.msra.mxu0 0.0
    %1380 = vmatprep.subr.mxu0 0.0
    %1381 = vmatpush1.msra.mxu0 0.0
    %1382 = vmatprep.subr.mxu0 0.0
    %1383 = vmatpush1.msra.mxu0 0.0
    %1384 = vmatprep.subr.mxu0 0.0
    %1385 = vmatpush1.msra.mxu0 0.0
    %1386 = vmatprep.subr.mxu0 0.0
    %1387 = vmatpush1.msra.mxu0 0.0
    %1388 = vmatprep.subr.mxu0 0.0
    %1389 = vmatpush1.msra.mxu0 0.0
    %1390 = vmatprep.subr.mxu0 0.0
    %1391 = vmatpush1.msra.mxu0 0.0
    %1392 = vmatprep.subr.mxu0 0.0
    %1393 = vmatpush1.msra.mxu0 0.0
    %1394 = vmatprep.subr.mxu0 0.0
    %1395 = vmatpush1.msra.mxu0 0.0
    %1396 = vmatprep.subr.mxu0 0.0
    %1397 = vmatpush1.msra.mxu0 0.0
    %1398 = vmatprep.subr.mxu0 0.0
    %1399 = vmatpush1.msra.mxu0 0.0
    %1400 = vmatprep.subr.mxu0 0.0
    %1401 = vmatpush1.msra.mxu0 0.0
    %1402 = vmatprep.subr.mxu0 0.0
    %1403 = vmatpush1.msra.mxu0 0.0
    %1404 = vmatprep.subr.mxu0 0.0
    %1405 = vmatpush1.msra.mxu0 0.0
    %1406 = vmatprep.subr.mxu0 0.0
    %1407 = vmatpush1.msra.mxu0 0.0
    %1408 = vmatprep.subr.mxu0 0.0
    %1409 = vmatpush1.msra.mxu0 0.0
    %1410 = vmatprep.subr.mxu0 0.0
    %1411 = vmatpush1.msra.mxu0 0.0
    %1412 = vmatprep.subr.mxu0 0.0
    %1413 = vmatpush1.msra.mxu0 0.0
    %1414 = vmatprep.subr.mxu0 0.0
    %1415 = vmatpush1.msra.mxu0 0.0
    %1416 = vmatprep.subr.mxu0 0.0
    %1417 = vmatpush1.msra.mxu0 0.0
    %1418 = vmatprep.subr.mxu0 0.0
    %1419 = vmatpush1.msra.mxu0 0.0
    %1420 = vmatprep.mubr.f32.mxu0 0.0
    %1421 = vmatmul.mubr.f32.gmra.mrb[0].mxu0 %v1354
    %v1422 = vpop.f32.mrb[0].mxu0
    %v1423 = vadd.f32 0.0, %v1422
    %v1424 = vpop.f32.mrb[0].mxu0
    %1425 = vdwg.mxu0
    %1426 = vrot.lane.b32.xlu0 %v147, 52
    %v1427 = vpop.permute.xlu0 %1426
    %v1430 = vsel %vm305, %v1347, 0
    %1432 = vmatprep.subr.mxu0 0.0
    %1433 = vmatpush1.msra.mxu0 %v1427
    %1434 = vmatprep.subr.mxu0 0.0
    %1435 = vmatpush1.msra.mxu0 0.0
    %1436 = vmatprep.subr.mxu0 0.0
    %1437 = vmatpush1.msra.mxu0 0.0
    %1438 = vmatprep.subr.mxu0 0.0
    %1439 = vmatpush1.msra.mxu0 0.0
    %1440 = vmatprep.subr.mxu0 0.0
    %1441 = vmatpush1.msra.mxu0 0.0
    %1442 = vmatprep.subr.mxu0 0.0
    %1443 = vmatpush1.msra.mxu0 0.0
    %1444 = vmatprep.subr.mxu0 0.0
    %1445 = vmatpush1.msra.mxu0 0.0
    %1446 = vmatprep.subr.mxu0 0.0
    %1447 = vmatpush1.msra.mxu0 0.0
    %1448 = vmatprep.subr.mxu0 0.0
    %1449 = vmatpush1.msra.mxu0 0.0
    %1450 = vmatprep.subr.mxu0 0.0
    %1451 = vmatpush1.msra.mxu0 0.0
    %1452 = vmatprep.subr.mxu0 0.0
    %1453 = vmatpush1.msra.mxu0 0.0
    %1454 = vmatprep.subr.mxu0 0.0
    %1455 = vmatpush1.msra.mxu0 0.0
    %1456 = vmatprep.subr.mxu0 0.0
    %1457 = vmatpush1.msra.mxu0 0.0
    %1458 = vmatprep.subr.mxu0 0.0
    %1459 = vmatpush1.msra.mxu0 0.0
    %1460 = vmatprep.subr.mxu0 0.0
    %1461 = vmatpush1.msra.mxu0 0.0
    %1462 = vmatprep.subr.mxu0 0.0
    %1463 = vmatpush1.msra.mxu0 0.0
    %1464 = vmatprep.subr.mxu0 0.0
    %1465 = vmatpush1.msra.mxu0 0.0
    %1466 = vmatprep.subr.mxu0 0.0
    %1467 = vmatpush1.msra.mxu0 0.0
    %1468 = vmatprep.subr.mxu0 0.0
    %1469 = vmatpush1.msra.mxu0 0.0
    %1470 = vmatprep.subr.mxu0 0.0
    %1471 = vmatpush1.msra.mxu0 0.0
    %1472 = vmatprep.subr.mxu0 0.0
    %1473 = vmatpush1.msra.mxu0 0.0
    %1474 = vmatprep.subr.mxu0 0.0
    %1475 = vmatpush1.msra.mxu0 0.0
    %1476 = vmatprep.subr.mxu0 0.0
    %1477 = vmatpush1.msra.mxu0 0.0
    %1478 = vmatprep.subr.mxu0 0.0
    %1479 = vmatpush1.msra.mxu0 0.0
    %1480 = vmatprep.subr.mxu0 0.0
    %1481 = vmatpush1.msra.mxu0 0.0
    %1482 = vmatprep.subr.mxu0 0.0
    %1483 = vmatpush1.msra.mxu0 0.0
    %1484 = vmatprep.subr.mxu0 0.0
    %1485 = vmatpush1.msra.mxu0 0.0
    %1486 = vmatprep.subr.mxu0 0.0
    %1487 = vmatpush1.msra.mxu0 0.0
    %1488 = vmatprep.subr.mxu0 0.0
    %1489 = vmatpush1.msra.mxu0 0.0
    %1490 = vmatprep.subr.mxu0 0.0
    %1491 = vmatpush1.msra.mxu0 0.0
    %1492 = vmatprep.subr.mxu0 0.0
    %1493 = vmatpush1.msra.mxu0 0.0
    %1494 = vmatprep.subr.mxu0 0.0
    %1495 = vmatpush1.msra.mxu0 0.0
    %1496 = vmatprep.mubr.f32.mxu0 0.0
    %1497 = vmatmul.mubr.f32.gmra.mrb[0].mxu0 %v1430
    %v1498 = vpop.f32.mrb[0].mxu0
    %v1499 = vadd.f32 0.0, %v1498
    %v1500 = vpop.f32.mrb[0].mxu0
    %1501 = vdwg.mxu0
    %1504 = vrot.lane.b32.xlu0 %v1423, 12
    %v1505 = vpop.permute.xlu0 %1504
    %1506 = vrot.lane.b32.xlu0 %v1499, 12
    %v1507 = vpop.permute.xlu0 %1506
    %vm1510 = vcmask 130144
    %1511 = vst.msk [vmem:[#allocation2] sm:$0xff] %vm1510, %v1505
    %1512 = vst.msk [vmem:[#allocation2 + $0x8] sm:$0xff] %vm1510, %v1507
    %1513 = vrot.lane.b32.xlu0 %v142, 112
    %v1514 = vpop.permute.xlu0 %1513
    %1515 = vrot.lane.b32.xlu0 %v142, 80
    %v1516 = vpop.permute.xlu0 %1515
    %v1517 = vsel %vm153, %v1514, 0
    %v1519 = vsel %vm153, %v1516, 0
    %1521 = vmatprep.subr.mxu0 0.0
    %1522 = vmatpush1.xpose.msra.mxu0 %v1519
    %1523 = vmatprep.subr.mxu0 0.0
    %1524 = vmatpush1.xpose.msra.mxu0 0.0
    %1525 = vmatprep.subr.mxu0 0.0
    %1526 = vmatpush1.xpose.msra.mxu0 0.0
    %1527 = vmatprep.subr.mxu0 0.0
    %1528 = vmatpush1.xpose.msra.mxu0 0.0
    %1529 = vmatprep.subr.mxu0 0.0
    %1530 = vmatpush1.xpose.msra.mxu0 0.0
    %1531 = vmatprep.subr.mxu0 0.0
    %1532 = vmatpush1.xpose.msra.mxu0 0.0
    %1533 = vmatprep.subr.mxu0 0.0
    %1534 = vmatpush1.xpose.msra.mxu0 0.0
    %1535 = vmatprep.subr.mxu0 0.0
    %1536 = vmatpush1.xpose.msra.mxu0 0.0
    %1537 = vmatprep.subr.mxu0 0.0
    %1538 = vmatpush1.xpose.msra.mxu0 0.0
    %1539 = vmatprep.subr.mxu0 0.0
    %1540 = vmatpush1.xpose.msra.mxu0 0.0
    %1541 = vmatprep.subr.mxu0 0.0
    %1542 = vmatpush1.xpose.msra.mxu0 0.0
    %1543 = vmatprep.subr.mxu0 0.0
    %1544 = vmatpush1.xpose.msra.mxu0 0.0
    %1545 = vmatprep.subr.mxu0 0.0
    %1546 = vmatpush1.xpose.msra.mxu0 0.0
    %1547 = vmatprep.subr.mxu0 0.0
    %1548 = vmatpush1.xpose.msra.mxu0 0.0
    %1549 = vmatprep.subr.mxu0 0.0
    %1550 = vmatpush1.xpose.msra.mxu0 0.0
    %1551 = vmatprep.subr.mxu0 0.0
    %1552 = vmatpush1.xpose.msra.mxu0 0.0
    %1553 = vmatprep.subr.mxu0 0.0
    %1554 = vmatpush1.xpose.msra.mxu0 0.0
    %1555 = vmatprep.subr.mxu0 0.0
    %1556 = vmatpush1.xpose.msra.mxu0 0.0
    %1557 = vmatprep.subr.mxu0 0.0
    %1558 = vmatpush1.xpose.msra.mxu0 0.0
    %1559 = vmatprep.subr.mxu0 0.0
    %1560 = vmatpush1.xpose.msra.mxu0 0.0
    %1561 = vmatprep.subr.mxu0 0.0
    %1562 = vmatpush1.xpose.msra.mxu0 0.0
    %1563 = vmatprep.subr.mxu0 0.0
    %1564 = vmatpush1.xpose.msra.mxu0 0.0
    %1565 = vmatprep.subr.mxu0 0.0
    %1566 = vmatpush1.xpose.msra.mxu0 0.0
    %1567 = vmatprep.subr.mxu0 0.0
    %1568 = vmatpush1.xpose.msra.mxu0 0.0
    %1569 = vmatprep.subr.mxu0 0.0
    %1570 = vmatpush1.xpose.msra.mxu0 0.0
    %1571 = vmatprep.subr.mxu0 0.0
    %1572 = vmatpush1.xpose.msra.mxu0 0.0
    %1573 = vmatprep.subr.mxu0 0.0
    %1574 = vmatpush1.xpose.msra.mxu0 0.0
    %1575 = vmatprep.subr.mxu0 0.0
    %1576 = vmatpush1.xpose.msra.mxu0 0.0
    %1577 = vmatprep.subr.mxu0 0.0
    %1578 = vmatpush1.xpose.msra.mxu0 0.0
    %1579 = vmatprep.subr.mxu0 0.0
    %1580 = vmatpush1.xpose.msra.mxu0 0.0
    %1581 = vmatprep.subr.mxu0 0.0
    %1582 = vmatpush1.xpose.msra.mxu0 0.0
    %1583 = vmatprep.subr.mxu0 0.0
    %1584 = vmatpush1.xpose.msra.mxu0 0.0
    %1585 = vmatprep.mubr.f32.mxu0 0.0
    %1586 = vmatmul.mubr.f32.gmra.mrb[0].mxu0 %v1517
    %v1587 = vpop.f32.mrb[0].mxu0
    %v1588 = vadd.f32 0.0, %v1587
    %v1589 = vpop.f32.mrb[0].mxu0
    %1590 = vdwg.mxu0
    %1591 = vrot.lane.b32.xlu0 %v147, 112
    %v1592 = vpop.permute.xlu0 %1591
    %1593 = vrot.lane.b32.xlu0 %v147, 80
    %v1594 = vpop.permute.xlu0 %1593
    %v1595 = vsel %vm153, %v1592, 0
    %v1597 = vsel %vm153, %v1594, 0
    %1599 = vmatprep.subr.mxu0 0.0
    %1600 = vmatpush1.xpose.msra.mxu0 %v1597
    %1601 = vmatprep.subr.mxu0 0.0
    %1602 = vmatpush1.xpose.msra.mxu0 0.0
    %1603 = vmatprep.subr.mxu0 0.0
    %1604 = vmatpush1.xpose.msra.mxu0 0.0
    %1605 = vmatprep.subr.mxu0 0.0
    %1606 = vmatpush1.xpose.msra.mxu0 0.0
    %1607 = vmatprep.subr.mxu0 0.0
    %1608 = vmatpush1.xpose.msra.mxu0 0.0
    %1609 = vmatprep.subr.mxu0 0.0
    %1610 = vmatpush1.xpose.msra.mxu0 0.0
    %1611 = vmatprep.subr.mxu0 0.0
    %1612 = vmatpush1.xpose.msra.mxu0 0.0
    %1613 = vmatprep.subr.mxu0 0.0
    %1614 = vmatpush1.xpose.msra.mxu0 0.0
    %1615 = vmatprep.subr.mxu0 0.0
    %1616 = vmatpush1.xpose.msra.mxu0 0.0
    %1617 = vmatprep.subr.mxu0 0.0
    %1618 = vmatpush1.xpose.msra.mxu0 0.0
    %1619 = vmatprep.subr.mxu0 0.0
    %1620 = vmatpush1.xpose.msra.mxu0 0.0
    %1621 = vmatprep.subr.mxu0 0.0
    %1622 = vmatpush1.xpose.msra.mxu0 0.0
    %1623 = vmatprep.subr.mxu0 0.0
    %1624 = vmatpush1.xpose.msra.mxu0 0.0
    %1625 = vmatprep.subr.mxu0 0.0
    %1626 = vmatpush1.xpose.msra.mxu0 0.0
    %1627 = vmatprep.subr.mxu0 0.0
    %1628 = vmatpush1.xpose.msra.mxu0 0.0
    %1629 = vmatprep.subr.mxu0 0.0
    %1630 = vmatpush1.xpose.msra.mxu0 0.0
    %1631 = vmatprep.subr.mxu0 0.0
    %1632 = vmatpush1.xpose.msra.mxu0 0.0
    %1633 = vmatprep.subr.mxu0 0.0
    %1634 = vmatpush1.xpose.msra.mxu0 0.0
    %1635 = vmatprep.subr.mxu0 0.0
    %1636 = vmatpush1.xpose.msra.mxu0 0.0
    %1637 = vmatprep.subr.mxu0 0.0
    %1638 = vmatpush1.xpose.msra.mxu0 0.0
    %1639 = vmatprep.subr.mxu0 0.0
    %1640 = vmatpush1.xpose.msra.mxu0 0.0
    %1641 = vmatprep.subr.mxu0 0.0
    %1642 = vmatpush1.xpose.msra.mxu0 0.0
    %1643 = vmatprep.subr.mxu0 0.0
    %1644 = vmatpush1.xpose.msra.mxu0 0.0
    %1645 = vmatprep.subr.mxu0 0.0
    %1646 = vmatpush1.xpose.msra.mxu0 0.0
    %1647 = vmatprep.subr.mxu0 0.0
    %1648 = vmatpush1.xpose.msra.mxu0 0.0
    %1649 = vmatprep.subr.mxu0 0.0
    %1650 = vmatpush1.xpose.msra.mxu0 0.0
    %1651 = vmatprep.subr.mxu0 0.0
    %1652 = vmatpush1.xpose.msra.mxu0 0.0
    %1653 = vmatprep.subr.mxu0 0.0
    %1654 = vmatpush1.xpose.msra.mxu0 0.0
    %1655 = vmatprep.subr.mxu0 0.0
    %1656 = vmatpush1.xpose.msra.mxu0 0.0
    %1657 = vmatprep.subr.mxu0 0.0
    %1658 = vmatpush1.xpose.msra.mxu0 0.0
    %1659 = vmatprep.subr.mxu0 0.0
    %1660 = vmatpush1.xpose.msra.mxu0 0.0
    %1661 = vmatprep.subr.mxu0 0.0
    %1662 = vmatpush1.xpose.msra.mxu0 0.0
    %1663 = vmatprep.mubr.f32.mxu0 0.0
    %1664 = vmatmul.mubr.f32.gmra.mrb[0].mxu0 %v1595
    %v1665 = vpop.f32.mrb[0].mxu0
    %v1666 = vadd.f32 0.0, %v1665
    %v1667 = vpop.f32.mrb[0].mxu0
    %1668 = vdwg.mxu0
    %v1669 = vsel %vm305, %v1588, -inf
    %1670 = vmax.xlane.f32.xlu0 %v1669
    %v1671 = vpop.xlane.xlu0 %1670
    %v1672 = vsel %vm305, %v1666, -inf
    %1673 = vmax.xlane.f32.xlu0 %v1672
    %v1674 = vpop.xlane.xlu0 %1673
    %v1675 = vsub.f32 %v1588, %v1671
    %v1676 = vsub.f32 %v1666, %v1674
    %v1677 = vmul.f32 %v1675, 1.442695
    %v1678 = vpow.pop %v1677
    %v1679 = vmul.f32 %v1676, 1.442695
    %v1680 = vpow.pop %v1679
    %v1681 = vsel %vm305, %v1678, 0.0
    %1682 = vadd.xlane.f32.xlu0 %v1681
    %v1683 = vpop.xlane.xlu0 %1682
    %v1684 = vsel %vm305, %v1680, 0.0
    %1685 = vadd.xlane.f32.xlu0 %v1684
    %v1686 = vpop.xlane.xlu0 %1685
    %v1687 = vrcp.pop %v1683
    %v1688 = vmul.f32 %v1678, %v1687
    %v1689 = vrcp.pop %v1686
    %v1690 = vmul.f32 %v1680, %v1689
    %v1691 = vadd.f32 %v1348, %v1688
    %v1692 = vadd.f32 %v1349, %v1690
    %1693 = vrot.lane.b32.xlu0 %v142, 48
    %v1694 = vpop.permute.xlu0 %1693
    %v1697 = vsel %vm305, %v1688, 0
    %1699 = vmatprep.subr.mxu0 0.0
    %1700 = vmatpush1.msra.mxu0 %v1694
    %1701 = vmatprep.subr.mxu0 0.0
    %1702 = vmatpush1.msra.mxu0 0.0
    %1703 = vmatprep.subr.mxu0 0.0
    %1704 = vmatpush1.msra.mxu0 0.0
    %1705 = vmatprep.subr.mxu0 0.0
    %1706 = vmatpush1.msra.mxu0 0.0
    %1707 = vmatprep.subr.mxu0 0.0
    %1708 = vmatpush1.msra.mxu0 0.0
    %1709 = vmatprep.subr.mxu0 0.0
    %1710 = vmatpush1.msra.mxu0 0.0
    %1711 = vmatprep.subr.mxu0 0.0
    %1712 = vmatpush1.msra.mxu0 0.0
    %1713 = vmatprep.subr.mxu0 0.0
    %1714 = vmatpush1.msra.mxu0 0.0
    %1715 = vmatprep.subr.mxu0 0.0
    %1716 = vmatpush1.msra.mxu0 0.0
    %1717 = vmatprep.subr.mxu0 0.0
    %1718 = vmatpush1.msra.mxu0 0.0
    %1719 = vmatprep.subr.mxu0 0.0
    %1720 = vmatpush1.msra.mxu0 0.0
    %1721 = vmatprep.subr.mxu0 0.0
    %1722 = vmatpush1.msra.mxu0 0.0
    %1723 = vmatprep.subr.mxu0 0.0
    %1724 = vmatpush1.msra.mxu0 0.0
    %1725 = vmatprep.subr.mxu0 0.0
    %1726 = vmatpush1.msra.mxu0 0.0
    %1727 = vmatprep.subr.mxu0 0.0
    %1728 = vmatpush1.msra.mxu0 0.0
    %1729 = vmatprep.subr.mxu0 0.0
    %1730 = vmatpush1.msra.mxu0 0.0
    %1731 = vmatprep.subr.mxu0 0.0
    %1732 = vmatpush1.msra.mxu0 0.0
    %1733 = vmatprep.subr.mxu0 0.0
    %1734 = vmatpush1.msra.mxu0 0.0
    %1735 = vmatprep.subr.mxu0 0.0
    %1736 = vmatpush1.msra.mxu0 0.0
    %1737 = vmatprep.subr.mxu0 0.0
    %1738 = vmatpush1.msra.mxu0 0.0
    %1739 = vmatprep.subr.mxu0 0.0
    %1740 = vmatpush1.msra.mxu0 0.0
    %1741 = vmatprep.subr.mxu0 0.0
    %1742 = vmatpush1.msra.mxu0 0.0
    %1743 = vmatprep.subr.mxu0 0.0
    %1744 = vmatpush1.msra.mxu0 0.0
    %1745 = vmatprep.subr.mxu0 0.0
    %1746 = vmatpush1.msra.mxu0 0.0
    %1747 = vmatprep.subr.mxu0 0.0
    %1748 = vmatpush1.msra.mxu0 0.0
    %1749 = vmatprep.subr.mxu0 0.0
    %1750 = vmatpush1.msra.mxu0 0.0
    %1751 = vmatprep.subr.mxu0 0.0
    %1752 = vmatpush1.msra.mxu0 0.0
    %1753 = vmatprep.subr.mxu0 0.0
    %1754 = vmatpush1.msra.mxu0 0.0
    %1755 = vmatprep.subr.mxu0 0.0
    %1756 = vmatpush1.msra.mxu0 0.0
    %1757 = vmatprep.subr.mxu0 0.0
    %1758 = vmatpush1.msra.mxu0 0.0
    %1759 = vmatprep.subr.mxu0 0.0
    %1760 = vmatpush1.msra.mxu0 0.0
    %1761 = vmatprep.subr.mxu0 0.0
    %1762 = vmatpush1.msra.mxu0 0.0
    %1763 = vmatprep.mubr.f32.mxu0 0.0
    %1764 = vmatmul.mubr.f32.gmra.mrb[0].mxu0 %v1697
    %v1765 = vpop.f32.mrb[0].mxu0
    %v1766 = vadd.f32 0.0, %v1765
    %v1767 = vpop.f32.mrb[0].mxu0
    %1768 = vdwg.mxu0
    %1769 = vrot.lane.b32.xlu0 %v147, 48
    %v1770 = vpop.permute.xlu0 %1769
    %v1773 = vsel %vm305, %v1690, 0
    %1775 = vmatprep.subr.mxu0 0.0
    %1776 = vmatpush1.msra.mxu0 %v1770
    %1777 = vmatprep.subr.mxu0 0.0
    %1778 = vmatpush1.msra.mxu0 0.0
    %1779 = vmatprep.subr.mxu0 0.0
    %1780 = vmatpush1.msra.mxu0 0.0
    %1781 = vmatprep.subr.mxu0 0.0
    %1782 = vmatpush1.msra.mxu0 0.0
    %1783 = vmatprep.subr.mxu0 0.0
    %1784 = vmatpush1.msra.mxu0 0.0
    %1785 = vmatprep.subr.mxu0 0.0
    %1786 = vmatpush1.msra.mxu0 0.0
    %1787 = vmatprep.subr.mxu0 0.0
    %1788 = vmatpush1.msra.mxu0 0.0
    %1789 = vmatprep.subr.mxu0 0.0
    %1790 = vmatpush1.msra.mxu0 0.0
    %1791 = vmatprep.subr.mxu0 0.0
    %1792 = vmatpush1.msra.mxu0 0.0
    %1793 = vmatprep.subr.mxu0 0.0
    %1794 = vmatpush1.msra.mxu0 0.0
    %1795 = vmatprep.subr.mxu0 0.0
    %1796 = vmatpush1.msra.mxu0 0.0
    %1797 = vmatprep.subr.mxu0 0.0
    %1798 = vmatpush1.msra.mxu0 0.0
    %1799 = vmatprep.subr.mxu0 0.0
    %1800 = vmatpush1.msra.mxu0 0.0
    %1801 = vmatprep.subr.mxu0 0.0
    %1802 = vmatpush1.msra.mxu0 0.0
    %1803 = vmatprep.subr.mxu0 0.0
    %1804 = vmatpush1.msra.mxu0 0.0
    %1805 = vmatprep.subr.mxu0 0.0
    %1806 = vmatpush1.msra.mxu0 0.0
    %1807 = vmatprep.subr.mxu0 0.0
    %1808 = vmatpush1.msra.mxu0 0.0
    %1809 = vmatprep.subr.mxu0 0.0
    %1810 = vmatpush1.msra.mxu0 0.0
    %1811 = vmatprep.subr.mxu0 0.0
    %1812 = vmatpush1.msra.mxu0 0.0
    %1813 = vmatprep.subr.mxu0 0.0
    %1814 = vmatpush1.msra.mxu0 0.0
    %1815 = vmatprep.subr.mxu0 0.0
    %1816 = vmatpush1.msra.mxu0 0.0
    %1817 = vmatprep.subr.mxu0 0.0
    %1818 = vmatpush1.msra.mxu0 0.0
    %1819 = vmatprep.subr.mxu0 0.0
    %1820 = vmatpush1.msra.mxu0 0.0
    %1821 = vmatprep.subr.mxu0 0.0
    %1822 = vmatpush1.msra.mxu0 0.0
    %1823 = vmatprep.subr.mxu0 0.0
    %1824 = vmatpush1.msra.mxu0 0.0
    %1825 = vmatprep.subr.mxu0 0.0
    %1826 = vmatpush1.msra.mxu0 0.0
    %1827 = vmatprep.subr.mxu0 0.0
    %1828 = vmatpush1.msra.mxu0 0.0
    %1829 = vmatprep.subr.mxu0 0.0
    %1830 = vmatpush1.msra.mxu0 0.0
    %1831 = vmatprep.subr.mxu0 0.0
    %1832 = vmatpush1.msra.mxu0 0.0
    %1833 = vmatprep.subr.mxu0 0.0
    %1834 = vmatpush1.msra.mxu0 0.0
    %1835 = vmatprep.subr.mxu0 0.0
    %1836 = vmatpush1.msra.mxu0 0.0
    %1837 = vmatprep.subr.mxu0 0.0
    %1838 = vmatpush1.msra.mxu0 0.0
    %1839 = vmatprep.mubr.f32.mxu0 0.0
    %1840 = vmatmul.mubr.f32.gmra.mrb[0].mxu0 %v1773
    %v1841 = vpop.f32.mrb[0].mxu0
    %v1842 = vadd.f32 0.0, %v1841
    %v1843 = vpop.f32.mrb[0].mxu0
    %1844 = vdwg.mxu0
    %1847 = vrot.lane.b32.xlu0 %v1766, 16
    %v1848 = vpop.permute.xlu0 %1847
    %1849 = vrot.lane.b32.xlu0 %v1842, 16
    %v1850 = vpop.permute.xlu0 %1849
    %vm1853 = vcmask 162944
    %1854 = vst.msk [vmem:[#allocation2] sm:$0xff] %vm1853, %v1848
    %1855 = vst.msk [vmem:[#allocation2 + $0x8] sm:$0xff] %vm1853, %v1850
    %1856 = vrot.lane.b32.xlu0 %v142, 108
    %v1857 = vpop.permute.xlu0 %1856
    %1858 = vrot.lane.b32.xlu0 %v142, 76
    %v1859 = vpop.permute.xlu0 %1858
    %v1860 = vsel %vm153, %v1857, 0
    %v1862 = vsel %vm153, %v1859, 0
    %1864 = vmatprep.subr.mxu0 0.0
    %1865 = vmatpush1.xpose.msra.mxu0 %v1862
    %1866 = vmatprep.subr.mxu0 0.0
    %1867 = vmatpush1.xpose.msra.mxu0 0.0
    %1868 = vmatprep.subr.mxu0 0.0
    %1869 = vmatpush1.xpose.msra.mxu0 0.0
    %1870 = vmatprep.subr.mxu0 0.0
    %1871 = vmatpush1.xpose.msra.mxu0 0.0
    %1872 = vmatprep.subr.mxu0 0.0
    %1873 = vmatpush1.xpose.msra.mxu0 0.0
    %1874 = vmatprep.subr.mxu0 0.0
    %1875 = vmatpush1.xpose.msra.mxu0 0.0
    %1876 = vmatprep.subr.mxu0 0.0
    %1877 = vmatpush1.xpose.msra.mxu0 0.0
    %1878 = vmatprep.subr.mxu0 0.0
    %1879 = vmatpush1.xpose.msra.mxu0 0.0
    %1880 = vmatprep.subr.mxu0 0.0
    %1881 = vmatpush1.xpose.msra.mxu0 0.0
    %1882 = vmatprep.subr.mxu0 0.0
    %1883 = vmatpush1.xpose.msra.mxu0 0.0
    %1884 = vmatprep.subr.mxu0 0.0
    %1885 = vmatpush1.xpose.msra.mxu0 0.0
    %1886 = vmatprep.subr.mxu0 0.0
    %1887 = vmatpush1.xpose.msra.mxu0 0.0
    %1888 = vmatprep.subr.mxu0 0.0
    %1889 = vmatpush1.xpose.msra.mxu0 0.0
    %1890 = vmatprep.subr.mxu0 0.0
    %1891 = vmatpush1.xpose.msra.mxu0 0.0
    %1892 = vmatprep.subr.mxu0 0.0
    %1893 = vmatpush1.xpose.msra.mxu0 0.0
    %1894 = vmatprep.subr.mxu0 0.0
    %1895 = vmatpush1.xpose.msra.mxu0 0.0
    %1896 = vmatprep.subr.mxu0 0.0
    %1897 = vmatpush1.xpose.msra.mxu0 0.0
    %1898 = vmatprep.subr.mxu0 0.0
    %1899 = vmatpush1.xpose.msra.mxu0 0.0
    %1900 = vmatprep.subr.mxu0 0.0
    %1901 = vmatpush1.xpose.msra.mxu0 0.0
    %1902 = vmatprep.subr.mxu0 0.0
    %1903 = vmatpush1.xpose.msra.mxu0 0.0
    %1904 = vmatprep.subr.mxu0 0.0
    %1905 = vmatpush1.xpose.msra.mxu0 0.0
    %1906 = vmatprep.subr.mxu0 0.0
    %1907 = vmatpush1.xpose.msra.mxu0 0.0
    %1908 = vmatprep.subr.mxu0 0.0
    %1909 = vmatpush1.xpose.msra.mxu0 0.0
    %1910 = vmatprep.subr.mxu0 0.0
    %1911 = vmatpush1.xpose.msra.mxu0 0.0
    %1912 = vmatprep.subr.mxu0 0.0
    %1913 = vmatpush1.xpose.msra.mxu0 0.0
    %1914 = vmatprep.subr.mxu0 0.0
    %1915 = vmatpush1.xpose.msra.mxu0 0.0
    %1916 = vmatprep.subr.mxu0 0.0
    %1917 = vmatpush1.xpose.msra.mxu0 0.0
    %1918 = vmatprep.subr.mxu0 0.0
    %1919 = vmatpush1.xpose.msra.mxu0 0.0
    %1920 = vmatprep.subr.mxu0 0.0
    %1921 = vmatpush1.xpose.msra.mxu0 0.0
    %1922 = vmatprep.subr.mxu0 0.0
    %1923 = vmatpush1.xpose.msra.mxu0 0.0
    %1924 = vmatprep.subr.mxu0 0.0
    %1925 = vmatpush1.xpose.msra.mxu0 0.0
    %1926 = vmatprep.subr.mxu0 0.0
    %1927 = vmatpush1.xpose.msra.mxu0 0.0
    %1928 = vmatprep.mubr.f32.mxu0 0.0
    %1929 = vmatmul.mubr.f32.gmra.mrb[0].mxu0 %v1860
    %v1930 = vpop.f32.mrb[0].mxu0
    %v1931 = vadd.f32 0.0, %v1930
    %v1932 = vpop.f32.mrb[0].mxu0
    %1933 = vdwg.mxu0
    %1934 = vrot.lane.b32.xlu0 %v147, 108
    %v1935 = vpop.permute.xlu0 %1934
    %1936 = vrot.lane.b32.xlu0 %v147, 76
    %v1937 = vpop.permute.xlu0 %1936
    %v1938 = vsel %vm153, %v1935, 0
    %v1940 = vsel %vm153, %v1937, 0
    %1942 = vmatprep.subr.mxu0 0.0
    %1943 = vmatpush1.xpose.msra.mxu0 %v1940
    %1944 = vmatprep.subr.mxu0 0.0
    %1945 = vmatpush1.xpose.msra.mxu0 0.0
    %1946 = vmatprep.subr.mxu0 0.0
    %1947 = vmatpush1.xpose.msra.mxu0 0.0
    %1948 = vmatprep.subr.mxu0 0.0
    %1949 = vmatpush1.xpose.msra.mxu0 0.0
    %1950 = vmatprep.subr.mxu0 0.0
    %1951 = vmatpush1.xpose.msra.mxu0 0.0
    %1952 = vmatprep.subr.mxu0 0.0
    %1953 = vmatpush1.xpose.msra.mxu0 0.0
    %1954 = vmatprep.subr.mxu0 0.0
    %1955 = vmatpush1.xpose.msra.mxu0 0.0
    %1956 = vmatprep.subr.mxu0 0.0
    %1957 = vmatpush1.xpose.msra.mxu0 0.0
    %1958 = vmatprep.subr.mxu0 0.0
    %1959 = vmatpush1.xpose.msra.mxu0 0.0
    %1960 = vmatprep.subr.mxu0 0.0
    %1961 = vmatpush1.xpose.msra.mxu0 0.0
    %1962 = vmatprep.subr.mxu0 0.0
    %1963 = vmatpush1.xpose.msra.mxu0 0.0
    %1964 = vmatprep.subr.mxu0 0.0
    %1965 = vmatpush1.xpose.msra.mxu0 0.0
    %1966 = vmatprep.subr.mxu0 0.0
    %1967 = vmatpush1.xpose.msra.mxu0 0.0
    %1968 = vmatprep.subr.mxu0 0.0
    %1969 = vmatpush1.xpose.msra.mxu0 0.0
    %1970 = vmatprep.subr.mxu0 0.0
    %1971 = vmatpush1.xpose.msra.mxu0 0.0
    %1972 = vmatprep.subr.mxu0 0.0
    %1973 = vmatpush1.xpose.msra.mxu0 0.0
    %1974 = vmatprep.subr.mxu0 0.0
    %1975 = vmatpush1.xpose.msra.mxu0 0.0
    %1976 = vmatprep.subr.mxu0 0.0
    %1977 = vmatpush1.xpose.msra.mxu0 0.0
    %1978 = vmatprep.subr.mxu0 0.0
    %1979 = vmatpush1.xpose.msra.mxu0 0.0
    %1980 = vmatprep.subr.mxu0 0.0
    %1981 = vmatpush1.xpose.msra.mxu0 0.0
    %1982 = vmatprep.subr.mxu0 0.0
    %1983 = vmatpush1.xpose.msra.mxu0 0.0
    %1984 = vmatprep.subr.mxu0 0.0
    %1985 = vmatpush1.xpose.msra.mxu0 0.0
    %1986 = vmatprep.subr.mxu0 0.0
    %1987 = vmatpush1.xpose.msra.mxu0 0.0
    %1988 = vmatprep.subr.mxu0 0.0
    %1989 = vmatpush1.xpose.msra.mxu0 0.0
    %1990 = vmatprep.subr.mxu0 0.0
    %1991 = vmatpush1.xpose.msra.mxu0 0.0
    %1992 = vmatprep.subr.mxu0 0.0
    %1993 = vmatpush1.xpose.msra.mxu0 0.0
    %1994 = vmatprep.subr.mxu0 0.0
    %1995 = vmatpush1.xpose.msra.mxu0 0.0
    %1996 = vmatprep.subr.mxu0 0.0
    %1997 = vmatpush1.xpose.msra.mxu0 0.0
    %1998 = vmatprep.subr.mxu0 0.0
    %1999 = vmatpush1.xpose.msra.mxu0 0.0
    %2000 = vmatprep.subr.mxu0 0.0
    %2001 = vmatpush1.xpose.msra.mxu0 0.0
    %2002 = vmatprep.subr.mxu0 0.0
    %2003 = vmatpush1.xpose.msra.mxu0 0.0
    %2004 = vmatprep.subr.mxu0 0.0
    %2005 = vmatpush1.xpose.msra.mxu0 0.0
    %2006 = vmatprep.mubr.f32.mxu0 0.0
    %2007 = vmatmul.mubr.f32.gmra.mrb[0].mxu0 %v1938
    %v2008 = vpop.f32.mrb[0].mxu0
    %v2009 = vadd.f32 0.0, %v2008
    %v2010 = vpop.f32.mrb[0].mxu0
    %2011 = vdwg.mxu0
    %v2012 = vsel %vm305, %v1931, -inf
    %2013 = vmax.xlane.f32.xlu0 %v2012
    %v2014 = vpop.xlane.xlu0 %2013
    %v2015 = vsel %vm305, %v2009, -inf
    %2016 = vmax.xlane.f32.xlu0 %v2015
    %v2017 = vpop.xlane.xlu0 %2016
    %v2018 = vsub.f32 %v1931, %v2014
    %v2019 = vsub.f32 %v2009, %v2017
    %v2020 = vmul.f32 %v2018, 1.442695
    %v2021 = vpow.pop %v2020
    %v2022 = vmul.f32 %v2019, 1.442695
    %v2023 = vpow.pop %v2022
    %v2024 = vsel %vm305, %v2021, 0.0
    %2025 = vadd.xlane.f32.xlu0 %v2024
    %v2026 = vpop.xlane.xlu0 %2025
    %v2027 = vsel %vm305, %v2023, 0.0
    %2028 = vadd.xlane.f32.xlu0 %v2027
    %v2029 = vpop.xlane.xlu0 %2028
    %v2030 = vrcp.pop %v2026
    %v2031 = vmul.f32 %v2021, %v2030
    %v2032 = vrcp.pop %v2029
    %v2033 = vmul.f32 %v2023, %v2032
    %v2034 = vadd.f32 %v1691, %v2031
    %v2035 = vadd.f32 %v1692, %v2033
    %2036 = vrot.lane.b32.xlu0 %v142, 44
    %v2037 = vpop.permute.xlu0 %2036
    %v2040 = vsel %vm305, %v2031, 0
    %2042 = vmatprep.subr.mxu0 0.0
    %2043 = vmatpush1.msra.mxu0 %v2037
    %2044 = vmatprep.subr.mxu0 0.0
    %2045 = vmatpush1.msra.mxu0 0.0
    %2046 = vmatprep.subr.mxu0 0.0
    %2047 = vmatpush1.msra.mxu0 0.0
    %2048 = vmatprep.subr.mxu0 0.0
    %2049 = vmatpush1.msra.mxu0 0.0
    %2050 = vmatprep.subr.mxu0 0.0
    %2051 = vmatpush1.msra.mxu0 0.0
    %2052 = vmatprep.subr.mxu0 0.0
    %2053 = vmatpush1.msra.mxu0 0.0
    %2054 = vmatprep.subr.mxu0 0.0
    %2055 = vmatpush1.msra.mxu0 0.0
    %2056 = vmatprep.subr.mxu0 0.0
    %2057 = vmatpush1.msra.mxu0 0.0
    %2058 = vmatprep.subr.mxu0 0.0
    %2059 = vmatpush1.msra.mxu0 0.0
    %2060 = vmatprep.subr.mxu0 0.0
    %2061 = vmatpush1.msra.mxu0 0.0
    %2062 = vmatprep.subr.mxu0 0.0
    %2063 = vmatpush1.msra.mxu0 0.0
    %2064 = vmatprep.subr.mxu0 0.0
    %2065 = vmatpush1.msra.mxu0 0.0
    %2066 = vmatprep.subr.mxu0 0.0
    %2067 = vmatpush1.msra.mxu0 0.0
    %2068 = vmatprep.subr.mxu0 0.0
    %2069 = vmatpush1.msra.mxu0 0.0
    %2070 = vmatprep.subr.mxu0 0.0
    %2071 = vmatpush1.msra.mxu0 0.0
    %2072 = vmatprep.subr.mxu0 0.0
    %2073 = vmatpush1.msra.mxu0 0.0
    %2074 = vmatprep.subr.mxu0 0.0
    %2075 = vmatpush1.msra.mxu0 0.0
    %2076 = vmatprep.subr.mxu0 0.0
    %2077 = vmatpush1.msra.mxu0 0.0
    %2078 = vmatprep.subr.mxu0 0.0
    %2079 = vmatpush1.msra.mxu0 0.0
    %2080 = vmatprep.subr.mxu0 0.0
    %2081 = vmatpush1.msra.mxu0 0.0
    %2082 = vmatprep.subr.mxu0 0.0
    %2083 = vmatpush1.msra.mxu0 0.0
    %2084 = vmatprep.subr.mxu0 0.0
    %2085 = vmatpush1.msra.mxu0 0.0
    %2086 = vmatprep.subr.mxu0 0.0
    %2087 = vmatpush1.msra.mxu0 0.0
    %2088 = vmatprep.subr.mxu0 0.0
    %2089 = vmatpush1.msra.mxu0 0.0
    %2090 = vmatprep.subr.mxu0 0.0
    %2091 = vmatpush1.msra.mxu0 0.0
    %2092 = vmatprep.subr.mxu0 0.0
    %2093 = vmatpush1.msra.mxu0 0.0
    %2094 = vmatprep.subr.mxu0 0.0
    %2095 = vmatpush1.msra.mxu0 0.0
    %2096 = vmatprep.subr.mxu0 0.0
    %2097 = vmatpush1.msra.mxu0 0.0
    %2098 = vmatprep.subr.mxu0 0.0
    %2099 = vmatpush1.msra.mxu0 0.0
    %2100 = vmatprep.subr.mxu0 0.0
    %2101 = vmatpush1.msra.mxu0 0.0
    %2102 = vmatprep.subr.mxu0 0.0
    %2103 = vmatpush1.msra.mxu0 0.0
    %2104 = vmatprep.subr.mxu0 0.0
    %2105 = vmatpush1.msra.mxu0 0.0
    %2106 = vmatprep.mubr.f32.mxu0 0.0
    %2107 = vmatmul.mubr.f32.gmra.mrb[0].mxu0 %v2040
    %v2108 = vpop.f32.mrb[0].mxu0
    %v2109 = vadd.f32 0.0, %v2108
    %v2110 = vpop.f32.mrb[0].mxu0
    %2111 = vdwg.mxu0
    %2112 = vrot.lane.b32.xlu0 %v147, 44
    %v2113 = vpop.permute.xlu0 %2112
    %v2116 = vsel %vm305, %v2033, 0
    %2118 = vmatprep.subr.mxu0 0.0
    %2119 = vmatpush1.msra.mxu0 %v2113
    %2120 = vmatprep.subr.mxu0 0.0
    %2121 = vmatpush1.msra.mxu0 0.0
    %2122 = vmatprep.subr.mxu0 0.0
    %2123 = vmatpush1.msra.mxu0 0.0
    %2124 = vmatprep.subr.mxu0 0.0
    %2125 = vmatpush1.msra.mxu0 0.0
    %2126 = vmatprep.subr.mxu0 0.0
    %2127 = vmatpush1.msra.mxu0 0.0
    %2128 = vmatprep.subr.mxu0 0.0
    %2129 = vmatpush1.msra.mxu0 0.0
    %2130 = vmatprep.subr.mxu0 0.0
    %2131 = vmatpush1.msra.mxu0 0.0
    %2132 = vmatprep.subr.mxu0 0.0
    %2133 = vmatpush1.msra.mxu0 0.0
    %2134 = vmatprep.subr.mxu0 0.0
    %2135 = vmatpush1.msra.mxu0 0.0
    %2136 = vmatprep.subr.mxu0 0.0
    %2137 = vmatpush1.msra.mxu0 0.0
    %2138 = vmatprep.subr.mxu0 0.0
    %2139 = vmatpush1.msra.mxu0 0.0
    %2140 = vmatprep.subr.mxu0 0.0
    %2141 = vmatpush1.msra.mxu0 0.0
    %2142 = vmatprep.subr.mxu0 0.0
    %2143 = vmatpush1.msra.mxu0 0.0
    %2144 = vmatprep.subr.mxu0 0.0
    %2145 = vmatpush1.msra.mxu0 0.0
    %2146 = vmatprep.subr.mxu0 0.0
    %2147 = vmatpush1.msra.mxu0 0.0
    %2148 = vmatprep.subr.mxu0 0.0
    %2149 = vmatpush1.msra.mxu0 0.0
    %2150 = vmatprep.subr.mxu0 0.0
    %2151 = vmatpush1.msra.mxu0 0.0
    %2152 = vmatprep.subr.mxu0 0.0
    %2153 = vmatpush1.msra.mxu0 0.0
    %2154 = vmatprep.subr.mxu0 0.0
    %2155 = vmatpush1.msra.mxu0 0.0
    %2156 = vmatprep.subr.mxu0 0.0
    %2157 = vmatpush1.msra.mxu0 0.0
    %2158 = vmatprep.subr.mxu0 0.0
    %2159 = vmatpush1.msra.mxu0 0.0
    %2160 = vmatprep.subr.mxu0 0.0
    %2161 = vmatpush1.msra.mxu0 0.0
    %2162 = vmatprep.subr.mxu0 0.0
    %2163 = vmatpush1.msra.mxu0 0.0
    %2164 = vmatprep.subr.mxu0 0.0
    %2165 = vmatpush1.msra.mxu0 0.0
    %2166 = vmatprep.subr.mxu0 0.0
    %2167 = vmatpush1.msra.mxu0 0.0
    %2168 = vmatprep.subr.mxu0 0.0
    %2169 = vmatpush1.msra.mxu0 0.0
    %2170 = vmatprep.subr.mxu0 0.0
    %2171 = vmatpush1.msra.mxu0 0.0
    %2172 = vmatprep.subr.mxu0 0.0
    %2173 = vmatpush1.msra.mxu0 0.0
    %2174 = vmatprep.subr.mxu0 0.0
    %2175 = vmatpush1.msra.mxu0 0.0
    %2176 = vmatprep.subr.mxu0 0.0
    %2177 = vmatpush1.msra.mxu0 0.0
    %2178 = vmatprep.subr.mxu0 0.0
    %2179 = vmatpush1.msra.mxu0 0.0
    %2180 = vmatprep.subr.mxu0 0.0
    %2181 = vmatpush1.msra.mxu0 0.0
    %2182 = vmatprep.mubr.f32.mxu0 0.0
    %2183 = vmatmul.mubr.f32.gmra.mrb[0].mxu0 %v2116
    %v2184 = vpop.f32.mrb[0].mxu0
    %v2185 = vadd.f32 0.0, %v2184
    %v2186 = vpop.f32.mrb[0].mxu0
    %2187 = vdwg.mxu0
    %2190 = vrot.lane.b32.xlu0 %v2109, 20
    %v2191 = vpop.permute.xlu0 %2190
    %2192 = vrot.lane.b32.xlu0 %v2185, 20
    %v2193 = vpop.permute.xlu0 %2192
    %vm2196 = vcmask 195744
    %2197 = vst.msk [vmem:[#allocation2] sm:$0xff] %vm2196, %v2191
    %2198 = vst.msk [vmem:[#allocation2 + $0x8] sm:$0xff] %vm2196, %v2193
    %2199 = vrot.lane.b32.xlu0 %v142, 104
    %v2200 = vpop.permute.xlu0 %2199
    %2201 = vrot.lane.b32.xlu0 %v142, 72
    %v2202 = vpop.permute.xlu0 %2201
    %v2203 = vsel %vm153, %v2200, 0
    %v2205 = vsel %vm153, %v2202, 0
    %2207 = vmatprep.subr.mxu0 0.0
    %2208 = vmatpush1.xpose.msra.mxu0 %v2205
    %2209 = vmatprep.subr.mxu0 0.0
    %2210 = vmatpush1.xpose.msra.mxu0 0.0
    %2211 = vmatprep.subr.mxu0 0.0
    %2212 = vmatpush1.xpose.msra.mxu0 0.0
    %2213 = vmatprep.subr.mxu0 0.0
    %2214 = vmatpush1.xpose.msra.mxu0 0.0
    %2215 = vmatprep.subr.mxu0 0.0
    %2216 = vmatpush1.xpose.msra.mxu0 0.0
    %2217 = vmatprep.subr.mxu0 0.0
    %2218 = vmatpush1.xpose.msra.mxu0 0.0
    %2219 = vmatprep.subr.mxu0 0.0
    %2220 = vmatpush1.xpose.msra.mxu0 0.0
    %2221 = vmatprep.subr.mxu0 0.0
    %2222 = vmatpush1.xpose.msra.mxu0 0.0
    %2223 = vmatprep.subr.mxu0 0.0
    %2224 = vmatpush1.xpose.msra.mxu0 0.0
    %2225 = vmatprep.subr.mxu0 0.0
    %2226 = vmatpush1.xpose.msra.mxu0 0.0
    %2227 = vmatprep.subr.mxu0 0.0
    %2228 = vmatpush1.xpose.msra.mxu0 0.0
    %2229 = vmatprep.subr.mxu0 0.0
    %2230 = vmatpush1.xpose.msra.mxu0 0.0
    %2231 = vmatprep.subr.mxu0 0.0
    %2232 = vmatpush1.xpose.msra.mxu0 0.0
    %2233 = vmatprep.subr.mxu0 0.0
    %2234 = vmatpush1.xpose.msra.mxu0 0.0
    %2235 = vmatprep.subr.mxu0 0.0
    %2236 = vmatpush1.xpose.msra.mxu0 0.0
    %2237 = vmatprep.subr.mxu0 0.0
    %2238 = vmatpush1.xpose.msra.mxu0 0.0
    %2239 = vmatprep.subr.mxu0 0.0
    %2240 = vmatpush1.xpose.msra.mxu0 0.0
    %2241 = vmatprep.subr.mxu0 0.0
    %2242 = vmatpush1.xpose.msra.mxu0 0.0
    %2243 = vmatprep.subr.mxu0 0.0
    %2244 = vmatpush1.xpose.msra.mxu0 0.0
    %2245 = vmatprep.subr.mxu0 0.0
    %2246 = vmatpush1.xpose.msra.mxu0 0.0
    %2247 = vmatprep.subr.mxu0 0.0
    %2248 = vmatpush1.xpose.msra.mxu0 0.0
    %2249 = vmatprep.subr.mxu0 0.0
    %2250 = vmatpush1.xpose.msra.mxu0 0.0
    %2251 = vmatprep.subr.mxu0 0.0
    %2252 = vmatpush1.xpose.msra.mxu0 0.0
    %2253 = vmatprep.subr.mxu0 0.0
    %2254 = vmatpush1.xpose.msra.mxu0 0.0
    %2255 = vmatprep.subr.mxu0 0.0
    %2256 = vmatpush1.xpose.msra.mxu0 0.0
    %2257 = vmatprep.subr.mxu0 0.0
    %2258 = vmatpush1.xpose.msra.mxu0 0.0
    %2259 = vmatprep.subr.mxu0 0.0
    %2260 = vmatpush1.xpose.msra.mxu0 0.0
    %2261 = vmatprep.subr.mxu0 0.0
    %2262 = vmatpush1.xpose.msra.mxu0 0.0
    %2263 = vmatprep.subr.mxu0 0.0
    %2264 = vmatpush1.xpose.msra.mxu0 0.0
    %2265 = vmatprep.subr.mxu0 0.0
    %2266 = vmatpush1.xpose.msra.mxu0 0.0
    %2267 = vmatprep.subr.mxu0 0.0
    %2268 = vmatpush1.xpose.msra.mxu0 0.0
    %2269 = vmatprep.subr.mxu0 0.0
    %2270 = vmatpush1.xpose.msra.mxu0 0.0
    %2271 = vmatprep.mubr.f32.mxu0 0.0
    %2272 = vmatmul.mubr.f32.gmra.mrb[0].mxu0 %v2203
    %v2273 = vpop.f32.mrb[0].mxu0
    %v2274 = vadd.f32 0.0, %v2273
    %v2275 = vpop.f32.mrb[0].mxu0
    %2276 = vdwg.mxu0
    %2277 = vrot.lane.b32.xlu0 %v147, 104
    %v2278 = vpop.permute.xlu0 %2277
    %2279 = vrot.lane.b32.xlu0 %v147, 72
    %v2280 = vpop.permute.xlu0 %2279
    %v2281 = vsel %vm153, %v2278, 0
    %v2283 = vsel %vm153, %v2280, 0
    %2285 = vmatprep.subr.mxu0 0.0
    %2286 = vmatpush1.xpose.msra.mxu0 %v2283
    %2287 = vmatprep.subr.mxu0 0.0
    %2288 = vmatpush1.xpose.msra.mxu0 0.0
    %2289 = vmatprep.subr.mxu0 0.0
    %2290 = vmatpush1.xpose.msra.mxu0 0.0
    %2291 = vmatprep.subr.mxu0 0.0
    %2292 = vmatpush1.xpose.msra.mxu0 0.0
    %2293 = vmatprep.subr.mxu0 0.0
    %2294 = vmatpush1.xpose.msra.mxu0 0.0
    %2295 = vmatprep.subr.mxu0 0.0
    %2296 = vmatpush1.xpose.msra.mxu0 0.0
    %2297 = vmatprep.subr.mxu0 0.0
    %2298 = vmatpush1.xpose.msra.mxu0 0.0
    %2299 = vmatprep.subr.mxu0 0.0
    %2300 = vmatpush1.xpose.msra.mxu0 0.0
    %2301 = vmatprep.subr.mxu0 0.0
    %2302 = vmatpush1.xpose.msra.mxu0 0.0
    %2303 = vmatprep.subr.mxu0 0.0
    %2304 = vmatpush1.xpose.msra.mxu0 0.0
    %2305 = vmatprep.subr.mxu0 0.0
    %2306 = vmatpush1.xpose.msra.mxu0 0.0
    %2307 = vmatprep.subr.mxu0 0.0
    %2308 = vmatpush1.xpose.msra.mxu0 0.0
    %2309 = vmatprep.subr.mxu0 0.0
    %2310 = vmatpush1.xpose.msra.mxu0 0.0
    %2311 = vmatprep.subr.mxu0 0.0
    %2312 = vmatpush1.xpose.msra.mxu0 0.0
    %2313 = vmatprep.subr.mxu0 0.0
    %2314 = vmatpush1.xpose.msra.mxu0 0.0
    %2315 = vmatprep.subr.mxu0 0.0
    %2316 = vmatpush1.xpose.msra.mxu0 0.0
    %2317 = vmatprep.subr.mxu0 0.0
    %2318 = vmatpush1.xpose.msra.mxu0 0.0
    %2319 = vmatprep.subr.mxu0 0.0
    %2320 = vmatpush1.xpose.msra.mxu0 0.0
    %2321 = vmatprep.subr.mxu0 0.0
    %2322 = vmatpush1.xpose.msra.mxu0 0.0
    %2323 = vmatprep.subr.mxu0 0.0
    %2324 = vmatpush1.xpose.msra.mxu0 0.0
    %2325 = vmatprep.subr.mxu0 0.0
    %2326 = vmatpush1.xpose.msra.mxu0 0.0
    %2327 = vmatprep.subr.mxu0 0.0
    %2328 = vmatpush1.xpose.msra.mxu0 0.0
    %2329 = vmatprep.subr.mxu0 0.0
    %2330 = vmatpush1.xpose.msra.mxu0 0.0
    %2331 = vmatprep.subr.mxu0 0.0
    %2332 = vmatpush1.xpose.msra.mxu0 0.0
    %2333 = vmatprep.subr.mxu0 0.0
    %2334 = vmatpush1.xpose.msra.mxu0 0.0
    %2335 = vmatprep.subr.mxu0 0.0
    %2336 = vmatpush1.xpose.msra.mxu0 0.0
    %2337 = vmatprep.subr.mxu0 0.0
    %2338 = vmatpush1.xpose.msra.mxu0 0.0
    %2339 = vmatprep.subr.mxu0 0.0
    %2340 = vmatpush1.xpose.msra.mxu0 0.0
    %2341 = vmatprep.subr.mxu0 0.0
    %2342 = vmatpush1.xpose.msra.mxu0 0.0
    %2343 = vmatprep.subr.mxu0 0.0
    %2344 = vmatpush1.xpose.msra.mxu0 0.0
    %2345 = vmatprep.subr.mxu0 0.0
    %2346 = vmatpush1.xpose.msra.mxu0 0.0
    %2347 = vmatprep.subr.mxu0 0.0
    %2348 = vmatpush1.xpose.msra.mxu0 0.0
    %2349 = vmatprep.mubr.f32.mxu0 0.0
    %2350 = vmatmul.mubr.f32.gmra.mrb[0].mxu0 %v2281
    %v2351 = vpop.f32.mrb[0].mxu0
    %v2352 = vadd.f32 0.0, %v2351
    %v2353 = vpop.f32.mrb[0].mxu0
    %2354 = vdwg.mxu0
    %v2355 = vsel %vm305, %v2274, -inf
    %2356 = vmax.xlane.f32.xlu0 %v2355
    %v2357 = vpop.xlane.xlu0 %2356
    %v2358 = vsel %vm305, %v2352, -inf
    %2359 = vmax.xlane.f32.xlu0 %v2358
    %v2360 = vpop.xlane.xlu0 %2359
    %v2361 = vsub.f32 %v2274, %v2357
    %v2362 = vsub.f32 %v2352, %v2360
    %v2363 = vmul.f32 %v2361, 1.442695
    %v2364 = vpow.pop %v2363
    %v2365 = vmul.f32 %v2362, 1.442695
    %v2366 = vpow.pop %v2365
    %v2367 = vsel %vm305, %v2364, 0.0
    %2368 = vadd.xlane.f32.xlu0 %v2367
    %v2369 = vpop.xlane.xlu0 %2368
    %v2370 = vsel %vm305, %v2366, 0.0
    %2371 = vadd.xlane.f32.xlu0 %v2370
    %v2372 = vpop.xlane.xlu0 %2371
    %v2373 = vrcp.pop %v2369
    %v2374 = vmul.f32 %v2364, %v2373
    %v2375 = vrcp.pop %v2372
    %v2376 = vmul.f32 %v2366, %v2375
    %v2377 = vadd.f32 %v2034, %v2374
    %v2378 = vadd.f32 %v2035, %v2376
    %2379 = vrot.lane.b32.xlu0 %v142, 40
    %v2380 = vpop.permute.xlu0 %2379
    %v2383 = vsel %vm305, %v2374, 0
    %2385 = vmatprep.subr.mxu0 0.0
    %2386 = vmatpush1.msra.mxu0 %v2380
    %2387 = vmatprep.subr.mxu0 0.0
    %2388 = vmatpush1.msra.mxu0 0.0
    %2389 = vmatprep.subr.mxu0 0.0
    %2390 = vmatpush1.msra.mxu0 0.0
    %2391 = vmatprep.subr.mxu0 0.0
    %2392 = vmatpush1.msra.mxu0 0.0
    %2393 = vmatprep.subr.mxu0 0.0
    %2394 = vmatpush1.msra.mxu0 0.0
    %2395 = vmatprep.subr.mxu0 0.0
    %2396 = vmatpush1.msra.mxu0 0.0
    %2397 = vmatprep.subr.mxu0 0.0
    %2398 = vmatpush1.msra.mxu0 0.0
    %2399 = vmatprep.subr.mxu0 0.0
    %2400 = vmatpush1.msra.mxu0 0.0
    %2401 = vmatprep.subr.mxu0 0.0
    %2402 = vmatpush1.msra.mxu0 0.0
    %2403 = vmatprep.subr.mxu0 0.0
    %2404 = vmatpush1.msra.mxu0 0.0
    %2405 = vmatprep.subr.mxu0 0.0
    %2406 = vmatpush1.msra.mxu0 0.0
    %2407 = vmatprep.subr.mxu0 0.0
    %2408 = vmatpush1.msra.mxu0 0.0
    %2409 = vmatprep.subr.mxu0 0.0
    %2410 = vmatpush1.msra.mxu0 0.0
    %2411 = vmatprep.subr.mxu0 0.0
    %2412 = vmatpush1.msra.mxu0 0.0
    %2413 = vmatprep.subr.mxu0 0.0
    %2414 = vmatpush1.msra.mxu0 0.0
    %2415 = vmatprep.subr.mxu0 0.0
    %2416 = vmatpush1.msra.mxu0 0.0
    %2417 = vmatprep.subr.mxu0 0.0
    %2418 = vmatpush1.msra.mxu0 0.0
    %2419 = vmatprep.subr.mxu0 0.0
    %2420 = vmatpush1.msra.mxu0 0.0
    %2421 = vmatprep.subr.mxu0 0.0
    %2422 = vmatpush1.msra.mxu0 0.0
    %2423 = vmatprep.subr.mxu0 0.0
    %2424 = vmatpush1.msra.mxu0 0.0
    %2425 = vmatprep.subr.mxu0 0.0
    %2426 = vmatpush1.msra.mxu0 0.0
    %2427 = vmatprep.subr.mxu0 0.0
    %2428 = vmatpush1.msra.mxu0 0.0
    %2429 = vmatprep.subr.mxu0 0.0
    %2430 = vmatpush1.msra.mxu0 0.0
    %2431 = vmatprep.subr.mxu0 0.0
    %2432 = vmatpush1.msra.mxu0 0.0
    %2433 = vmatprep.subr.mxu0 0.0
    %2434 = vmatpush1.msra.mxu0 0.0
    %2435 = vmatprep.subr.mxu0 0.0
    %2436 = vmatpush1.msra.mxu0 0.0
    %2437 = vmatprep.subr.mxu0 0.0
    %2438 = vmatpush1.msra.mxu0 0.0
    %2439 = vmatprep.subr.mxu0 0.0
    %2440 = vmatpush1.msra.mxu0 0.0
    %2441 = vmatprep.subr.mxu0 0.0
    %2442 = vmatpush1.msra.mxu0 0.0
    %2443 = vmatprep.subr.mxu0 0.0
    %2444 = vmatpush1.msra.mxu0 0.0
    %2445 = vmatprep.subr.mxu0 0.0
    %2446 = vmatpush1.msra.mxu0 0.0
    %2447 = vmatprep.subr.mxu0 0.0
    %2448 = vmatpush1.msra.mxu0 0.0
    %2449 = vmatprep.mubr.f32.mxu0 0.0
    %2450 = vmatmul.mubr.f32.gmra.mrb[0].mxu0 %v2383
    %v2451 = vpop.f32.mrb[0].mxu0
    %v2452 = vadd.f32 0.0, %v2451
    %v2453 = vpop.f32.mrb[0].mxu0
    %2454 = vdwg.mxu0
    %2455 = vrot.lane.b32.xlu0 %v147, 40
    %v2456 = vpop.permute.xlu0 %2455
    %v2459 = vsel %vm305, %v2376, 0
    %2461 = vmatprep.subr.mxu0 0.0
    %2462 = vmatpush1.msra.mxu0 %v2456
    %2463 = vmatprep.subr.mxu0 0.0
    %2464 = vmatpush1.msra.mxu0 0.0
    %2465 = vmatprep.subr.mxu0 0.0
    %2466 = vmatpush1.msra.mxu0 0.0
    %2467 = vmatprep.subr.mxu0 0.0
    %2468 = vmatpush1.msra.mxu0 0.0
    %2469 = vmatprep.subr.mxu0 0.0
    %2470 = vmatpush1.msra.mxu0 0.0
    %2471 = vmatprep.subr.mxu0 0.0
    %2472 = vmatpush1.msra.mxu0 0.0
    %2473 = vmatprep.subr.mxu0 0.0
    %2474 = vmatpush1.msra.mxu0 0.0
    %2475 = vmatprep.subr.mxu0 0.0
    %2476 = vmatpush1.msra.mxu0 0.0
    %2477 = vmatprep.subr.mxu0 0.0
    %2478 = vmatpush1.msra.mxu0 0.0
    %2479 = vmatprep.subr.mxu0 0.0
    %2480 = vmatpush1.msra.mxu0 0.0
    %2481 = vmatprep.subr.mxu0 0.0
    %2482 = vmatpush1.msra.mxu0 0.0
    %2483 = vmatprep.subr.mxu0 0.0
    %2484 = vmatpush1.msra.mxu0 0.0
    %2485 = vmatprep.subr.mxu0 0.0
    %2486 = vmatpush1.msra.mxu0 0.0
    %2487 = vmatprep.subr.mxu0 0.0
    %2488 = vmatpush1.msra.mxu0 0.0
    %2489 = vmatprep.subr.mxu0 0.0
    %2490 = vmatpush1.msra.mxu0 0.0
    %2491 = vmatprep.subr.mxu0 0.0
    %2492 = vmatpush1.msra.mxu0 0.0
    %2493 = vmatprep.subr.mxu0 0.0
    %2494 = vmatpush1.msra.mxu0 0.0
    %2495 = vmatprep.subr.mxu0 0.0
    %2496 = vmatpush1.msra.mxu0 0.0
    %2497 = vmatprep.subr.mxu0 0.0
    %2498 = vmatpush1.msra.mxu0 0.0
    %2499 = vmatprep.subr.mxu0 0.0
    %2500 = vmatpush1.msra.mxu0 0.0
    %2501 = vmatprep.subr.mxu0 0.0
    %2502 = vmatpush1.msra.mxu0 0.0
    %2503 = vmatprep.subr.mxu0 0.0
    %2504 = vmatpush1.msra.mxu0 0.0
    %2505 = vmatprep.subr.mxu0 0.0
    %2506 = vmatpush1.msra.mxu0 0.0
    %2507 = vmatprep.subr.mxu0 0.0
    %2508 = vmatpush1.msra.mxu0 0.0
    %2509 = vmatprep.subr.mxu0 0.0
    %2510 = vmatpush1.msra.mxu0 0.0
    %2511 = vmatprep.subr.mxu0 0.0
    %2512 = vmatpush1.msra.mxu0 0.0
    %2513 = vmatprep.subr.mxu0 0.0
    %2514 = vmatpush1.msra.mxu0 0.0
    %2515 = vmatprep.subr.mxu0 0.0
    %2516 = vmatpush1.msra.mxu0 0.0
    %2517 = vmatprep.subr.mxu0 0.0
    %2518 = vmatpush1.msra.mxu0 0.0
    %2519 = vmatprep.subr.mxu0 0.0
    %2520 = vmatpush1.msra.mxu0 0.0
    %2521 = vmatprep.subr.mxu0 0.0
    %2522 = vmatpush1.msra.mxu0 0.0
    %2523 = vmatprep.subr.mxu0 0.0
    %2524 = vmatpush1.msra.mxu0 0.0
    %2525 = vmatprep.mubr.f32.mxu0 0.0
    %2526 = vmatmul.mubr.f32.gmra.mrb[0].mxu0 %v2459
    %v2527 = vpop.f32.mrb[0].mxu0
    %v2528 = vadd.f32 0.0, %v2527
    %v2529 = vpop.f32.mrb[0].mxu0
    %2530 = vdwg.mxu0
    %2533 = vrot.lane.b32.xlu0 %v2452, 24
    %v2534 = vpop.permute.xlu0 %2533
    %2535 = vrot.lane.b32.xlu0 %v2528, 24
    %v2536 = vpop.permute.xlu0 %2535
    %vm2539 = vcmask 228544
    %2540 = vst.msk [vmem:[#allocation2] sm:$0xff] %vm2539, %v2534
    %2541 = vst.msk [vmem:[#allocation2 + $0x8] sm:$0xff] %vm2539, %v2536
    %2542 = vrot.lane.b32.xlu0 %v142, 100
    %v2543 = vpop.permute.xlu0 %2542
    %2544 = vrot.lane.b32.xlu0 %v142, 68
    %v2545 = vpop.permute.xlu0 %2544
    %v2546 = vsel %vm153, %v2543, 0
    %v2548 = vsel %vm153, %v2545, 0
    %2550 = vmatprep.subr.mxu0 0.0
    %2551 = vmatpush1.xpose.msra.mxu0 %v2548
    %2552 = vmatprep.subr.mxu0 0.0
    %2553 = vmatpush1.xpose.msra.mxu0 0.0
    %2554 = vmatprep.subr.mxu0 0.0
    %2555 = vmatpush1.xpose.msra.mxu0 0.0
    %2556 = vmatprep.subr.mxu0 0.0
    %2557 = vmatpush1.xpose.msra.mxu0 0.0
    %2558 = vmatprep.subr.mxu0 0.0
    %2559 = vmatpush1.xpose.msra.mxu0 0.0
    %2560 = vmatprep.subr.mxu0 0.0
    %2561 = vmatpush1.xpose.msra.mxu0 0.0
    %2562 = vmatprep.subr.mxu0 0.0
    %2563 = vmatpush1.xpose.msra.mxu0 0.0
    %2564 = vmatprep.subr.mxu0 0.0
    %2565 = vmatpush1.xpose.msra.mxu0 0.0
    %2566 = vmatprep.subr.mxu0 0.0
    %2567 = vmatpush1.xpose.msra.mxu0 0.0
    %2568 = vmatprep.subr.mxu0 0.0
    %2569 = vmatpush1.xpose.msra.mxu0 0.0
    %2570 = vmatprep.subr.mxu0 0.0
    %2571 = vmatpush1.xpose.msra.mxu0 0.0
    %2572 = vmatprep.subr.mxu0 0.0
    %2573 = vmatpush1.xpose.msra.mxu0 0.0
    %2574 = vmatprep.subr.mxu0 0.0
    %2575 = vmatpush1.xpose.msra.mxu0 0.0
    %2576 = vmatprep.subr.mxu0 0.0
    %2577 = vmatpush1.xpose.msra.mxu0 0.0
    %2578 = vmatprep.subr.mxu0 0.0
    %2579 = vmatpush1.xpose.msra.mxu0 0.0
    %2580 = vmatprep.subr.mxu0 0.0
    %2581 = vmatpush1.xpose.msra.mxu0 0.0
    %2582 = vmatprep.subr.mxu0 0.0
    %2583 = vmatpush1.xpose.msra.mxu0 0.0
    %2584 = vmatprep.subr.mxu0 0.0
    %2585 = vmatpush1.xpose.msra.mxu0 0.0
    %2586 = vmatprep.subr.mxu0 0.0
    %2587 = vmatpush1.xpose.msra.mxu0 0.0
    %2588 = vmatprep.subr.mxu0 0.0
    %2589 = vmatpush1.xpose.msra.mxu0 0.0
    %2590 = vmatprep.subr.mxu0 0.0
    %2591 = vmatpush1.xpose.msra.mxu0 0.0
    %2592 = vmatprep.subr.mxu0 0.0
    %2593 = vmatpush1.xpose.msra.mxu0 0.0
    %2594 = vmatprep.subr.mxu0 0.0
    %2595 = vmatpush1.xpose.msra.mxu0 0.0
    %2596 = vmatprep.subr.mxu0 0.0
    %2597 = vmatpush1.xpose.msra.mxu0 0.0
    %2598 = vmatprep.subr.mxu0 0.0
    %2599 = vmatpush1.xpose.msra.mxu0 0.0
    %2600 = vmatprep.subr.mxu0 0.0
    %2601 = vmatpush1.xpose.msra.mxu0 0.0
    %2602 = vmatprep.subr.mxu0 0.0
    %2603 = vmatpush1.xpose.msra.mxu0 0.0
    %2604 = vmatprep.subr.mxu0 0.0
    %2605 = vmatpush1.xpose.msra.mxu0 0.0
    %2606 = vmatprep.subr.mxu0 0.0
    %2607 = vmatpush1.xpose.msra.mxu0 0.0
    %2608 = vmatprep.subr.mxu0 0.0
    %2609 = vmatpush1.xpose.msra.mxu0 0.0
    %2610 = vmatprep.subr.mxu0 0.0
    %2611 = vmatpush1.xpose.msra.mxu0 0.0
    %2612 = vmatprep.subr.mxu0 0.0
    %2613 = vmatpush1.xpose.msra.mxu0 0.0
    %2614 = vmatprep.mubr.f32.mxu0 0.0
    %2615 = vmatmul.mubr.f32.gmra.mrb[0].mxu0 %v2546
    %v2616 = vpop.f32.mrb[0].mxu0
    %v2617 = vadd.f32 0.0, %v2616
    %v2618 = vpop.f32.mrb[0].mxu0
    %2619 = vdwg.mxu0
    %2620 = vrot.lane.b32.xlu0 %v147, 100
    %v2621 = vpop.permute.xlu0 %2620
    %2622 = vrot.lane.b32.xlu0 %v147, 68
    %v2623 = vpop.permute.xlu0 %2622
    %v2624 = vsel %vm153, %v2621, 0
    %v2626 = vsel %vm153, %v2623, 0
    %2628 = vmatprep.subr.mxu0 0.0
    %2629 = vmatpush1.xpose.msra.mxu0 %v2626
    %2630 = vmatprep.subr.mxu0 0.0
    %2631 = vmatpush1.xpose.msra.mxu0 0.0
    %2632 = vmatprep.subr.mxu0 0.0
    %2633 = vmatpush1.xpose.msra.mxu0 0.0
    %2634 = vmatprep.subr.mxu0 0.0
    %2635 = vmatpush1.xpose.msra.mxu0 0.0
    %2636 = vmatprep.subr.mxu0 0.0
    %2637 = vmatpush1.xpose.msra.mxu0 0.0
    %2638 = vmatprep.subr.mxu0 0.0
    %2639 = vmatpush1.xpose.msra.mxu0 0.0
    %2640 = vmatprep.subr.mxu0 0.0
    %2641 = vmatpush1.xpose.msra.mxu0 0.0
    %2642 = vmatprep.subr.mxu0 0.0
    %2643 = vmatpush1.xpose.msra.mxu0 0.0
    %2644 = vmatprep.subr.mxu0 0.0
    %2645 = vmatpush1.xpose.msra.mxu0 0.0
    %2646 = vmatprep.subr.mxu0 0.0
    %2647 = vmatpush1.xpose.msra.mxu0 0.0
    %2648 = vmatprep.subr.mxu0 0.0
    %2649 = vmatpush1.xpose.msra.mxu0 0.0
    %2650 = vmatprep.subr.mxu0 0.0
    %2651 = vmatpush1.xpose.msra.mxu0 0.0
    %2652 = vmatprep.subr.mxu0 0.0
    %2653 = vmatpush1.xpose.msra.mxu0 0.0
    %2654 = vmatprep.subr.mxu0 0.0
    %2655 = vmatpush1.xpose.msra.mxu0 0.0
    %2656 = vmatprep.subr.mxu0 0.0
    %2657 = vmatpush1.xpose.msra.mxu0 0.0
    %2658 = vmatprep.subr.mxu0 0.0
    %2659 = vmatpush1.xpose.msra.mxu0 0.0
    %2660 = vmatprep.subr.mxu0 0.0
    %2661 = vmatpush1.xpose.msra.mxu0 0.0
    %2662 = vmatprep.subr.mxu0 0.0
    %2663 = vmatpush1.xpose.msra.mxu0 0.0
    %2664 = vmatprep.subr.mxu0 0.0
    %2665 = vmatpush1.xpose.msra.mxu0 0.0
    %2666 = vmatprep.subr.mxu0 0.0
    %2667 = vmatpush1.xpose.msra.mxu0 0.0
    %2668 = vmatprep.subr.mxu0 0.0
    %2669 = vmatpush1.xpose.msra.mxu0 0.0
    %2670 = vmatprep.subr.mxu0 0.0
    %2671 = vmatpush1.xpose.msra.mxu0 0.0
    %2672 = vmatprep.subr.mxu0 0.0
    %2673 = vmatpush1.xpose.msra.mxu0 0.0
    %2674 = vmatprep.subr.mxu0 0.0
    %2675 = vmatpush1.xpose.msra.mxu0 0.0
    %2676 = vmatprep.subr.mxu0 0.0
    %2677 = vmatpush1.xpose.msra.mxu0 0.0
    %2678 = vmatprep.subr.mxu0 0.0
    %2679 = vmatpush1.xpose.msra.mxu0 0.0
    %2680 = vmatprep.subr.mxu0 0.0
    %2681 = vmatpush1.xpose.msra.mxu0 0.0
    %2682 = vmatprep.subr.mxu0 0.0
    %2683 = vmatpush1.xpose.msra.mxu0 0.0
    %2684 = vmatprep.subr.mxu0 0.0
    %2685 = vmatpush1.xpose.msra.mxu0 0.0
    %2686 = vmatprep.subr.mxu0 0.0
    %2687 = vmatpush1.xpose.msra.mxu0 0.0
    %2688 = vmatprep.subr.mxu0 0.0
    %2689 = vmatpush1.xpose.msra.mxu0 0.0
    %2690 = vmatprep.subr.mxu0 0.0
    %2691 = vmatpush1.xpose.msra.mxu0 0.0
    %2692 = vmatprep.mubr.f32.mxu0 0.0
    %2693 = vmatmul.mubr.f32.gmra.mrb[0].mxu0 %v2624
    %v2694 = vpop.f32.mrb[0].mxu0
    %v2695 = vadd.f32 0.0, %v2694
    %v2696 = vpop.f32.mrb[0].mxu0
    %2697 = vdwg.mxu0
    %v2698 = vsel %vm305, %v2617, -inf
    %2699 = vmax.xlane.f32.xlu0 %v2698
    %v2700 = vpop.xlane.xlu0 %2699
    %v2701 = vsel %vm305, %v2695, -inf
    %2702 = vmax.xlane.f32.xlu0 %v2701
    %v2703 = vpop.xlane.xlu0 %2702
    %v2704 = vsub.f32 %v2617, %v2700
    %v2705 = vsub.f32 %v2695, %v2703
    %v2706 = vmul.f32 %v2704, 1.442695
    %v2707 = vpow.pop %v2706
    %v2708 = vmul.f32 %v2705, 1.442695
    %v2709 = vpow.pop %v2708
    %v2710 = vsel %vm305, %v2707, 0.0
    %2711 = vadd.xlane.f32.xlu0 %v2710
    %v2712 = vpop.xlane.xlu0 %2711
    %v2713 = vsel %vm305, %v2709, 0.0
    %2714 = vadd.xlane.f32.xlu0 %v2713
    %v2715 = vpop.xlane.xlu0 %2714
    %v2716 = vrcp.pop %v2712
    %v2717 = vmul.f32 %v2707, %v2716
    %v2718 = vrcp.pop %v2715
    %v2719 = vmul.f32 %v2709, %v2718
    %v2720 = vadd.f32 %v2377, %v2717
    %v2721 = vadd.f32 %v2378, %v2719
    %2722 = vrot.lane.b32.xlu0 %v142, 36
    %v2723 = vpop.permute.xlu0 %2722
    %v2726 = vsel %vm305, %v2717, 0
    %2728 = vmatprep.subr.mxu0 0.0
    %2729 = vmatpush1.msra.mxu0 %v2723
    %2730 = vmatprep.subr.mxu0 0.0
    %2731 = vmatpush1.msra.mxu0 0.0
    %2732 = vmatprep.subr.mxu0 0.0
    %2733 = vmatpush1.msra.mxu0 0.0
    %2734 = vmatprep.subr.mxu0 0.0
    %2735 = vmatpush1.msra.mxu0 0.0
    %2736 = vmatprep.subr.mxu0 0.0
    %2737 = vmatpush1.msra.mxu0 0.0
    %2738 = vmatprep.subr.mxu0 0.0
    %2739 = vmatpush1.msra.mxu0 0.0
    %2740 = vmatprep.subr.mxu0 0.0
    %2741 = vmatpush1.msra.mxu0 0.0
    %2742 = vmatprep.subr.mxu0 0.0
    %2743 = vmatpush1.msra.mxu0 0.0
    %2744 = vmatprep.subr.mxu0 0.0
    %2745 = vmatpush1.msra.mxu0 0.0
    %2746 = vmatprep.subr.mxu0 0.0
    %2747 = vmatpush1.msra.mxu0 0.0
    %2748 = vmatprep.subr.mxu0 0.0
    %2749 = vmatpush1.msra.mxu0 0.0
    %2750 = vmatprep.subr.mxu0 0.0
    %2751 = vmatpush1.msra.mxu0 0.0
    %2752 = vmatprep.subr.mxu0 0.0
    %2753 = vmatpush1.msra.mxu0 0.0
    %2754 = vmatprep.subr.mxu0 0.0
    %2755 = vmatpush1.msra.mxu0 0.0
    %2756 = vmatprep.subr.mxu0 0.0
    %2757 = vmatpush1.msra.mxu0 0.0
    %2758 = vmatprep.subr.mxu0 0.0
    %2759 = vmatpush1.msra.mxu0 0.0
    %2760 = vmatprep.subr.mxu0 0.0
    %2761 = vmatpush1.msra.mxu0 0.0
    %2762 = vmatprep.subr.mxu0 0.0
    %2763 = vmatpush1.msra.mxu0 0.0
    %2764 = vmatprep.subr.mxu0 0.0
    %2765 = vmatpush1.msra.mxu0 0.0
    %2766 = vmatprep.subr.mxu0 0.0
    %2767 = vmatpush1.msra.mxu0 0.0
    %2768 = vmatprep.subr.mxu0 0.0
    %2769 = vmatpush1.msra.mxu0 0.0
    %2770 = vmatprep.subr.mxu0 0.0
    %2771 = vmatpush1.msra.mxu0 0.0
    %2772 = vmatprep.subr.mxu0 0.0
    %2773 = vmatpush1.msra.mxu0 0.0
    %2774 = vmatprep.subr.mxu0 0.0
    %2775 = vmatpush1.msra.mxu0 0.0
    %2776 = vmatprep.subr.mxu0 0.0
    %2777 = vmatpush1.msra.mxu0 0.0
    %2778 = vmatprep.subr.mxu0 0.0
    %2779 = vmatpush1.msra.mxu0 0.0
    %2780 = vmatprep.subr.mxu0 0.0
    %2781 = vmatpush1.msra.mxu0 0.0
    %2782 = vmatprep.subr.mxu0 0.0
    %2783 = vmatpush1.msra.mxu0 0.0
    %2784 = vmatprep.subr.mxu0 0.0
    %2785 = vmatpush1.msra.mxu0 0.0
    %2786 = vmatprep.subr.mxu0 0.0
    %2787 = vmatpush1.msra.mxu0 0.0
    %2788 = vmatprep.subr.mxu0 0.0
    %2789 = vmatpush1.msra.mxu0 0.0
    %2790 = vmatprep.subr.mxu0 0.0
    %2791 = vmatpush1.msra.mxu0 0.0
    %2792 = vmatprep.mubr.f32.mxu0 0.0
    %2793 = vmatmul.mubr.f32.gmra.mrb[0].mxu0 %v2726
    %v2794 = vpop.f32.mrb[0].mxu0
    %v2795 = vadd.f32 0.0, %v2794
    %v2796 = vpop.f32.mrb[0].mxu0
    %2797 = vdwg.mxu0
    %2798 = vrot.lane.b32.xlu0 %v147, 36
    %v2799 = vpop.permute.xlu0 %2798
    %v2802 = vsel %vm305, %v2719, 0
    %2804 = vmatprep.subr.mxu0 0.0
    %2805 = vmatpush1.msra.mxu0 %v2799
    %2806 = vmatprep.subr.mxu0 0.0
    %2807 = vmatpush1.msra.mxu0 0.0
    %2808 = vmatprep.subr.mxu0 0.0
    %2809 = vmatpush1.msra.mxu0 0.0
    %2810 = vmatprep.subr.mxu0 0.0
    %2811 = vmatpush1.msra.mxu0 0.0
    %2812 = vmatprep.subr.mxu0 0.0
    %2813 = vmatpush1.msra.mxu0 0.0
    %2814 = vmatprep.subr.mxu0 0.0
    %2815 = vmatpush1.msra.mxu0 0.0
    %2816 = vmatprep.subr.mxu0 0.0
    %2817 = vmatpush1.msra.mxu0 0.0
    %2818 = vmatprep.subr.mxu0 0.0
    %2819 = vmatpush1.msra.mxu0 0.0
    %2820 = vmatprep.subr.mxu0 0.0
    %2821 = vmatpush1.msra.mxu0 0.0
    %2822 = vmatprep.subr.mxu0 0.0
    %2823 = vmatpush1.msra.mxu0 0.0
    %2824 = vmatprep.subr.mxu0 0.0
    %2825 = vmatpush1.msra.mxu0 0.0
    %2826 = vmatprep.subr.mxu0 0.0
    %2827 = vmatpush1.msra.mxu0 0.0
    %2828 = vmatprep.subr.mxu0 0.0
    %2829 = vmatpush1.msra.mxu0 0.0
    %2830 = vmatprep.subr.mxu0 0.0
    %2831 = vmatpush1.msra.mxu0 0.0
    %2832 = vmatprep.subr.mxu0 0.0
    %2833 = vmatpush1.msra.mxu0 0.0
    %2834 = vmatprep.subr.mxu0 0.0
    %2835 = vmatpush1.msra.mxu0 0.0
    %2836 = vmatprep.subr.mxu0 0.0
    %2837 = vmatpush1.msra.mxu0 0.0
    %2838 = vmatprep.subr.mxu0 0.0
    %2839 = vmatpush1.msra.mxu0 0.0
    %2840 = vmatprep.subr.mxu0 0.0
    %2841 = vmatpush1.msra.mxu0 0.0
    %2842 = vmatprep.subr.mxu0 0.0
    %2843 = vmatpush1.msra.mxu0 0.0
    %2844 = vmatprep.subr.mxu0 0.0
    %2845 = vmatpush1.msra.mxu0 0.0
    %2846 = vmatprep.subr.mxu0 0.0
    %2847 = vmatpush1.msra.mxu0 0.0
    %2848 = vmatprep.subr.mxu0 0.0
    %2849 = vmatpush1.msra.mxu0 0.0
    %2850 = vmatprep.subr.mxu0 0.0
    %2851 = vmatpush1.msra.mxu0 0.0
    %2852 = vmatprep.subr.mxu0 0.0
    %2853 = vmatpush1.msra.mxu0 0.0
    %2854 = vmatprep.subr.mxu0 0.0
    %2855 = vmatpush1.msra.mxu0 0.0
    %2856 = vmatprep.subr.mxu0 0.0
    %2857 = vmatpush1.msra.mxu0 0.0
    %2858 = vmatprep.subr.mxu0 0.0
    %2859 = vmatpush1.msra.mxu0 0.0
    %2860 = vmatprep.subr.mxu0 0.0
    %2861 = vmatpush1.msra.mxu0 0.0
    %2862 = vmatprep.subr.mxu0 0.0
    %2863 = vmatpush1.msra.mxu0 0.0
    %2864 = vmatprep.subr.mxu0 0.0
    %2865 = vmatpush1.msra.mxu0 0.0
    %2866 = vmatprep.subr.mxu0 0.0
    %2867 = vmatpush1.msra.mxu0 0.0
    %2868 = vmatprep.mubr.f32.mxu0 0.0
    %2869 = vmatmul.mubr.f32.gmra.mrb[0].mxu0 %v2802
    %v2870 = vpop.f32.mrb[0].mxu0
    %v2871 = vadd.f32 0.0, %v2870
    %v2872 = vpop.f32.mrb[0].mxu0
    %2873 = vdwg.mxu0
    %2876 = vrot.lane.b32.xlu0 %v2795, 28
    %v2877 = vpop.permute.xlu0 %2876
    %2878 = vrot.lane.b32.xlu0 %v2871, 28
    %v2879 = vpop.permute.xlu0 %2878
    %vm2882 = vcmask 261344
    %2883 = vst.msk [vmem:[#allocation2] sm:$0xff] %vm2882, %v2877
    %2884 = vst.msk [vmem:[#allocation2 + $0x8] sm:$0xff] %vm2882, %v2879
    %v2885 = vld [vmem:[#allocation2] sm:$0xff]
    %v2886 = vld [vmem:[#allocation2 + $0x8] sm:$0xff]
    %v2887 = vld [vmem:[#allocation8] sm:$0xff]
    %v2888 = vld [vmem:[#allocation8 + $0x8] sm:$0xff]
    %v2889 = vld [vmem:[#allocation8 + $0x10] sm:$0xff]
    %v2890 = vld [vmem:[#allocation8 + $0x18] sm:$0xff]
    %v2891 = vld [vmem:[%s3] sm:$0x1]
    %v2893 = vlaneseq
    %v2894 = vshrl.u32 %v2893, 7
    %v2895 = vsub.s32 0, %v2894
    %v2896 = vrot.slane %v2891, %v2895
    %v2899 = vsel %vm68, %v2885, 0
    %v2902 = vsel %vm68, %v2886, 0
    %2904 = vmatprep.subr.mxu0 0.0
    %2905 = vmatpush1.msra.mxu0 %v2887
    %2906 = vmatprep.subr.mxu0 0.0
    %2907 = vmatpush1.msra.mxu0 %v2888
    %2908 = vmatprep.subr.mxu0 0.0
    %2909 = vmatpush1.msra.mxu0 %v2889
    %2910 = vmatprep.subr.mxu0 0.0
    %2911 = vmatpush1.msra.mxu0 %v2890
    %2912 = vmatprep.subr.mxu0 0.0
    %2913 = vmatpush1.msra.mxu0 0.0
    %2914 = vmatprep.subr.mxu0 0.0
    %2915 = vmatpush1.msra.mxu0 0.0
    %2916 = vmatprep.subr.mxu0 0.0
    %2917 = vmatpush1.msra.mxu0 0.0
    %2918 = vmatprep.subr.mxu0 0.0
    %2919 = vmatpush1.msra.mxu0 0.0
    %2920 = vmatprep.subr.mxu0 0.0
    %2921 = vmatpush1.msra.mxu0 0.0
    %2922 = vmatprep.subr.mxu0 0.0
    %2923 = vmatpush1.msra.mxu0 0.0
    %2924 = vmatprep.subr.mxu0 0.0
    %2925 = vmatpush1.msra.mxu0 0.0
    %2926 = vmatprep.subr.mxu0 0.0
    %2927 = vmatpush1.msra.mxu0 0.0
    %2928 = vmatprep.subr.mxu0 0.0
    %2929 = vmatpush1.msra.mxu0 0.0
    %2930 = vmatprep.subr.mxu0 0.0
    %2931 = vmatpush1.msra.mxu0 0.0
    %2932 = vmatprep.subr.mxu0 0.0
    %2933 = vmatpush1.msra.mxu0 0.0
    %2934 = vmatprep.subr.mxu0 0.0
    %2935 = vmatpush1.msra.mxu0 0.0
    %2936 = vmatprep.subr.mxu0 0.0
    %2937 = vmatpush1.msra.mxu0 0.0
    %2938 = vmatprep.subr.mxu0 0.0
    %2939 = vmatpush1.msra.mxu0 0.0
    %2940 = vmatprep.subr.mxu0 0.0
    %2941 = vmatpush1.msra.mxu0 0.0
    %2942 = vmatprep.subr.mxu0 0.0
    %2943 = vmatpush1.msra.mxu0 0.0
    %2944 = vmatprep.subr.mxu0 0.0
    %2945 = vmatpush1.msra.mxu0 0.0
    %2946 = vmatprep.subr.mxu0 0.0
    %2947 = vmatpush1.msra.mxu0 0.0
    %2948 = vmatprep.subr.mxu0 0.0
    %2949 = vmatpush1.msra.mxu0 0.0
    %2950 = vmatprep.subr.mxu0 0.0
    %2951 = vmatpush1.msra.mxu0 0.0
    %2952 = vmatprep.subr.mxu0 0.0
    %2953 = vmatpush1.msra.mxu0 0.0
    %2954 = vmatprep.subr.mxu0 0.0
    %2955 = vmatpush1.msra.mxu0 0.0
    %2956 = vmatprep.subr.mxu0 0.0
    %2957 = vmatpush1.msra.mxu0 0.0
    %2958 = vmatprep.subr.mxu0 0.0
    %2959 = vmatpush1.msra.mxu0 0.0
    %2960 = vmatprep.subr.mxu0 0.0
    %2961 = vmatpush1.msra.mxu0 0.0
    %2962 = vmatprep.subr.mxu0 0.0
    %2963 = vmatpush1.msra.mxu0 0.0
    %2964 = vmatprep.subr.mxu0 0.0
    %2965 = vmatpush1.msra.mxu0 0.0
    %2966 = vmatprep.subr.mxu0 0.0
    %2967 = vmatpush1.msra.mxu0 0.0
    %2968 = vmatprep.mubr.f32.mxu0 0.0
    %2969 = vmatmul.mubr.f32.gmra.mrb[0].mxu0 %v2899
    %v2970 = vpop.f32.mrb[0].mxu0
    %v2971 = vadd.f32 %v2896, %v2970
    %v2972 = vpop.f32.mrb[0].mxu0
    %2973 = vmatprep.mubr.f32.mxu0 0.0
    %2974 = vmatmul.mubr.f32.gmra.mrb[0].mxu0 %v2902
    %v2975 = vpop.f32.mrb[0].mxu0
    %v2976 = vadd.f32 %v2896, %v2975
    %v2977 = vpop.f32.mrb[0].mxu0
    %2978 = vdwg.mxu0
    %2979 = vst.msk [vmem:[#allocation9] sm:$0xff] %vm68, %v2971
    %2980 = vst.msk [vmem:[#allocation9 + $0x8] sm:$0xff] %vm68, %v2976
    %v2981 = vmul.f32 %v2720, 0.125
    %v2982 = vmul.f32 %v2721, 0.125
    %2983 = vst.msk [vmem:[#allocation10] sm:$0xff] %vm305, %v2981
    %2984 = vst.msk [vmem:[#allocation10 + $0x8] sm:$0xff] %vm305, %v2982
    // Predicated region
    $region30: #{tpu_custom_call.1} parent=1 // pred_check
      _
    $region31: #{tpu_custom_call.1} parent=1 // pred_check_branch
      %2986 = sbr.rel (0) target = $region33
    $region32: #{tpu_custom_call.1} parent=1 // pred_region
      %s2988 = ssub.s32 256, 256
      %2989 = vsyncadd [#allocation5], %s2988
      %s2990 = sshll.u32 [#allocation9], 4
      %s2991 = int_to_ptr.vmem [resolvable:$true] %s2990
      %2996 = dma.vmem_to_hbm [thread:$0]  %s2991, 256, %s4, [#allocation5], 128, 128, 8
    $region33: #{tpu_custom_call.1} parent=1 // pred_fallthru
      _
    // Predicated region
    $region34: #{tpu_custom_call.1} parent=1 // pred_check
      _
    $region35: #{tpu_custom_call.1} parent=1 // pred_check_branch
      %2998 = sbr.rel (0) target = $region37
    $region36: #{tpu_custom_call.1} parent=1 // pred_region
      %s3000 = ssub.s32 256, 256
      %3001 = vsyncadd [#allocation11], %s3000
      %s3002 = sshll.u32 [#allocation10], 4
      %s3003 = int_to_ptr.vmem [resolvable:$true] %s3002
      %3008 = dma.vmem_to_hbm [thread:$0]  %s3003, 256, %s5, [#allocation11], 128, 128, 8
    $region37: #{tpu_custom_call.1} parent=1 // pred_fallthru
      _
    // Predicated region
    $region38: #{tpu_custom_call.1} parent=1 // pred_check
      _
    $region39: #{tpu_custom_call.1} parent=1 // pred_check_branch
      %3010 = sbr.rel (0) target = $region41
    $region40: #{tpu_custom_call.1} parent=1 // pred_region
      %3011 = dma.done [#allocation5], 256
    $region41: #{tpu_custom_call.1} parent=1 // pred_fallthru
      _
    // Predicated region
    $region42: #{tpu_custom_call.1} parent=1 // pred_check
      _
    $region43: #{tpu_custom_call.1} parent=1 // pred_check_branch
      %3013 = sbr.rel (0) target = $region45
    $region44: #{tpu_custom_call.1} parent=1 // pred_region
      %3014 = dma.done [#allocation11], 256
    $region45: #{tpu_custom_call.1} parent=1 // pred_fallthru
      _
    %3015 = vsyncpa [#allocation4], 1
    %3016 = vsyncpa [#allocation7], 1
    %3017 = vsyncpa [#allocation5], 1
    %3018 = vsyncpa [#allocation11], 1

</llo_original>
